<compile_context>
chip_gen: v6e
topology: v6e:2x2x1
jax: 0.10.0
libtpu: 0.0.40
codegen_flags: <defaults>
</compile_context>

<pallas_src>
import jax
import jax.numpy as jnp
from jax.experimental import pallas as pl
from jax.experimental.pallas import tpu as pltpu  # noqa: F401  (kept for parity / future tuning)

# ---- model dims (small, consistent with a CLIP text transformer) ------------
B, S, D, H, E, LAYERS = 2, 8, 32, 4, 32, 2   # batch, seq, width, heads, embed, layers
HD = D // H
EPS = 1e-5
SCALE = 1.0 / (HD ** 0.5)


def _layernorm(x, g, b):
    mu = jnp.mean(x, axis=-1, keepdims=True)
    var = jnp.mean((x - mu) ** 2, axis=-1, keepdims=True)
    return (x - mu) * jax.lax.rsqrt(var + EPS) * g + b


# ------------------------------ fused kernel ----------------------------------
def encoder_kernel(x_ref, pos_ref, eot_ref,
                   ln1_g_ref, ln1_b_ref, wqkv_ref, bqkv_ref, wo_ref, bo_ref,
                   ln2_g_ref, ln2_b_ref, wfc_ref, bfc_ref, wpr_ref, bpr_ref,
                   lnf_g_ref, lnf_b_ref, proj_ref, o_ref):
    # positional-embedding add, fold batch into rows: (B*S, D), f32 resident.
    x = (x_ref[...] + pos_ref[...][None]).reshape(B * S, D)

    # causal mask, hoisted out of the layer loop
    row = jax.lax.broadcasted_iota(jnp.int32, (B, S, S), 1)
    col = jax.lax.broadcasted_iota(jnp.int32, (B, S, S), 2)
    causal = row >= col                                         # (B, S, S)

    for l in range(LAYERS):                                     # static unroll, weights VMEM-resident
        # ---- attention sub-block: x = x + out_proj(MHA(ln_1(x))) ----
        xn = _layernorm(x, ln1_g_ref[l], ln1_b_ref[l])
        qkv = jnp.dot(xn.astype(jnp.bfloat16), wqkv_ref[l],
                      preferred_element_type=jnp.float32) + bqkv_ref[l]   # (B*S, 3D) f32
        q = qkv[:, :D] * SCALE                                  # scale once, not per head
        k = qkv[:, D:2 * D]
        v = qkv[:, 2 * D:]

        head_outs = []
        for h in range(H):                                      # H small; each iter batched over B
            sl = slice(h * HD, (h + 1) * HD)
            qh = q[:, sl].reshape(B, S, HD).astype(jnp.bfloat16)
            kh = k[:, sl].reshape(B, S, HD).astype(jnp.bfloat16)
            vh = v[:, sl].reshape(B, S, HD).astype(jnp.bfloat16)
            s = jnp.einsum('bqd,bkd->bqk', qh, kh,
                           preferred_element_type=jnp.float32)  # (B, S, S) f32
            s = jnp.where(causal, s, -1e30)
            s = s - jnp.max(s, axis=-1, keepdims=True)
            p = jnp.exp(s)
            p = p * pl.reciprocal(jnp.sum(p, axis=-1, keepdims=True), approx=True)
            ah = jnp.einsum('bqk,bkd->bqd', p.astype(jnp.bfloat16), vh,
                            preferred_element_type=jnp.float32)
            head_outs.append(ah.reshape(B * S, HD))
        attn = jnp.concatenate(head_outs, axis=-1)              # (B*S, D)

        x = x + jnp.dot(attn.astype(jnp.bfloat16), wo_ref[l],
                        preferred_element_type=jnp.float32) + bo_ref[l]

        # ---- MLP sub-block: x = x + c_proj(QuickGELU(c_fc(ln_2(x)))) ----
        xn2 = _layernorm(x, ln2_g_ref[l], ln2_b_ref[l])
        hdn = jnp.dot(xn2.astype(jnp.bfloat16), wfc_ref[l],
                      preferred_element_type=jnp.float32) + bfc_ref[l]    # (B*S, 4D)
        hdn = hdn * jax.nn.sigmoid(1.702 * hdn)                 # QuickGELU, f32 VPU/EUP
        x = x + jnp.dot(hdn.astype(jnp.bfloat16), wpr_ref[l],
                        preferred_element_type=jnp.float32) + bpr_ref[l]

    # ---- EOT gather (raw rows) -> ln_final -> text_projection ----
    eot = eot_ref[...]                                          # (B, 1) int32
    rowb = jax.lax.broadcasted_iota(jnp.int32, (B, B * S), 0)
    colj = jax.lax.broadcasted_iota(jnp.int32, (B, B * S), 1)
    selmat = (colj == rowb * S + eot).astype(jnp.float32)       # (B, B*S) one-hot
    sel = jnp.dot(selmat, x, preferred_element_type=jnp.float32)    # (B, D) EOT rows (exact, f32)
    seln = _layernorm(sel, lnf_g_ref[...], lnf_b_ref[...])
    o_ref[...] = jnp.dot(seln.astype(jnp.bfloat16), proj_ref[...],
                         preferred_element_type=jnp.float32)    # (B, E)


# ------------------------------ wrapper ----------------------------------------
@jax.jit
def text_encoder(prompts, tokenized_prompts, params):
    # EOT position = argmax over token ids (indexing glue, not the hot path)
    eot = jnp.argmax(tokenized_prompts, axis=-1).astype(jnp.int32).reshape(B, 1)
    return pl.pallas_call(
        encoder_kernel,
        out_shape=jax.ShapeDtypeStruct((B, E), jnp.float32),
        # no grid / BlockSpecs: whole arrays live in VMEM (total ~100 KB),
        # one kernel invocation, zero intermediate HBM traffic.
    )(prompts, params["pos"], eot,
      params["ln1_g"], params["ln1_b"], params["wqkv"], params["bqkv"],
      params["wo"], params["bo"],
      params["ln2_g"], params["ln2_b"], params["wfc"], params["bfc"],
      params["wpr"], params["bpr"],
      params["lnf_g"], params["lnf_b"], params["proj"])


# ------------------------------ params & main ----------------------------------
def init_params(key):
    def nrm(k, shape, scale=0.02, dtype=jnp.float32):
        return (scale * jax.random.normal(k, shape)).astype(dtype)

    ks = jax.random.split(key, 6)
    bf = jnp.bfloat16
    return dict(
        pos=nrm(ks[0], (S, D), 0.01),
        # stacked per-layer weights: matmul weights in bf16, LN/bias in f32
        ln1_g=jnp.ones((LAYERS, 1, D), jnp.float32),
        ln1_b=jnp.zeros((LAYERS, 1, D), jnp.float32),
        wqkv=nrm(ks[1], (LAYERS, D, 3 * D), dtype=bf),
        bqkv=jnp.zeros((LAYERS, 1, 3 * D), jnp.float32),
        wo=nrm(ks[2], (LAYERS, D, D), dtype=bf),
        bo=jnp.zeros((LAYERS, 1, D), jnp.float32),
        ln2_g=jnp.ones((LAYERS, 1, D), jnp.float32),
        ln2_b=jnp.zeros((LAYERS, 1, D), jnp.float32),
        wfc=nrm(ks[3], (LAYERS, D, 4 * D), dtype=bf),
        bfc=jnp.zeros((LAYERS, 1, 4 * D), jnp.float32),
        wpr=nrm(ks[4], (LAYERS, 4 * D, D), dtype=bf),
        bpr=jnp.zeros((LAYERS, 1, D), jnp.float32),
        lnf_g=jnp.ones((1, D), jnp.float32),
        lnf_b=jnp.zeros((1, D), jnp.float32),
        proj=nrm(ks[5], (D, E), dtype=bf),
    )


if __name__ == "__main__":
    key = jax.random.PRNGKey(0)
    k_prompt, k_tok, k_params = jax.random.split(key, 3)

    prompts = jax.random.normal(k_prompt, (B, S, D), jnp.float32)          # learned prompt embeddings
    tokenized_prompts = jax.random.randint(k_tok, (B, S), 1, 1000).astype(jnp.int32)
    params = init_params(k_params)

    out = text_encoder(prompts, tokenized_prompts, params)
    jax.block_until_ready(out)
    assert out.shape == (B, E) and out.dtype == jnp.float32
    assert bool(jnp.all(jnp.isfinite(out)))
    print("KERNEL_OK")
</pallas_src>

<mosaic_0001>
module attributes {stable_mosaic.version = 11 : i64} {
  func.func @encoder_kernel(%arg0: memref<2x8x32xf32, #tpu.memory_space<vmem>>, %arg1: memref<8x32xf32, #tpu.memory_space<vmem>>, %arg2: memref<2x1xi32, #tpu.memory_space<vmem>>, %arg3: memref<2x1x32xf32, #tpu.memory_space<vmem>>, %arg4: memref<2x1x32xf32, #tpu.memory_space<vmem>>, %arg5: memref<2x32x96xbf16, #tpu.memory_space<vmem>>, %arg6: memref<2x1x96xf32, #tpu.memory_space<vmem>>, %arg7: memref<2x32x32xbf16, #tpu.memory_space<vmem>>, %arg8: memref<2x1x32xf32, #tpu.memory_space<vmem>>, %arg9: memref<2x1x32xf32, #tpu.memory_space<vmem>>, %arg10: memref<2x1x32xf32, #tpu.memory_space<vmem>>, %arg11: memref<2x32x128xbf16, #tpu.memory_space<vmem>>, %arg12: memref<2x1x128xf32, #tpu.memory_space<vmem>>, %arg13: memref<2x128x32xbf16, #tpu.memory_space<vmem>>, %arg14: memref<2x1x32xf32, #tpu.memory_space<vmem>>, %arg15: memref<1x32xf32, #tpu.memory_space<vmem>>, %arg16: memref<1x32xf32, #tpu.memory_space<vmem>>, %arg17: memref<32x32xbf16, #tpu.memory_space<vmem>>, %arg18: memref<2x32xf32, #tpu.memory_space<vmem>>) attributes {dimension_semantics = [], scalar_prefetch = 0 : i64, scratch_operands = 0 : i64, tpu.core_type = #tpu.core_type<tc>} {
    %c0 = arith.constant 0 : index
    %c0_0 = arith.constant 0 : index
    %c0_1 = arith.constant 0 : index
    %0 = vector.load %arg0[%c0, %c0_0, %c0_1] : memref<2x8x32xf32, #tpu.memory_space<vmem>>, vector<2x8x32xf32>
    %c0_2 = arith.constant 0 : index
    %c0_3 = arith.constant 0 : index
    %1 = vector.load %arg1[%c0_2, %c0_3] : memref<8x32xf32, #tpu.memory_space<vmem>>, vector<8x32xf32>
    %2 = vector.shape_cast %1 : vector<8x32xf32> to vector<1x8x32xf32>
    %3 = vector.broadcast %2 : vector<1x8x32xf32> to vector<2x8x32xf32>
    %4 = arith.addf %0, %3 : vector<2x8x32xf32>
    %5 = vector.shape_cast %4 : vector<2x8x32xf32> to vector<16x32xf32>
    %6 = tpu.iota {dimensions = array<i32: 1>} : vector<2x8x8xi32>
    %7 = tpu.iota {dimensions = array<i32: 2>} : vector<2x8x8xi32>
    %8 = arith.cmpi sge, %6, %7 : vector<2x8x8xi32>
    %c0_4 = arith.constant 0 : index
    %c0_5 = arith.constant 0 : index
    %c0_6 = arith.constant 0 : index
    %9 = vector.load %arg3[%c0_4, %c0_5, %c0_6] : memref<2x1x32xf32, #tpu.memory_space<vmem>>, vector<1x1x32xf32>
    %10 = vector.shape_cast %9 : vector<1x1x32xf32> to vector<1x32xf32>
    %c0_7 = arith.constant 0 : index
    %c0_8 = arith.constant 0 : index
    %c0_9 = arith.constant 0 : index
    %11 = vector.load %arg4[%c0_7, %c0_8, %c0_9] : memref<2x1x32xf32, #tpu.memory_space<vmem>>, vector<1x1x32xf32>
    %12 = vector.shape_cast %11 : vector<1x1x32xf32> to vector<1x32xf32>
    %cst = arith.constant dense<0.000000e+00> : vector<16xf32>
    %13 = vector.multi_reduction <add>, %5, %cst [1] : vector<16x32xf32> to vector<16xf32>
    %14 = vector.shape_cast %13 : vector<16xf32> to vector<16x1xf32>
    %cst_10 = arith.constant 3.200000e+01 : f32
    %15 = vector.broadcast %cst_10 : f32 to vector<16x1xf32>
    %16 = arith.divf %14, %15 : vector<16x1xf32>
    %17 = vector.broadcast %16 : vector<16x1xf32> to vector<16x32xf32>
    %18 = arith.subf %5, %17 : vector<16x32xf32>
    %19 = arith.mulf %18, %18 : vector<16x32xf32>
    %cst_11 = arith.constant dense<0.000000e+00> : vector<16xf32>
    %20 = vector.multi_reduction <add>, %19, %cst_11 [1] : vector<16x32xf32> to vector<16xf32>
    %21 = vector.shape_cast %20 : vector<16xf32> to vector<16x1xf32>
    %cst_12 = arith.constant 3.200000e+01 : f32
    %22 = vector.broadcast %cst_12 : f32 to vector<16x1xf32>
    %23 = arith.divf %21, %22 : vector<16x1xf32>
    %24 = vector.broadcast %16 : vector<16x1xf32> to vector<16x32xf32>
    %25 = arith.subf %5, %24 : vector<16x32xf32>
    %cst_13 = arith.constant 9.99999974E-6 : f32
    %26 = vector.broadcast %cst_13 : f32 to vector<16x1xf32>
    %27 = arith.addf %23, %26 : vector<16x1xf32>
    %28 = math.rsqrt %27 : vector<16x1xf32>
    %29 = vector.broadcast %28 : vector<16x1xf32> to vector<16x32xf32>
    %30 = arith.mulf %25, %29 : vector<16x32xf32>
    %31 = vector.broadcast %10 : vector<1x32xf32> to vector<16x32xf32>
    %32 = arith.mulf %30, %31 : vector<16x32xf32>
    %33 = vector.broadcast %12 : vector<1x32xf32> to vector<16x32xf32>
    %34 = arith.addf %32, %33 : vector<16x32xf32>
    %35 = arith.truncf %34 : vector<16x32xf32> to vector<16x32xbf16>
    %c0_14 = arith.constant 0 : index
    %c0_15 = arith.constant 0 : index
    %c0_16 = arith.constant 0 : index
    %36 = vector.load %arg5[%c0_14, %c0_15, %c0_16] : memref<2x32x96xbf16, #tpu.memory_space<vmem>>, vector<1x32x96xbf16>
    %37 = vector.shape_cast %36 : vector<1x32x96xbf16> to vector<32x96xbf16>
    %cst_17 = arith.constant dense<0.000000e+00> : vector<16x96xf32>
    %38 = tpu.matmul %35, %37, %cst_17 {dimension_numbers = #tpu.dot_dimension_numbers<[1], [0], [0], [1], [0, 0, 1, 1], [], []>} : vector<16x32xbf16>, vector<32x96xbf16>, vector<16x96xf32> -> vector<16x96xf32>
    %c0_18 = arith.constant 0 : index
    %c0_19 = arith.constant 0 : index
    %c0_20 = arith.constant 0 : index
    %39 = vector.load %arg6[%c0_18, %c0_19, %c0_20] : memref<2x1x96xf32, #tpu.memory_space<vmem>>, vector<1x1x96xf32>
    %40 = vector.shape_cast %39 : vector<1x1x96xf32> to vector<1x96xf32>
    %41 = vector.broadcast %40 : vector<1x96xf32> to vector<16x96xf32>
    %42 = arith.addf %38, %41 : vector<16x96xf32>
    %43 = vector.extract_strided_slice %42 {offsets = [0, 0], sizes = [16, 32], strides = [1, 1]} : vector<16x96xf32> to vector<16x32xf32>
    %cst_21 = arith.constant 0.353553385 : f32
    %44 = vector.broadcast %cst_21 : f32 to vector<16x32xf32>
    %45 = arith.mulf %43, %44 : vector<16x32xf32>
    %46 = vector.extract_strided_slice %42 {offsets = [0, 32], sizes = [16, 32], strides = [1, 1]} : vector<16x96xf32> to vector<16x32xf32>
    %47 = vector.extract_strided_slice %42 {offsets = [0, 64], sizes = [16, 32], strides = [1, 1]} : vector<16x96xf32> to vector<16x32xf32>
    %48 = vector.extract_strided_slice %45 {offsets = [0, 0], sizes = [16, 8], strides = [1, 1]} : vector<16x32xf32> to vector<16x8xf32>
    %49 = vector.shape_cast %48 : vector<16x8xf32> to vector<2x8x8xf32>
    %50 = arith.truncf %49 : vector<2x8x8xf32> to vector<2x8x8xbf16>
    %51 = vector.extract_strided_slice %46 {offsets = [0, 0], sizes = [16, 8], strides = [1, 1]} : vector<16x32xf32> to vector<16x8xf32>
    %52 = vector.shape_cast %51 : vector<16x8xf32> to vector<2x8x8xf32>
    %53 = arith.truncf %52 : vector<2x8x8xf32> to vector<2x8x8xbf16>
    %54 = vector.extract_strided_slice %47 {offsets = [0, 0], sizes = [16, 8], strides = [1, 1]} : vector<16x32xf32> to vector<16x8xf32>
    %55 = vector.shape_cast %54 : vector<16x8xf32> to vector<2x8x8xf32>
    %56 = arith.truncf %55 : vector<2x8x8xf32> to vector<2x8x8xbf16>
    "tpu.trace_start"() <{level = 10 : i32, message = "bqd,bkd->bqk"}> : () -> ()
    %cst_22 = arith.constant dense<0.000000e+00> : vector<2x8x8xf32>
    %57 = tpu.matmul %50, %53, %cst_22 {dimension_numbers = #tpu.dot_dimension_numbers<[2], [2], [1], [1], [0, 0, 0, 1, 1, 1], [0], [0]>} : vector<2x8x8xbf16>, vector<2x8x8xbf16>, vector<2x8x8xf32> -> vector<2x8x8xf32>
    %cst_23 = arith.constant -1.000000e+30 : f32
    "tpu.trace_stop"() : () -> ()
    %58 = vector.broadcast %cst_23 : f32 to vector<2x8x8xf32>
    %59 = arith.select %8, %57, %58 : vector<2x8x8xi1>, vector<2x8x8xf32>
    %cst_24 = arith.constant dense<0xFF800000> : vector<2x8xf32>
    %60 = vector.multi_reduction <maximumf>, %59, %cst_24 [2] : vector<2x8x8xf32> to vector<2x8xf32>
    %61 = vector.shape_cast %60 : vector<2x8xf32> to vector<2x8x1xf32>
    %62 = vector.broadcast %61 : vector<2x8x1xf32> to vector<2x8x8xf32>
    %63 = arith.subf %59, %62 : vector<2x8x8xf32>
    %64 = math.exp %63 : vector<2x8x8xf32>
    %cst_25 = arith.constant dense<0.000000e+00> : vector<2x8xf32>
    %65 = vector.multi_reduction <add>, %64, %cst_25 [2] : vector<2x8x8xf32> to vector<2x8xf32>
    %66 = vector.shape_cast %65 : vector<2x8xf32> to vector<2x8x1xf32>
    %67 = tpu.reciprocal %66 {approx = true} : vector<2x8x1xf32> -> vector<2x8x1xf32>
    %68 = vector.broadcast %67 : vector<2x8x1xf32> to vector<2x8x8xf32>
    %69 = arith.mulf %64, %68 : vector<2x8x8xf32>
    %70 = arith.truncf %69 : vector<2x8x8xf32> to vector<2x8x8xbf16>
    "tpu.trace_start"() <{level = 10 : i32, message = "bqk,bkd->bqd"}> : () -> ()
    %cst_26 = arith.constant dense<0.000000e+00> : vector<2x8x8xf32>
    %71 = tpu.matmul %70, %56, %cst_26 {dimension_numbers = #tpu.dot_dimension_numbers<[2], [1], [1], [2], [0, 0, 0, 1, 1, 2], [0], [0]>} : vector<2x8x8xbf16>, vector<2x8x8xbf16>, vector<2x8x8xf32> -> vector<2x8x8xf32>
    "tpu.trace_stop"() : () -> ()
    %72 = vector.shape_cast %71 : vector<2x8x8xf32> to vector<16x8xf32>
    %73 = vector.extract_strided_slice %45 {offsets = [0, 8], sizes = [16, 8], strides = [1, 1]} : vector<16x32xf32> to vector<16x8xf32>
    %74 = vector.shape_cast %73 : vector<16x8xf32> to vector<2x8x8xf32>
    %75 = arith.truncf %74 : vector<2x8x8xf32> to vector<2x8x8xbf16>
    %76 = vector.extract_strided_slice %46 {offsets = [0, 8], sizes = [16, 8], strides = [1, 1]} : vector<16x32xf32> to vector<16x8xf32>
    %77 = vector.shape_cast %76 : vector<16x8xf32> to vector<2x8x8xf32>
    %78 = arith.truncf %77 : vector<2x8x8xf32> to vector<2x8x8xbf16>
    %79 = vector.extract_strided_slice %47 {offsets = [0, 8], sizes = [16, 8], strides = [1, 1]} : vector<16x32xf32> to vector<16x8xf32>
    %80 = vector.shape_cast %79 : vector<16x8xf32> to vector<2x8x8xf32>
    %81 = arith.truncf %80 : vector<2x8x8xf32> to vector<2x8x8xbf16>
    "tpu.trace_start"() <{level = 10 : i32, message = "bqd,bkd->bqk"}> : () -> ()
    %cst_27 = arith.constant dense<0.000000e+00> : vector<2x8x8xf32>
    %82 = tpu.matmul %75, %78, %cst_27 {dimension_numbers = #tpu.dot_dimension_numbers<[2], [2], [1], [1], [0, 0, 0, 1, 1, 1], [0], [0]>} : vector<2x8x8xbf16>, vector<2x8x8xbf16>, vector<2x8x8xf32> -> vector<2x8x8xf32>
    %cst_28 = arith.constant -1.000000e+30 : f32
    "tpu.trace_stop"() : () -> ()
    %83 = vector.broadcast %cst_28 : f32 to vector<2x8x8xf32>
    %84 = arith.select %8, %82, %83 : vector<2x8x8xi1>, vector<2x8x8xf32>
    %cst_29 = arith.constant dense<0xFF800000> : vector<2x8xf32>
    %85 = vector.multi_reduction <maximumf>, %84, %cst_29 [2] : vector<2x8x8xf32> to vector<2x8xf32>
    %86 = vector.shape_cast %85 : vector<2x8xf32> to vector<2x8x1xf32>
    %87 = vector.broadcast %86 : vector<2x8x1xf32> to vector<2x8x8xf32>
    %88 = arith.subf %84, %87 : vector<2x8x8xf32>
    %89 = math.exp %88 : vector<2x8x8xf32>
    %cst_30 = arith.constant dense<0.000000e+00> : vector<2x8xf32>
    %90 = vector.multi_reduction <add>, %89, %cst_30 [2] : vector<2x8x8xf32> to vector<2x8xf32>
    %91 = vector.shape_cast %90 : vector<2x8xf32> to vector<2x8x1xf32>
    %92 = tpu.reciprocal %91 {approx = true} : vector<2x8x1xf32> -> vector<2x8x1xf32>
    %93 = vector.broadcast %92 : vector<2x8x1xf32> to vector<2x8x8xf32>
    %94 = arith.mulf %89, %93 : vector<2x8x8xf32>
    %95 = arith.truncf %94 : vector<2x8x8xf32> to vector<2x8x8xbf16>
    "tpu.trace_start"() <{level = 10 : i32, message = "bqk,bkd->bqd"}> : () -> ()
    %cst_31 = arith.constant dense<0.000000e+00> : vector<2x8x8xf32>
    %96 = tpu.matmul %95, %81, %cst_31 {dimension_numbers = #tpu.dot_dimension_numbers<[2], [1], [1], [2], [0, 0, 0, 1, 1, 2], [0], [0]>} : vector<2x8x8xbf16>, vector<2x8x8xbf16>, vector<2x8x8xf32> -> vector<2x8x8xf32>
    "tpu.trace_stop"() : () -> ()
    %97 = vector.shape_cast %96 : vector<2x8x8xf32> to vector<16x8xf32>
    %98 = vector.extract_strided_slice %45 {offsets = [0, 16], sizes = [16, 8], strides = [1, 1]} : vector<16x32xf32> to vector<16x8xf32>
    %99 = vector.shape_cast %98 : vector<16x8xf32> to vector<2x8x8xf32>
    %100 = arith.truncf %99 : vector<2x8x8xf32> to vector<2x8x8xbf16>
    %101 = vector.extract_strided_slice %46 {offsets = [0, 16], sizes = [16, 8], strides = [1, 1]} : vector<16x32xf32> to vector<16x8xf32>
    %102 = vector.shape_cast %101 : vector<16x8xf32> to vector<2x8x8xf32>
    %103 = arith.truncf %102 : vector<2x8x8xf32> to vector<2x8x8xbf16>
    %104 = vector.extract_strided_slice %47 {offsets = [0, 16], sizes = [16, 8], strides = [1, 1]} : vector<16x32xf32> to vector<16x8xf32>
    %105 = vector.shape_cast %104 : vector<16x8xf32> to vector<2x8x8xf32>
    %106 = arith.truncf %105 : vector<2x8x8xf32> to vector<2x8x8xbf16>
    "tpu.trace_start"() <{level = 10 : i32, message = "bqd,bkd->bqk"}> : () -> ()
    %cst_32 = arith.constant dense<0.000000e+00> : vector<2x8x8xf32>
    %107 = tpu.matmul %100, %103, %cst_32 {dimension_numbers = #tpu.dot_dimension_numbers<[2], [2], [1], [1], [0, 0, 0, 1, 1, 1], [0], [0]>} : vector<2x8x8xbf16>, vector<2x8x8xbf16>, vector<2x8x8xf32> -> vector<2x8x8xf32>
    %cst_33 = arith.constant -1.000000e+30 : f32
    "tpu.trace_stop"() : () -> ()
    %108 = vector.broadcast %cst_33 : f32 to vector<2x8x8xf32>
    %109 = arith.select %8, %107, %108 : vector<2x8x8xi1>, vector<2x8x8xf32>
    %cst_34 = arith.constant dense<0xFF800000> : vector<2x8xf32>
    %110 = vector.multi_reduction <maximumf>, %109, %cst_34 [2] : vector<2x8x8xf32> to vector<2x8xf32>
    %111 = vector.shape_cast %110 : vector<2x8xf32> to vector<2x8x1xf32>
    %112 = vector.broadcast %111 : vector<2x8x1xf32> to vector<2x8x8xf32>
    %113 = arith.subf %109, %112 : vector<2x8x8xf32>
    %114 = math.exp %113 : vector<2x8x8xf32>
    %cst_35 = arith.constant dense<0.000000e+00> : vector<2x8xf32>
    %115 = vector.multi_reduction <add>, %114, %cst_35 [2] : vector<2x8x8xf32> to vector<2x8xf32>
    %116 = vector.shape_cast %115 : vector<2x8xf32> to vector<2x8x1xf32>
    %117 = tpu.reciprocal %116 {approx = true} : vector<2x8x1xf32> -> vector<2x8x1xf32>
    %118 = vector.broadcast %117 : vector<2x8x1xf32> to vector<2x8x8xf32>
    %119 = arith.mulf %114, %118 : vector<2x8x8xf32>
    %120 = arith.truncf %119 : vector<2x8x8xf32> to vector<2x8x8xbf16>
    "tpu.trace_start"() <{level = 10 : i32, message = "bqk,bkd->bqd"}> : () -> ()
    %cst_36 = arith.constant dense<0.000000e+00> : vector<2x8x8xf32>
    %121 = tpu.matmul %120, %106, %cst_36 {dimension_numbers = #tpu.dot_dimension_numbers<[2], [1], [1], [2], [0, 0, 0, 1, 1, 2], [0], [0]>} : vector<2x8x8xbf16>, vector<2x8x8xbf16>, vector<2x8x8xf32> -> vector<2x8x8xf32>
    "tpu.trace_stop"() : () -> ()
    %122 = vector.shape_cast %121 : vector<2x8x8xf32> to vector<16x8xf32>
    %123 = vector.extract_strided_slice %45 {offsets = [0, 24], sizes = [16, 8], strides = [1, 1]} : vector<16x32xf32> to vector<16x8xf32>
    %124 = vector.shape_cast %123 : vector<16x8xf32> to vector<2x8x8xf32>
    %125 = arith.truncf %124 : vector<2x8x8xf32> to vector<2x8x8xbf16>
    %126 = vector.extract_strided_slice %46 {offsets = [0, 24], sizes = [16, 8], strides = [1, 1]} : vector<16x32xf32> to vector<16x8xf32>
    %127 = vector.shape_cast %126 : vector<16x8xf32> to vector<2x8x8xf32>
    %128 = arith.truncf %127 : vector<2x8x8xf32> to vector<2x8x8xbf16>
    %129 = vector.extract_strided_slice %47 {offsets = [0, 24], sizes = [16, 8], strides = [1, 1]} : vector<16x32xf32> to vector<16x8xf32>
    %130 = vector.shape_cast %129 : vector<16x8xf32> to vector<2x8x8xf32>
    %131 = arith.truncf %130 : vector<2x8x8xf32> to vector<2x8x8xbf16>
    "tpu.trace_start"() <{level = 10 : i32, message = "bqd,bkd->bqk"}> : () -> ()
    %cst_37 = arith.constant dense<0.000000e+00> : vector<2x8x8xf32>
    %132 = tpu.matmul %125, %128, %cst_37 {dimension_numbers = #tpu.dot_dimension_numbers<[2], [2], [1], [1], [0, 0, 0, 1, 1, 1], [0], [0]>} : vector<2x8x8xbf16>, vector<2x8x8xbf16>, vector<2x8x8xf32> -> vector<2x8x8xf32>
    %cst_38 = arith.constant -1.000000e+30 : f32
    "tpu.trace_stop"() : () -> ()
    %133 = vector.broadcast %cst_38 : f32 to vector<2x8x8xf32>
    %134 = arith.select %8, %132, %133 : vector<2x8x8xi1>, vector<2x8x8xf32>
    %cst_39 = arith.constant dense<0xFF800000> : vector<2x8xf32>
    %135 = vector.multi_reduction <maximumf>, %134, %cst_39 [2] : vector<2x8x8xf32> to vector<2x8xf32>
    %136 = vector.shape_cast %135 : vector<2x8xf32> to vector<2x8x1xf32>
    %137 = vector.broadcast %136 : vector<2x8x1xf32> to vector<2x8x8xf32>
    %138 = arith.subf %134, %137 : vector<2x8x8xf32>
    %139 = math.exp %138 : vector<2x8x8xf32>
    %cst_40 = arith.constant dense<0.000000e+00> : vector<2x8xf32>
    %140 = vector.multi_reduction <add>, %139, %cst_40 [2] : vector<2x8x8xf32> to vector<2x8xf32>
    %141 = vector.shape_cast %140 : vector<2x8xf32> to vector<2x8x1xf32>
    %142 = tpu.reciprocal %141 {approx = true} : vector<2x8x1xf32> -> vector<2x8x1xf32>
    %143 = vector.broadcast %142 : vector<2x8x1xf32> to vector<2x8x8xf32>
    %144 = arith.mulf %139, %143 : vector<2x8x8xf32>
    %145 = arith.truncf %144 : vector<2x8x8xf32> to vector<2x8x8xbf16>
    "tpu.trace_start"() <{level = 10 : i32, message = "bqk,bkd->bqd"}> : () -> ()
    %cst_41 = arith.constant dense<0.000000e+00> : vector<2x8x8xf32>
    %146 = tpu.matmul %145, %131, %cst_41 {dimension_numbers = #tpu.dot_dimension_numbers<[2], [1], [1], [2], [0, 0, 0, 1, 1, 2], [0], [0]>} : vector<2x8x8xbf16>, vector<2x8x8xbf16>, vector<2x8x8xf32> -> vector<2x8x8xf32>
    "tpu.trace_stop"() : () -> ()
    %147 = vector.shape_cast %146 : vector<2x8x8xf32> to vector<16x8xf32>
    %148 = tpu.concatenate %72, %97, %122, %147 in 1 : vector<16x8xf32>, vector<16x8xf32>, vector<16x8xf32>, vector<16x8xf32> -> vector<16x32xf32>
    %149 = arith.truncf %148 : vector<16x32xf32> to vector<16x32xbf16>
    %c0_42 = arith.constant 0 : index
    %c0_43 = arith.constant 0 : index
    %c0_44 = arith.constant 0 : index
    %150 = vector.load %arg7[%c0_42, %c0_43, %c0_44] : memref<2x32x32xbf16, #tpu.memory_space<vmem>>, vector<1x32x32xbf16>
    %151 = vector.shape_cast %150 : vector<1x32x32xbf16> to vector<32x32xbf16>
    %cst_45 = arith.constant dense<0.000000e+00> : vector<16x32xf32>
    %152 = tpu.matmul %149, %151, %cst_45 {dimension_numbers = #tpu.dot_dimension_numbers<[1], [0], [0], [1], [0, 0, 1, 1], [], []>} : vector<16x32xbf16>, vector<32x32xbf16>, vector<16x32xf32> -> vector<16x32xf32>
    %153 = arith.addf %5, %152 : vector<16x32xf32>
    %c0_46 = arith.constant 0 : index
    %c0_47 = arith.constant 0 : index
    %c0_48 = arith.constant 0 : index
    %154 = vector.load %arg8[%c0_46, %c0_47, %c0_48] : memref<2x1x32xf32, #tpu.memory_space<vmem>>, vector<1x1x32xf32>
    %155 = vector.shape_cast %154 : vector<1x1x32xf32> to vector<1x32xf32>
    %156 = vector.broadcast %155 : vector<1x32xf32> to vector<16x32xf32>
    %157 = arith.addf %153, %156 : vector<16x32xf32>
    %c0_49 = arith.constant 0 : index
    %c0_50 = arith.constant 0 : index
    %c0_51 = arith.constant 0 : index
    %158 = vector.load %arg9[%c0_49, %c0_50, %c0_51] : memref<2x1x32xf32, #tpu.memory_space<vmem>>, vector<1x1x32xf32>
    %159 = vector.shape_cast %158 : vector<1x1x32xf32> to vector<1x32xf32>
    %c0_52 = arith.constant 0 : index
    %c0_53 = arith.constant 0 : index
    %c0_54 = arith.constant 0 : index
    %160 = vector.load %arg10[%c0_52, %c0_53, %c0_54] : memref<2x1x32xf32, #tpu.memory_space<vmem>>, vector<1x1x32xf32>
    %161 = vector.shape_cast %160 : vector<1x1x32xf32> to vector<1x32xf32>
    %cst_55 = arith.constant dense<0.000000e+00> : vector<16xf32>
    %162 = vector.multi_reduction <add>, %157, %cst_55 [1] : vector<16x32xf32> to vector<16xf32>
    %163 = vector.shape_cast %162 : vector<16xf32> to vector<16x1xf32>
    %cst_56 = arith.constant 3.200000e+01 : f32
    %164 = vector.broadcast %cst_56 : f32 to vector<16x1xf32>
    %165 = arith.divf %163, %164 : vector<16x1xf32>
    %166 = vector.broadcast %165 : vector<16x1xf32> to vector<16x32xf32>
    %167 = arith.subf %157, %166 : vector<16x32xf32>
    %168 = arith.mulf %167, %167 : vector<16x32xf32>
    %cst_57 = arith.constant dense<0.000000e+00> : vector<16xf32>
    %169 = vector.multi_reduction <add>, %168, %cst_57 [1] : vector<16x32xf32> to vector<16xf32>
    %170 = vector.shape_cast %169 : vector<16xf32> to vector<16x1xf32>
    %cst_58 = arith.constant 3.200000e+01 : f32
    %171 = vector.broadcast %cst_58 : f32 to vector<16x1xf32>
    %172 = arith.divf %170, %171 : vector<16x1xf32>
    %173 = vector.broadcast %165 : vector<16x1xf32> to vector<16x32xf32>
    %174 = arith.subf %157, %173 : vector<16x32xf32>
    %cst_59 = arith.constant 9.99999974E-6 : f32
    %175 = vector.broadcast %cst_59 : f32 to vector<16x1xf32>
    %176 = arith.addf %172, %175 : vector<16x1xf32>
    %177 = math.rsqrt %176 : vector<16x1xf32>
    %178 = vector.broadcast %177 : vector<16x1xf32> to vector<16x32xf32>
    %179 = arith.mulf %174, %178 : vector<16x32xf32>
    %180 = vector.broadcast %159 : vector<1x32xf32> to vector<16x32xf32>
    %181 = arith.mulf %179, %180 : vector<16x32xf32>
    %182 = vector.broadcast %161 : vector<1x32xf32> to vector<16x32xf32>
    %183 = arith.addf %181, %182 : vector<16x32xf32>
    %184 = arith.truncf %183 : vector<16x32xf32> to vector<16x32xbf16>
    %c0_60 = arith.constant 0 : index
    %c0_61 = arith.constant 0 : index
    %c0_62 = arith.constant 0 : index
    %185 = vector.load %arg11[%c0_60, %c0_61, %c0_62] : memref<2x32x128xbf16, #tpu.memory_space<vmem>>, vector<1x32x128xbf16>
    %186 = vector.shape_cast %185 : vector<1x32x128xbf16> to vector<32x128xbf16>
    %cst_63 = arith.constant dense<0.000000e+00> : vector<16x128xf32>
    %187 = tpu.matmul %184, %186, %cst_63 {dimension_numbers = #tpu.dot_dimension_numbers<[1], [0], [0], [1], [0, 0, 1, 1], [], []>} : vector<16x32xbf16>, vector<32x128xbf16>, vector<16x128xf32> -> vector<16x128xf32>
    %c0_64 = arith.constant 0 : index
    %c0_65 = arith.constant 0 : index
    %c0_66 = arith.constant 0 : index
    %188 = vector.load %arg12[%c0_64, %c0_65, %c0_66] : memref<2x1x128xf32, #tpu.memory_space<vmem>>, vector<1x1x128xf32>
    %189 = vector.shape_cast %188 : vector<1x1x128xf32> to vector<1x128xf32>
    %190 = vector.broadcast %189 : vector<1x128xf32> to vector<16x128xf32>
    %191 = arith.addf %187, %190 : vector<16x128xf32>
    %cst_67 = arith.constant 1.702000e+00 : f32
    %192 = vector.broadcast %cst_67 : f32 to vector<16x128xf32>
    %193 = arith.mulf %192, %191 : vector<16x128xf32>
    %194 = arith.negf %193 : vector<16x128xf32>
    %195 = math.exp %194 : vector<16x128xf32>
    %cst_68 = arith.constant 1.000000e+00 : f32
    %196 = vector.broadcast %cst_68 : f32 to vector<16x128xf32>
    %197 = arith.addf %196, %195 : vector<16x128xf32>
    %198 = arith.divf %196, %197 : vector<16x128xf32>
    %199 = arith.mulf %191, %198 : vector<16x128xf32>
    %200 = arith.truncf %199 : vector<16x128xf32> to vector<16x128xbf16>
    %c0_69 = arith.constant 0 : index
    %c0_70 = arith.constant 0 : index
    %c0_71 = arith.constant 0 : index
    %201 = vector.load %arg13[%c0_69, %c0_70, %c0_71] : memref<2x128x32xbf16, #tpu.memory_space<vmem>>, vector<1x128x32xbf16>
    %202 = vector.shape_cast %201 : vector<1x128x32xbf16> to vector<128x32xbf16>
    %cst_72 = arith.constant dense<0.000000e+00> : vector<16x32xf32>
    %203 = tpu.matmul %200, %202, %cst_72 {dimension_numbers = #tpu.dot_dimension_numbers<[1], [0], [0], [1], [0, 0, 1, 1], [], []>} : vector<16x128xbf16>, vector<128x32xbf16>, vector<16x32xf32> -> vector<16x32xf32>
    %204 = arith.addf %157, %203 : vector<16x32xf32>
    %c0_73 = arith.constant 0 : index
    %c0_74 = arith.constant 0 : index
    %c0_75 = arith.constant 0 : index
    %205 = vector.load %arg14[%c0_73, %c0_74, %c0_75] : memref<2x1x32xf32, #tpu.memory_space<vmem>>, vector<1x1x32xf32>
    %206 = vector.shape_cast %205 : vector<1x1x32xf32> to vector<1x32xf32>
    %207 = vector.broadcast %206 : vector<1x32xf32> to vector<16x32xf32>
    %208 = arith.addf %204, %207 : vector<16x32xf32>
    %c1 = arith.constant 1 : index
    %c0_76 = arith.constant 0 : index
    %c0_77 = arith.constant 0 : index
    %209 = vector.load %arg3[%c1, %c0_76, %c0_77] : memref<2x1x32xf32, #tpu.memory_space<vmem>>, vector<1x1x32xf32>
    %210 = vector.shape_cast %209 : vector<1x1x32xf32> to vector<1x32xf32>
    %c1_78 = arith.constant 1 : index
    %c0_79 = arith.constant 0 : index
    %c0_80 = arith.constant 0 : index
    %211 = vector.load %arg4[%c1_78, %c0_79, %c0_80] : memref<2x1x32xf32, #tpu.memory_space<vmem>>, vector<1x1x32xf32>
    %212 = vector.shape_cast %211 : vector<1x1x32xf32> to vector<1x32xf32>
    %cst_81 = arith.constant dense<0.000000e+00> : vector<16xf32>
    %213 = vector.multi_reduction <add>, %208, %cst_81 [1] : vector<16x32xf32> to vector<16xf32>
    %214 = vector.shape_cast %213 : vector<16xf32> to vector<16x1xf32>
    %cst_82 = arith.constant 3.200000e+01 : f32
    %215 = vector.broadcast %cst_82 : f32 to vector<16x1xf32>
    %216 = arith.divf %214, %215 : vector<16x1xf32>
    %217 = vector.broadcast %216 : vector<16x1xf32> to vector<16x32xf32>
    %218 = arith.subf %208, %217 : vector<16x32xf32>
    %219 = arith.mulf %218, %218 : vector<16x32xf32>
    %cst_83 = arith.constant dense<0.000000e+00> : vector<16xf32>
    %220 = vector.multi_reduction <add>, %219, %cst_83 [1] : vector<16x32xf32> to vector<16xf32>
    %221 = vector.shape_cast %220 : vector<16xf32> to vector<16x1xf32>
    %cst_84 = arith.constant 3.200000e+01 : f32
    %222 = vector.broadcast %cst_84 : f32 to vector<16x1xf32>
    %223 = arith.divf %221, %222 : vector<16x1xf32>
    %224 = vector.broadcast %216 : vector<16x1xf32> to vector<16x32xf32>
    %225 = arith.subf %208, %224 : vector<16x32xf32>
    %cst_85 = arith.constant 9.99999974E-6 : f32
    %226 = vector.broadcast %cst_85 : f32 to vector<16x1xf32>
    %227 = arith.addf %223, %226 : vector<16x1xf32>
    %228 = math.rsqrt %227 : vector<16x1xf32>
    %229 = vector.broadcast %228 : vector<16x1xf32> to vector<16x32xf32>
    %230 = arith.mulf %225, %229 : vector<16x32xf32>
    %231 = vector.broadcast %210 : vector<1x32xf32> to vector<16x32xf32>
    %232 = arith.mulf %230, %231 : vector<16x32xf32>
    %233 = vector.broadcast %212 : vector<1x32xf32> to vector<16x32xf32>
    %234 = arith.addf %232, %233 : vector<16x32xf32>
    %235 = arith.truncf %234 : vector<16x32xf32> to vector<16x32xbf16>
    %c1_86 = arith.constant 1 : index
    %c0_87 = arith.constant 0 : index
    %c0_88 = arith.constant 0 : index
    %236 = vector.load %arg5[%c1_86, %c0_87, %c0_88] : memref<2x32x96xbf16, #tpu.memory_space<vmem>>, vector<1x32x96xbf16>
    %237 = vector.shape_cast %236 : vector<1x32x96xbf16> to vector<32x96xbf16>
    %cst_89 = arith.constant dense<0.000000e+00> : vector<16x96xf32>
    %238 = tpu.matmul %235, %237, %cst_89 {dimension_numbers = #tpu.dot_dimension_numbers<[1], [0], [0], [1], [0, 0, 1, 1], [], []>} : vector<16x32xbf16>, vector<32x96xbf16>, vector<16x96xf32> -> vector<16x96xf32>
    %c1_90 = arith.constant 1 : index
    %c0_91 = arith.constant 0 : index
    %c0_92 = arith.constant 0 : index
    %239 = vector.load %arg6[%c1_90, %c0_91, %c0_92] : memref<2x1x96xf32, #tpu.memory_space<vmem>>, vector<1x1x96xf32>
    %240 = vector.shape_cast %239 : vector<1x1x96xf32> to vector<1x96xf32>
    %241 = vector.broadcast %240 : vector<1x96xf32> to vector<16x96xf32>
    %242 = arith.addf %238, %241 : vector<16x96xf32>
    %243 = vector.extract_strided_slice %242 {offsets = [0, 0], sizes = [16, 32], strides = [1, 1]} : vector<16x96xf32> to vector<16x32xf32>
    %cst_93 = arith.constant 0.353553385 : f32
    %244 = vector.broadcast %cst_93 : f32 to vector<16x32xf32>
    %245 = arith.mulf %243, %244 : vector<16x32xf32>
    %246 = vector.extract_strided_slice %242 {offsets = [0, 32], sizes = [16, 32], strides = [1, 1]} : vector<16x96xf32> to vector<16x32xf32>
    %247 = vector.extract_strided_slice %242 {offsets = [0, 64], sizes = [16, 32], strides = [1, 1]} : vector<16x96xf32> to vector<16x32xf32>
    %248 = vector.extract_strided_slice %245 {offsets = [0, 0], sizes = [16, 8], strides = [1, 1]} : vector<16x32xf32> to vector<16x8xf32>
    %249 = vector.shape_cast %248 : vector<16x8xf32> to vector<2x8x8xf32>
    %250 = arith.truncf %249 : vector<2x8x8xf32> to vector<2x8x8xbf16>
    %251 = vector.extract_strided_slice %246 {offsets = [0, 0], sizes = [16, 8], strides = [1, 1]} : vector<16x32xf32> to vector<16x8xf32>
    %252 = vector.shape_cast %251 : vector<16x8xf32> to vector<2x8x8xf32>
    %253 = arith.truncf %252 : vector<2x8x8xf32> to vector<2x8x8xbf16>
    %254 = vector.extract_strided_slice %247 {offsets = [0, 0], sizes = [16, 8], strides = [1, 1]} : vector<16x32xf32> to vector<16x8xf32>
    %255 = vector.shape_cast %254 : vector<16x8xf32> to vector<2x8x8xf32>
    %256 = arith.truncf %255 : vector<2x8x8xf32> to vector<2x8x8xbf16>
    "tpu.trace_start"() <{level = 10 : i32, message = "bqd,bkd->bqk"}> : () -> ()
    %cst_94 = arith.constant dense<0.000000e+00> : vector<2x8x8xf32>
    %257 = tpu.matmul %250, %253, %cst_94 {dimension_numbers = #tpu.dot_dimension_numbers<[2], [2], [1], [1], [0, 0, 0, 1, 1, 1], [0], [0]>} : vector<2x8x8xbf16>, vector<2x8x8xbf16>, vector<2x8x8xf32> -> vector<2x8x8xf32>
    %cst_95 = arith.constant -1.000000e+30 : f32
    "tpu.trace_stop"() : () -> ()
    %258 = vector.broadcast %cst_95 : f32 to vector<2x8x8xf32>
    %259 = arith.select %8, %257, %258 : vector<2x8x8xi1>, vector<2x8x8xf32>
    %cst_96 = arith.constant dense<0xFF800000> : vector<2x8xf32>
    %260 = vector.multi_reduction <maximumf>, %259, %cst_96 [2] : vector<2x8x8xf32> to vector<2x8xf32>
    %261 = vector.shape_cast %260 : vector<2x8xf32> to vector<2x8x1xf32>
    %262 = vector.broadcast %261 : vector<2x8x1xf32> to vector<2x8x8xf32>
    %263 = arith.subf %259, %262 : vector<2x8x8xf32>
    %264 = math.exp %263 : vector<2x8x8xf32>
    %cst_97 = arith.constant dense<0.000000e+00> : vector<2x8xf32>
    %265 = vector.multi_reduction <add>, %264, %cst_97 [2] : vector<2x8x8xf32> to vector<2x8xf32>
    %266 = vector.shape_cast %265 : vector<2x8xf32> to vector<2x8x1xf32>
    %267 = tpu.reciprocal %266 {approx = true} : vector<2x8x1xf32> -> vector<2x8x1xf32>
    %268 = vector.broadcast %267 : vector<2x8x1xf32> to vector<2x8x8xf32>
    %269 = arith.mulf %264, %268 : vector<2x8x8xf32>
    %270 = arith.truncf %269 : vector<2x8x8xf32> to vector<2x8x8xbf16>
    "tpu.trace_start"() <{level = 10 : i32, message = "bqk,bkd->bqd"}> : () -> ()
    %cst_98 = arith.constant dense<0.000000e+00> : vector<2x8x8xf32>
    %271 = tpu.matmul %270, %256, %cst_98 {dimension_numbers = #tpu.dot_dimension_numbers<[2], [1], [1], [2], [0, 0, 0, 1, 1, 2], [0], [0]>} : vector<2x8x8xbf16>, vector<2x8x8xbf16>, vector<2x8x8xf32> -> vector<2x8x8xf32>
    "tpu.trace_stop"() : () -> ()
    %272 = vector.shape_cast %271 : vector<2x8x8xf32> to vector<16x8xf32>
    %273 = vector.extract_strided_slice %245 {offsets = [0, 8], sizes = [16, 8], strides = [1, 1]} : vector<16x32xf32> to vector<16x8xf32>
    %274 = vector.shape_cast %273 : vector<16x8xf32> to vector<2x8x8xf32>
    %275 = arith.truncf %274 : vector<2x8x8xf32> to vector<2x8x8xbf16>
    %276 = vector.extract_strided_slice %246 {offsets = [0, 8], sizes = [16, 8], strides = [1, 1]} : vector<16x32xf32> to vector<16x8xf32>
    %277 = vector.shape_cast %276 : vector<16x8xf32> to vector<2x8x8xf32>
    %278 = arith.truncf %277 : vector<2x8x8xf32> to vector<2x8x8xbf16>
    %279 = vector.extract_strided_slice %247 {offsets = [0, 8], sizes = [16, 8], strides = [1, 1]} : vector<16x32xf32> to vector<16x8xf32>
    %280 = vector.shape_cast %279 : vector<16x8xf32> to vector<2x8x8xf32>
    %281 = arith.truncf %280 : vector<2x8x8xf32> to vector<2x8x8xbf16>
    "tpu.trace_start"() <{level = 10 : i32, message = "bqd,bkd->bqk"}> : () -> ()
    %cst_99 = arith.constant dense<0.000000e+00> : vector<2x8x8xf32>
    %282 = tpu.matmul %275, %278, %cst_99 {dimension_numbers = #tpu.dot_dimension_numbers<[2], [2], [1], [1], [0, 0, 0, 1, 1, 1], [0], [0]>} : vector<2x8x8xbf16>, vector<2x8x8xbf16>, vector<2x8x8xf32> -> vector<2x8x8xf32>
    %cst_100 = arith.constant -1.000000e+30 : f32
    "tpu.trace_stop"() : () -> ()
    %283 = vector.broadcast %cst_100 : f32 to vector<2x8x8xf32>
    %284 = arith.select %8, %282, %283 : vector<2x8x8xi1>, vector<2x8x8xf32>
    %cst_101 = arith.constant dense<0xFF800000> : vector<2x8xf32>
    %285 = vector.multi_reduction <maximumf>, %284, %cst_101 [2] : vector<2x8x8xf32> to vector<2x8xf32>
    %286 = vector.shape_cast %285 : vector<2x8xf32> to vector<2x8x1xf32>
    %287 = vector.broadcast %286 : vector<2x8x1xf32> to vector<2x8x8xf32>
    %288 = arith.subf %284, %287 : vector<2x8x8xf32>
    %289 = math.exp %288 : vector<2x8x8xf32>
    %cst_102 = arith.constant dense<0.000000e+00> : vector<2x8xf32>
    %290 = vector.multi_reduction <add>, %289, %cst_102 [2] : vector<2x8x8xf32> to vector<2x8xf32>
    %291 = vector.shape_cast %290 : vector<2x8xf32> to vector<2x8x1xf32>
    %292 = tpu.reciprocal %291 {approx = true} : vector<2x8x1xf32> -> vector<2x8x1xf32>
    %293 = vector.broadcast %292 : vector<2x8x1xf32> to vector<2x8x8xf32>
    %294 = arith.mulf %289, %293 : vector<2x8x8xf32>
    %295 = arith.truncf %294 : vector<2x8x8xf32> to vector<2x8x8xbf16>
    "tpu.trace_start"() <{level = 10 : i32, message = "bqk,bkd->bqd"}> : () -> ()
    %cst_103 = arith.constant dense<0.000000e+00> : vector<2x8x8xf32>
    %296 = tpu.matmul %295, %281, %cst_103 {dimension_numbers = #tpu.dot_dimension_numbers<[2], [1], [1], [2], [0, 0, 0, 1, 1, 2], [0], [0]>} : vector<2x8x8xbf16>, vector<2x8x8xbf16>, vector<2x8x8xf32> -> vector<2x8x8xf32>
    "tpu.trace_stop"() : () -> ()
    %297 = vector.shape_cast %296 : vector<2x8x8xf32> to vector<16x8xf32>
    %298 = vector.extract_strided_slice %245 {offsets = [0, 16], sizes = [16, 8], strides = [1, 1]} : vector<16x32xf32> to vector<16x8xf32>
    %299 = vector.shape_cast %298 : vector<16x8xf32> to vector<2x8x8xf32>
    %300 = arith.truncf %299 : vector<2x8x8xf32> to vector<2x8x8xbf16>
    %301 = vector.extract_strided_slice %246 {offsets = [0, 16], sizes = [16, 8], strides = [1, 1]} : vector<16x32xf32> to vector<16x8xf32>
    %302 = vector.shape_cast %301 : vector<16x8xf32> to vector<2x8x8xf32>
    %303 = arith.truncf %302 : vector<2x8x8xf32> to vector<2x8x8xbf16>
    %304 = vector.extract_strided_slice %247 {offsets = [0, 16], sizes = [16, 8], strides = [1, 1]} : vector<16x32xf32> to vector<16x8xf32>
    %305 = vector.shape_cast %304 : vector<16x8xf32> to vector<2x8x8xf32>
    %306 = arith.truncf %305 : vector<2x8x8xf32> to vector<2x8x8xbf16>
    "tpu.trace_start"() <{level = 10 : i32, message = "bqd,bkd->bqk"}> : () -> ()
    %cst_104 = arith.constant dense<0.000000e+00> : vector<2x8x8xf32>
    %307 = tpu.matmul %300, %303, %cst_104 {dimension_numbers = #tpu.dot_dimension_numbers<[2], [2], [1], [1], [0, 0, 0, 1, 1, 1], [0], [0]>} : vector<2x8x8xbf16>, vector<2x8x8xbf16>, vector<2x8x8xf32> -> vector<2x8x8xf32>
    %cst_105 = arith.constant -1.000000e+30 : f32
    "tpu.trace_stop"() : () -> ()
    %308 = vector.broadcast %cst_105 : f32 to vector<2x8x8xf32>
    %309 = arith.select %8, %307, %308 : vector<2x8x8xi1>, vector<2x8x8xf32>
    %cst_106 = arith.constant dense<0xFF800000> : vector<2x8xf32>
    %310 = vector.multi_reduction <maximumf>, %309, %cst_106 [2] : vector<2x8x8xf32> to vector<2x8xf32>
    %311 = vector.shape_cast %310 : vector<2x8xf32> to vector<2x8x1xf32>
    %312 = vector.broadcast %311 : vector<2x8x1xf32> to vector<2x8x8xf32>
    %313 = arith.subf %309, %312 : vector<2x8x8xf32>
    %314 = math.exp %313 : vector<2x8x8xf32>
    %cst_107 = arith.constant dense<0.000000e+00> : vector<2x8xf32>
    %315 = vector.multi_reduction <add>, %314, %cst_107 [2] : vector<2x8x8xf32> to vector<2x8xf32>
    %316 = vector.shape_cast %315 : vector<2x8xf32> to vector<2x8x1xf32>
    %317 = tpu.reciprocal %316 {approx = true} : vector<2x8x1xf32> -> vector<2x8x1xf32>
    %318 = vector.broadcast %317 : vector<2x8x1xf32> to vector<2x8x8xf32>
    %319 = arith.mulf %314, %318 : vector<2x8x8xf32>
    %320 = arith.truncf %319 : vector<2x8x8xf32> to vector<2x8x8xbf16>
    "tpu.trace_start"() <{level = 10 : i32, message = "bqk,bkd->bqd"}> : () -> ()
    %cst_108 = arith.constant dense<0.000000e+00> : vector<2x8x8xf32>
    %321 = tpu.matmul %320, %306, %cst_108 {dimension_numbers = #tpu.dot_dimension_numbers<[2], [1], [1], [2], [0, 0, 0, 1, 1, 2], [0], [0]>} : vector<2x8x8xbf16>, vector<2x8x8xbf16>, vector<2x8x8xf32> -> vector<2x8x8xf32>
    "tpu.trace_stop"() : () -> ()
    %322 = vector.shape_cast %321 : vector<2x8x8xf32> to vector<16x8xf32>
    %323 = vector.extract_strided_slice %245 {offsets = [0, 24], sizes = [16, 8], strides = [1, 1]} : vector<16x32xf32> to vector<16x8xf32>
    %324 = vector.shape_cast %323 : vector<16x8xf32> to vector<2x8x8xf32>
    %325 = arith.truncf %324 : vector<2x8x8xf32> to vector<2x8x8xbf16>
    %326 = vector.extract_strided_slice %246 {offsets = [0, 24], sizes = [16, 8], strides = [1, 1]} : vector<16x32xf32> to vector<16x8xf32>
    %327 = vector.shape_cast %326 : vector<16x8xf32> to vector<2x8x8xf32>
    %328 = arith.truncf %327 : vector<2x8x8xf32> to vector<2x8x8xbf16>
    %329 = vector.extract_strided_slice %247 {offsets = [0, 24], sizes = [16, 8], strides = [1, 1]} : vector<16x32xf32> to vector<16x8xf32>
    %330 = vector.shape_cast %329 : vector<16x8xf32> to vector<2x8x8xf32>
    %331 = arith.truncf %330 : vector<2x8x8xf32> to vector<2x8x8xbf16>
    "tpu.trace_start"() <{level = 10 : i32, message = "bqd,bkd->bqk"}> : () -> ()
    %cst_109 = arith.constant dense<0.000000e+00> : vector<2x8x8xf32>
    %332 = tpu.matmul %325, %328, %cst_109 {dimension_numbers = #tpu.dot_dimension_numbers<[2], [2], [1], [1], [0, 0, 0, 1, 1, 1], [0], [0]>} : vector<2x8x8xbf16>, vector<2x8x8xbf16>, vector<2x8x8xf32> -> vector<2x8x8xf32>
    %cst_110 = arith.constant -1.000000e+30 : f32
    "tpu.trace_stop"() : () -> ()
    %333 = vector.broadcast %cst_110 : f32 to vector<2x8x8xf32>
    %334 = arith.select %8, %332, %333 : vector<2x8x8xi1>, vector<2x8x8xf32>
    %cst_111 = arith.constant dense<0xFF800000> : vector<2x8xf32>
    %335 = vector.multi_reduction <maximumf>, %334, %cst_111 [2] : vector<2x8x8xf32> to vector<2x8xf32>
    %336 = vector.shape_cast %335 : vector<2x8xf32> to vector<2x8x1xf32>
    %337 = vector.broadcast %336 : vector<2x8x1xf32> to vector<2x8x8xf32>
    %338 = arith.subf %334, %337 : vector<2x8x8xf32>
    %339 = math.exp %338 : vector<2x8x8xf32>
    %cst_112 = arith.constant dense<0.000000e+00> : vector<2x8xf32>
    %340 = vector.multi_reduction <add>, %339, %cst_112 [2] : vector<2x8x8xf32> to vector<2x8xf32>
    %341 = vector.shape_cast %340 : vector<2x8xf32> to vector<2x8x1xf32>
    %342 = tpu.reciprocal %341 {approx = true} : vector<2x8x1xf32> -> vector<2x8x1xf32>
    %343 = vector.broadcast %342 : vector<2x8x1xf32> to vector<2x8x8xf32>
    %344 = arith.mulf %339, %343 : vector<2x8x8xf32>
    %345 = arith.truncf %344 : vector<2x8x8xf32> to vector<2x8x8xbf16>
    "tpu.trace_start"() <{level = 10 : i32, message = "bqk,bkd->bqd"}> : () -> ()
    %cst_113 = arith.constant dense<0.000000e+00> : vector<2x8x8xf32>
    %346 = tpu.matmul %345, %331, %cst_113 {dimension_numbers = #tpu.dot_dimension_numbers<[2], [1], [1], [2], [0, 0, 0, 1, 1, 2], [0], [0]>} : vector<2x8x8xbf16>, vector<2x8x8xbf16>, vector<2x8x8xf32> -> vector<2x8x8xf32>
    "tpu.trace_stop"() : () -> ()
    %347 = vector.shape_cast %346 : vector<2x8x8xf32> to vector<16x8xf32>
    %348 = tpu.concatenate %272, %297, %322, %347 in 1 : vector<16x8xf32>, vector<16x8xf32>, vector<16x8xf32>, vector<16x8xf32> -> vector<16x32xf32>
    %349 = arith.truncf %348 : vector<16x32xf32> to vector<16x32xbf16>
    %c1_114 = arith.constant 1 : index
    %c0_115 = arith.constant 0 : index
    %c0_116 = arith.constant 0 : index
    %350 = vector.load %arg7[%c1_114, %c0_115, %c0_116] : memref<2x32x32xbf16, #tpu.memory_space<vmem>>, vector<1x32x32xbf16>
    %351 = vector.shape_cast %350 : vector<1x32x32xbf16> to vector<32x32xbf16>
    %cst_117 = arith.constant dense<0.000000e+00> : vector<16x32xf32>
    %352 = tpu.matmul %349, %351, %cst_117 {dimension_numbers = #tpu.dot_dimension_numbers<[1], [0], [0], [1], [0, 0, 1, 1], [], []>} : vector<16x32xbf16>, vector<32x32xbf16>, vector<16x32xf32> -> vector<16x32xf32>
    %353 = arith.addf %208, %352 : vector<16x32xf32>
    %c1_118 = arith.constant 1 : index
    %c0_119 = arith.constant 0 : index
    %c0_120 = arith.constant 0 : index
    %354 = vector.load %arg8[%c1_118, %c0_119, %c0_120] : memref<2x1x32xf32, #tpu.memory_space<vmem>>, vector<1x1x32xf32>
    %355 = vector.shape_cast %354 : vector<1x1x32xf32> to vector<1x32xf32>
    %356 = vector.broadcast %355 : vector<1x32xf32> to vector<16x32xf32>
    %357 = arith.addf %353, %356 : vector<16x32xf32>
    %c1_121 = arith.constant 1 : index
    %c0_122 = arith.constant 0 : index
    %c0_123 = arith.constant 0 : index
    %358 = vector.load %arg9[%c1_121, %c0_122, %c0_123] : memref<2x1x32xf32, #tpu.memory_space<vmem>>, vector<1x1x32xf32>
    %359 = vector.shape_cast %358 : vector<1x1x32xf32> to vector<1x32xf32>
    %c1_124 = arith.constant 1 : index
    %c0_125 = arith.constant 0 : index
    %c0_126 = arith.constant 0 : index
    %360 = vector.load %arg10[%c1_124, %c0_125, %c0_126] : memref<2x1x32xf32, #tpu.memory_space<vmem>>, vector<1x1x32xf32>
    %361 = vector.shape_cast %360 : vector<1x1x32xf32> to vector<1x32xf32>
    %cst_127 = arith.constant dense<0.000000e+00> : vector<16xf32>
    %362 = vector.multi_reduction <add>, %357, %cst_127 [1] : vector<16x32xf32> to vector<16xf32>
    %363 = vector.shape_cast %362 : vector<16xf32> to vector<16x1xf32>
    %cst_128 = arith.constant 3.200000e+01 : f32
    %364 = vector.broadcast %cst_128 : f32 to vector<16x1xf32>
    %365 = arith.divf %363, %364 : vector<16x1xf32>
    %366 = vector.broadcast %365 : vector<16x1xf32> to vector<16x32xf32>
    %367 = arith.subf %357, %366 : vector<16x32xf32>
    %368 = arith.mulf %367, %367 : vector<16x32xf32>
    %cst_129 = arith.constant dense<0.000000e+00> : vector<16xf32>
    %369 = vector.multi_reduction <add>, %368, %cst_129 [1] : vector<16x32xf32> to vector<16xf32>
    %370 = vector.shape_cast %369 : vector<16xf32> to vector<16x1xf32>
    %cst_130 = arith.constant 3.200000e+01 : f32
    %371 = vector.broadcast %cst_130 : f32 to vector<16x1xf32>
    %372 = arith.divf %370, %371 : vector<16x1xf32>
    %373 = vector.broadcast %365 : vector<16x1xf32> to vector<16x32xf32>
    %374 = arith.subf %357, %373 : vector<16x32xf32>
    %cst_131 = arith.constant 9.99999974E-6 : f32
    %375 = vector.broadcast %cst_131 : f32 to vector<16x1xf32>
    %376 = arith.addf %372, %375 : vector<16x1xf32>
    %377 = math.rsqrt %376 : vector<16x1xf32>
    %378 = vector.broadcast %377 : vector<16x1xf32> to vector<16x32xf32>
    %379 = arith.mulf %374, %378 : vector<16x32xf32>
    %380 = vector.broadcast %359 : vector<1x32xf32> to vector<16x32xf32>
    %381 = arith.mulf %379, %380 : vector<16x32xf32>
    %382 = vector.broadcast %361 : vector<1x32xf32> to vector<16x32xf32>
    %383 = arith.addf %381, %382 : vector<16x32xf32>
    %384 = arith.truncf %383 : vector<16x32xf32> to vector<16x32xbf16>
    %c1_132 = arith.constant 1 : index
    %c0_133 = arith.constant 0 : index
    %c0_134 = arith.constant 0 : index
    %385 = vector.load %arg11[%c1_132, %c0_133, %c0_134] : memref<2x32x128xbf16, #tpu.memory_space<vmem>>, vector<1x32x128xbf16>
    %386 = vector.shape_cast %385 : vector<1x32x128xbf16> to vector<32x128xbf16>
    %cst_135 = arith.constant dense<0.000000e+00> : vector<16x128xf32>
    %387 = tpu.matmul %384, %386, %cst_135 {dimension_numbers = #tpu.dot_dimension_numbers<[1], [0], [0], [1], [0, 0, 1, 1], [], []>} : vector<16x32xbf16>, vector<32x128xbf16>, vector<16x128xf32> -> vector<16x128xf32>
    %c1_136 = arith.constant 1 : index
    %c0_137 = arith.constant 0 : index
    %c0_138 = arith.constant 0 : index
    %388 = vector.load %arg12[%c1_136, %c0_137, %c0_138] : memref<2x1x128xf32, #tpu.memory_space<vmem>>, vector<1x1x128xf32>
    %389 = vector.shape_cast %388 : vector<1x1x128xf32> to vector<1x128xf32>
    %390 = vector.broadcast %389 : vector<1x128xf32> to vector<16x128xf32>
    %391 = arith.addf %387, %390 : vector<16x128xf32>
    %cst_139 = arith.constant 1.702000e+00 : f32
    %392 = vector.broadcast %cst_139 : f32 to vector<16x128xf32>
    %393 = arith.mulf %392, %391 : vector<16x128xf32>
    %394 = arith.negf %393 : vector<16x128xf32>
    %395 = math.exp %394 : vector<16x128xf32>
    %cst_140 = arith.constant 1.000000e+00 : f32
    %396 = vector.broadcast %cst_140 : f32 to vector<16x128xf32>
    %397 = arith.addf %396, %395 : vector<16x128xf32>
    %398 = arith.divf %396, %397 : vector<16x128xf32>
    %399 = arith.mulf %391, %398 : vector<16x128xf32>
    %400 = arith.truncf %399 : vector<16x128xf32> to vector<16x128xbf16>
    %c1_141 = arith.constant 1 : index
    %c0_142 = arith.constant 0 : index
    %c0_143 = arith.constant 0 : index
    %401 = vector.load %arg13[%c1_141, %c0_142, %c0_143] : memref<2x128x32xbf16, #tpu.memory_space<vmem>>, vector<1x128x32xbf16>
    %402 = vector.shape_cast %401 : vector<1x128x32xbf16> to vector<128x32xbf16>
    %cst_144 = arith.constant dense<0.000000e+00> : vector<16x32xf32>
    %403 = tpu.matmul %400, %402, %cst_144 {dimension_numbers = #tpu.dot_dimension_numbers<[1], [0], [0], [1], [0, 0, 1, 1], [], []>} : vector<16x128xbf16>, vector<128x32xbf16>, vector<16x32xf32> -> vector<16x32xf32>
    %404 = arith.addf %357, %403 : vector<16x32xf32>
    %c1_145 = arith.constant 1 : index
    %c0_146 = arith.constant 0 : index
    %c0_147 = arith.constant 0 : index
    %405 = vector.load %arg14[%c1_145, %c0_146, %c0_147] : memref<2x1x32xf32, #tpu.memory_space<vmem>>, vector<1x1x32xf32>
    %406 = vector.shape_cast %405 : vector<1x1x32xf32> to vector<1x32xf32>
    %407 = vector.broadcast %406 : vector<1x32xf32> to vector<16x32xf32>
    %408 = arith.addf %404, %407 : vector<16x32xf32>
    %c0_148 = arith.constant 0 : index
    %c0_149 = arith.constant 0 : index
    %409 = vector.load %arg2[%c0_148, %c0_149] : memref<2x1xi32, #tpu.memory_space<vmem>>, vector<2x1xi32>
    %410 = tpu.iota {dimensions = array<i32: 0>} : vector<2x16xi32>
    %411 = tpu.iota {dimensions = array<i32: 1>} : vector<2x16xi32>
    %c8_i32 = arith.constant 8 : i32
    %412 = vector.broadcast %c8_i32 : i32 to vector<2x16xi32>
    %413 = arith.muli %410, %412 : vector<2x16xi32>
    %414 = vector.broadcast %409 : vector<2x1xi32> to vector<2x16xi32>
    %415 = arith.addi %413, %414 : vector<2x16xi32>
    %416 = arith.cmpi eq, %411, %415 : vector<2x16xi32>
    %417 = arith.extui %416 : vector<2x16xi1> to vector<2x16xi32>
    %418 = arith.sitofp %417 : vector<2x16xi32> to vector<2x16xf32>
    %cst_150 = arith.constant dense<0.000000e+00> : vector<2x32xf32>
    %419 = tpu.matmul %418, %408, %cst_150 {dimension_numbers = #tpu.dot_dimension_numbers<[1], [0], [0], [1], [0, 0, 1, 1], [], []>} : vector<2x16xf32>, vector<16x32xf32>, vector<2x32xf32> -> vector<2x32xf32>
    %c0_151 = arith.constant 0 : index
    %c0_152 = arith.constant 0 : index
    %420 = vector.load %arg15[%c0_151, %c0_152] : memref<1x32xf32, #tpu.memory_space<vmem>>, vector<1x32xf32>
    %c0_153 = arith.constant 0 : index
    %c0_154 = arith.constant 0 : index
    %421 = vector.load %arg16[%c0_153, %c0_154] : memref<1x32xf32, #tpu.memory_space<vmem>>, vector<1x32xf32>
    %cst_155 = arith.constant dense<0.000000e+00> : vector<2xf32>
    %422 = vector.multi_reduction <add>, %419, %cst_155 [1] : vector<2x32xf32> to vector<2xf32>
    %423 = vector.shape_cast %422 : vector<2xf32> to vector<2x1xf32>
    %cst_156 = arith.constant 3.200000e+01 : f32
    %424 = vector.broadcast %cst_156 : f32 to vector<2x1xf32>
    %425 = arith.divf %423, %424 : vector<2x1xf32>
    %426 = vector.broadcast %425 : vector<2x1xf32> to vector<2x32xf32>
    %427 = arith.subf %419, %426 : vector<2x32xf32>
    %428 = arith.mulf %427, %427 : vector<2x32xf32>
    %cst_157 = arith.constant dense<0.000000e+00> : vector<2xf32>
    %429 = vector.multi_reduction <add>, %428, %cst_157 [1] : vector<2x32xf32> to vector<2xf32>
    %430 = vector.shape_cast %429 : vector<2xf32> to vector<2x1xf32>
    %cst_158 = arith.constant 3.200000e+01 : f32
    %431 = vector.broadcast %cst_158 : f32 to vector<2x1xf32>
    %432 = arith.divf %430, %431 : vector<2x1xf32>
    %433 = vector.broadcast %425 : vector<2x1xf32> to vector<2x32xf32>
    %434 = arith.subf %419, %433 : vector<2x32xf32>
    %cst_159 = arith.constant 9.99999974E-6 : f32
    %435 = vector.broadcast %cst_159 : f32 to vector<2x1xf32>
    %436 = arith.addf %432, %435 : vector<2x1xf32>
    %437 = math.rsqrt %436 : vector<2x1xf32>
    %438 = vector.broadcast %437 : vector<2x1xf32> to vector<2x32xf32>
    %439 = arith.mulf %434, %438 : vector<2x32xf32>
    %440 = vector.broadcast %420 : vector<1x32xf32> to vector<2x32xf32>
    %441 = arith.mulf %439, %440 : vector<2x32xf32>
    %442 = vector.broadcast %421 : vector<1x32xf32> to vector<2x32xf32>
    %443 = arith.addf %441, %442 : vector<2x32xf32>
    %444 = arith.truncf %443 : vector<2x32xf32> to vector<2x32xbf16>
    %c0_160 = arith.constant 0 : index
    %c0_161 = arith.constant 0 : index
    %445 = vector.load %arg17[%c0_160, %c0_161] : memref<32x32xbf16, #tpu.memory_space<vmem>>, vector<32x32xbf16>
    %cst_162 = arith.constant dense<0.000000e+00> : vector<2x32xf32>
    %446 = tpu.matmul %444, %445, %cst_162 {dimension_numbers = #tpu.dot_dimension_numbers<[1], [0], [0], [1], [0, 0, 1, 1], [], []>} : vector<2x32xbf16>, vector<32x32xbf16>, vector<2x32xf32> -> vector<2x32xf32>
    %c0_163 = arith.constant 0 : index
    %c0_164 = arith.constant 0 : index
    %447 = vector.load %arg18[%c0_163, %c0_164] : memref<2x32xf32, #tpu.memory_space<vmem>>, vector<2x32xf32>
    tpu.vector_store %arg18[%c0_163, %c0_164], %446 {strides = array<i32>} : memref<2x32xf32, #tpu.memory_space<vmem>>, vector<2x32xf32>,
    return
  }
}

</mosaic_0001>

<llo_original>
// kernel: text_encoder.1
$region0: #{text_encoder.1}
  #allocation0 [shape = 'u32[]', space=smem, size = 0x4, offset = 0x4, fixed_abs, tag = 'smem constant byte address 0x4 - core index']
  #allocation1 [shape = 'u32[144,128]{1,0:T(1,128)}', space=vmem, size = 0x12000, scoped, tag = 'internal scratch']
  %s0 = inlined_call_operand.vmem [shape: f32[2,8,32], index: 0, kind: input, shape index: {}]
  %s1 = inlined_call_operand.vmem [shape: f32[8,32], index: 1, kind: input, shape index: {}]
  %s2 = inlined_call_operand.vmem [shape: s32[2,1], index: 2, kind: input, shape index: {}]
  %s3 = inlined_call_operand.vmem [shape: f32[2,1,32], index: 3, kind: input, shape index: {}]
  %s4 = inlined_call_operand.vmem [shape: f32[2,1,32], index: 4, kind: input, shape index: {}]
  %s5 = inlined_call_operand.vmem [shape: bf16[2,32,96], index: 5, kind: input, shape index: {}]
  %s6 = inlined_call_operand.vmem [shape: f32[2,1,96], index: 6, kind: input, shape index: {}]
  %s7 = inlined_call_operand.vmem [shape: bf16[2,32,32], index: 7, kind: input, shape index: {}]
  %s8 = inlined_call_operand.vmem [shape: f32[2,1,32], index: 8, kind: input, shape index: {}]
  %s9 = inlined_call_operand.vmem [shape: f32[2,1,32], index: 9, kind: input, shape index: {}]
  %s10 = inlined_call_operand.vmem [shape: f32[2,1,32], index: 10, kind: input, shape index: {}]
  %s11 = inlined_call_operand.vmem [shape: bf16[2,32,128], index: 11, kind: input, shape index: {}]
  %s12 = inlined_call_operand.vmem [shape: f32[2,1,128], index: 12, kind: input, shape index: {}]
  %s13 = inlined_call_operand.vmem [shape: bf16[2,128,32], index: 13, kind: input, shape index: {}]
  %s14 = inlined_call_operand.vmem [shape: f32[2,1,32], index: 14, kind: input, shape index: {}]
  %s15 = inlined_call_operand.vmem [shape: f32[1,32], index: 15, kind: input, shape index: {}]
  %s16 = inlined_call_operand.vmem [shape: f32[1,32], index: 16, kind: input, shape index: {}]
  %s17 = inlined_call_operand.vmem [shape: bf16[32,32], index: 17, kind: input, shape index: {}]
  %s18 = inlined_call_operand.hbm [shape: f32[2,32], index: 18, kind: output, shape index: {}]
  %s19 = sld [smem:[#allocation0]]
  $region82: #{text_encoder.1} parent=0
    _
  %s21 = ssub.s32 1, %s19
  %s22 = scalar_select 0, %s21, %s19
  $region1: #{text_encoder.1} parent=0
    #allocation2 [shape = 'u8[1024]{0}', space=vmem, size = 0x400, scoped, tag = 'output window, operand 0, single buffered']
    #allocation3 [shape = 's32[1]{0}', space=sflag, size = 0x4, scoped, tag = 'scoped memory for text_encoder.1']
    %23 = vsyncpa [#allocation3], 0
    // Predicated region
    $region2: #{text_encoder.1} parent=1 // pred_check
      _
    $region3: #{text_encoder.1} parent=1 // pred_check_branch
      %25 = sbr.rel (0) target = $region5
    $region4: #{text_encoder.1} parent=1 // pred_region
      _
    $region5: #{text_encoder.1} parent=1 // pred_fallthru
      _
    // Predicated region
    $region6: #{text_encoder.1} parent=1 // pred_check
      _
    $region7: #{text_encoder.1} parent=1 // pred_check_branch
      %27 = sbr.rel (0) target = $region9
    $region8: #{text_encoder.1} parent=1 // pred_region
      _
    $region9: #{text_encoder.1} parent=1 // pred_fallthru
      _
    // Predicated region
    $region10: #{text_encoder.1} parent=1 // pred_check
      _
    $region11: #{text_encoder.1} parent=1 // pred_check_branch
      %29 = sbr.rel (0) target = $region13
    $region12: #{text_encoder.1} parent=1 // pred_region
      _
    $region13: #{text_encoder.1} parent=1 // pred_fallthru
      _
    // Predicated region
    $region14: #{text_encoder.1} parent=1 // pred_check
      _
    $region15: #{text_encoder.1} parent=1 // pred_check_branch
      %31 = sbr.rel (0) target = $region17
    $region16: #{text_encoder.1} parent=1 // pred_region
      _
    $region17: #{text_encoder.1} parent=1 // pred_fallthru
      _
    // Predicated region
    $region18: #{text_encoder.1} parent=1 // pred_check
      _
    $region19: #{text_encoder.1} parent=1 // pred_check_branch
      %33 = sbr.rel (0) target = $region21
    $region20: #{text_encoder.1} parent=1 // pred_region
      _
    $region21: #{text_encoder.1} parent=1 // pred_fallthru
      _
    // Predicated region
    $region22: #{text_encoder.1} parent=1 // pred_check
      _
    $region23: #{text_encoder.1} parent=1 // pred_check_branch
      %35 = sbr.rel (0) target = $region25
    $region24: #{text_encoder.1} parent=1 // pred_region
      _
    $region25: #{text_encoder.1} parent=1 // pred_fallthru
      _
    // Predicated region
    $region26: #{text_encoder.1} parent=1 // pred_check
      _
    $region27: #{text_encoder.1} parent=1 // pred_check_branch
      %37 = sbr.rel (0) target = $region29
    $region28: #{text_encoder.1} parent=1 // pred_region
      _
    $region29: #{text_encoder.1} parent=1 // pred_fallthru
      _
    // Predicated region
    $region30: #{text_encoder.1} parent=1 // pred_check
      _
    $region31: #{text_encoder.1} parent=1 // pred_check_branch
      %39 = sbr.rel (0) target = $region33
    $region32: #{text_encoder.1} parent=1 // pred_region
      _
    $region33: #{text_encoder.1} parent=1 // pred_fallthru
      _
    // Predicated region
    $region34: #{text_encoder.1} parent=1 // pred_check
      _
    $region35: #{text_encoder.1} parent=1 // pred_check_branch
      %41 = sbr.rel (0) target = $region37
    $region36: #{text_encoder.1} parent=1 // pred_region
      _
    $region37: #{text_encoder.1} parent=1 // pred_fallthru
      _
    // Predicated region
    $region38: #{text_encoder.1} parent=1 // pred_check
      _
    $region39: #{text_encoder.1} parent=1 // pred_check_branch
      %43 = sbr.rel (0) target = $region41
    $region40: #{text_encoder.1} parent=1 // pred_region
      _
    $region41: #{text_encoder.1} parent=1 // pred_fallthru
      _
    // Predicated region
    $region42: #{text_encoder.1} parent=1 // pred_check
      _
    $region43: #{text_encoder.1} parent=1 // pred_check_branch
      %45 = sbr.rel (0) target = $region45
    $region44: #{text_encoder.1} parent=1 // pred_region
      _
    $region45: #{text_encoder.1} parent=1 // pred_fallthru
      _
    // Predicated region
    $region46: #{text_encoder.1} parent=1 // pred_check
      _
    $region47: #{text_encoder.1} parent=1 // pred_check_branch
      %47 = sbr.rel (0) target = $region49
    $region48: #{text_encoder.1} parent=1 // pred_region
      _
    $region49: #{text_encoder.1} parent=1 // pred_fallthru
      _
    // Predicated region
    $region50: #{text_encoder.1} parent=1 // pred_check
      _
    $region51: #{text_encoder.1} parent=1 // pred_check_branch
      %49 = sbr.rel (0) target = $region53
    $region52: #{text_encoder.1} parent=1 // pred_region
      _
    $region53: #{text_encoder.1} parent=1 // pred_fallthru
      _
    // Predicated region
    $region54: #{text_encoder.1} parent=1 // pred_check
      _
    $region55: #{text_encoder.1} parent=1 // pred_check_branch
      %51 = sbr.rel (0) target = $region57
    $region56: #{text_encoder.1} parent=1 // pred_region
      _
    $region57: #{text_encoder.1} parent=1 // pred_fallthru
      _
    // Predicated region
    $region58: #{text_encoder.1} parent=1 // pred_check
      _
    $region59: #{text_encoder.1} parent=1 // pred_check_branch
      %53 = sbr.rel (0) target = $region61
    $region60: #{text_encoder.1} parent=1 // pred_region
      _
    $region61: #{text_encoder.1} parent=1 // pred_fallthru
      _
    // Predicated region
    $region62: #{text_encoder.1} parent=1 // pred_check
      _
    $region63: #{text_encoder.1} parent=1 // pred_check_branch
      %55 = sbr.rel (0) target = $region65
    $region64: #{text_encoder.1} parent=1 // pred_region
      _
    $region65: #{text_encoder.1} parent=1 // pred_fallthru
      _
    // Predicated region
    $region66: #{text_encoder.1} parent=1 // pred_check
      _
    $region67: #{text_encoder.1} parent=1 // pred_check_branch
      %57 = sbr.rel (0) target = $region69
    $region68: #{text_encoder.1} parent=1 // pred_region
      _
    $region69: #{text_encoder.1} parent=1 // pred_fallthru
      _
    // Predicated region
    $region70: #{text_encoder.1} parent=1 // pred_check
      _
    $region71: #{text_encoder.1} parent=1 // pred_check_branch
      %59 = sbr.rel (0) target = $region73
    $region72: #{text_encoder.1} parent=1 // pred_region
      _
    $region73: #{text_encoder.1} parent=1 // pred_fallthru
      _
    %v61 = vld [vmem:[%s0] sm:$0xff]
    %v62 = vld [vmem:[%s0 + $0x8] sm:$0xff]
    %v63 = vld [vmem:[%s1] sm:$0xff]
    %v64 = vadd.f32 %v61, %v63
    %v65 = vadd.f32 %v62, %v63
    %v66 = vlaneseq
    %v67 = vshrl.u32 %v66, 7
    %v68 = vlaneseq
    %v69 = vand.u32 %v68, 127
    %vm70 = vcmp.ge.s32.totalorder %v67, %v69
    %v71 = vld [vmem:[%s3] sm:$0x1]
    %v72 = vld [vmem:[%s4] sm:$0x1]
    %vm73 = vcmask 261120
    %v74 = vsel %vm73, %v64, 0.0
    %75 = vadd.xlane.f32.xlu0 %v74
    %v76 = vpop.xlane.xlu0 %75
    %v77 = vsel %vm73, %v65, 0.0
    %78 = vadd.xlane.f32.xlu0 %v77
    %v79 = vpop.xlane.xlu0 %78
    %v80 = vrcp.pop 32.0
    %v81 = vmul.f32 %v76, %v80
    %v82 = vmul.f32 %v79, %v80
    %v83 = vsub.f32 %v64, %v81
    %v84 = vsub.f32 %v65, %v82
    %v85 = vmul.f32 %v83, %v83
    %v86 = vmul.f32 %v84, %v84
    %v87 = vsel %vm73, %v85, 0.0
    %88 = vadd.xlane.f32.xlu0 %v87
    %v89 = vpop.xlane.xlu0 %88
    %v90 = vsel %vm73, %v86, 0.0
    %91 = vadd.xlane.f32.xlu0 %v90
    %v92 = vpop.xlane.xlu0 %91
    %v93 = vmul.f32 %v89, %v80
    %v94 = vmul.f32 %v92, %v80
    %v95 = vadd.f32 %v93, 1e-05
    %v96 = vadd.f32 %v94, 1e-05
    %v97 = vrsqrt.pop %v95
    %v98 = vrsqrt.pop %v96
    %v99 = vmul.f32 %v83, %v97
    %v100 = vmul.f32 %v84, %v98
    %v102 = vlaneseq
    %v103 = vshrl.u32 %v102, 7
    %v104 = vsub.s32 0, %v103
    %v105 = vrot.slane %v71, %v104
    %v107 = vmul.f32 %v99, %v105
    %v108 = vmul.f32 %v100, %v105
    %v110 = vlaneseq
    %v111 = vshrl.u32 %v110, 7
    %v112 = vsub.s32 0, %v111
    %v113 = vrot.slane %v72, %v112
    %v115 = vadd.f32 %v107, %v113
    %v116 = vadd.f32 %v108, %v113
    %v117 = vpack.c.bf16 %v116, %v115
    %v118 = vld [vmem:[%s5] sm:$0xf]
    %v119 = vld [vmem:[%s5 + $0x4] sm:$0xf]
    %v120 = vld [vmem:[%s5 + $0x8] sm:$0xf]
    %v121 = vld [vmem:[%s5 + $0xc] sm:$0xf]
    %v122 = vld [vmem:[%s6] sm:$0x1]
    %v124 = vlaneseq
    %v125 = vshrl.u32 %v124, 7
    %v126 = vsub.s32 0, %v125
    %v127 = vrot.slane %v122, %v126
    %v133 = vunpack.c.l.b16 %v118
    %v134 = vunpack.c.l.b16 %v119
    %v135 = vunpack.c.l.b16 %v120
    %v136 = vunpack.c.l.b16 %v121
    %v137 = vpack.c.b16 %v134, %v133
    %v138 = vpack.c.b16 %v136, %v135
    %v142 = vsel %vm73, %v117, 0
    %144 = vmatprep.subr.bf16.mxu0 0
    %145 = vmatpush1.bf16.msra.mxu0 0
    %146 = vmatprep.subr.bf16.mxu0 0
    %147 = vmatpush1.bf16.msra.mxu0 0
    %148 = vmatprep.subr.bf16.mxu0 0
    %149 = vmatpush1.bf16.msra.mxu0 0
    %150 = vmatprep.subr.bf16.mxu0 0
    %151 = vmatpush1.bf16.msra.mxu0 0
    %152 = vmatprep.subr.bf16.mxu0 0
    %153 = vmatpush1.bf16.msra.mxu0 0
    %154 = vmatprep.subr.bf16.mxu0 0
    %155 = vmatpush1.bf16.msra.mxu0 0
    %156 = vmatprep.subr.bf16.mxu0 0
    %157 = vmatpush1.bf16.msra.mxu0 %v138
    %158 = vmatprep.subr.bf16.mxu0 0
    %159 = vmatpush1.bf16.msra.mxu0 %v137
    %160 = vmatprep.subr.bf16.mxu0 0
    %161 = vmatpush2.bf16.msra.mxu0 0
    %162 = vmatprep.subr.bf16.mxu0 0
    %163 = vmatpush2.bf16.msra.mxu0 0
    %164 = vmatprep.subr.bf16.mxu0 0
    %165 = vmatpush2.bf16.msra.mxu0 0
    %166 = vmatprep.subr.bf16.mxu0 0
    %167 = vmatpush2.bf16.msra.mxu0 0
    %168 = vmatprep.subr.bf16.mxu0 0
    %169 = vmatpush2.bf16.msra.mxu0 0
    %170 = vmatprep.subr.bf16.mxu0 0
    %171 = vmatpush2.bf16.msra.mxu0 0
    %172 = vmatprep.subr.bf16.mxu0 0
    %173 = vmatpush2.bf16.msra.mxu0 0
    %174 = vmatprep.subr.bf16.mxu0 0
    %175 = vmatpush2.bf16.msra.mxu0 0
    %176 = vmatprep.mubr.bf16.mxu0 0
    %177 = vmatmul.mubr.bf16.gmra.mxu0 %v142
    %v178 = vpop.f32.mrf.mxu0
    %v179 = vadd.f32 %v127, %v178
    %v180 = vpop.f32.mrf.mxu0
    %v181 = vpop.f32.mrf.mxu0
    %v182 = vadd.f32 %v127, %v181
    %v183 = vpop.f32.mrf.mxu0
    %184 = vdwg.mxu0
    %v185 = vmul.f32 %v179, 0.35355338
    %v186 = vmul.f32 %v182, 0.35355338
    %v187 = vpack.c.bf16 %v185, %v185
    %v188 = vpack.c.bf16 %v186, %v186
    %v189 = vpack.c.bf16 %v179, %v179
    %v190 = vpack.c.bf16 %v182, %v182
    %192 = vrot.lane.b32.xlu0 %v189, 96
    %v193 = vpop.permute.xlu0 %192
    %vm194 = vcmask 64512
    %v196 = vsel %vm194, %v187, 0
    %v199 = vsel %vm194, %v193, 0
    %201 = vmatprep.subr.bf16.mxu0 0
    %202 = vmatpush1.bf16.xpose.msra.mxu0 0
    %203 = vmatprep.subr.bf16.mxu0 0
    %204 = vmatpush1.bf16.xpose.msra.mxu0 0
    %205 = vmatprep.subr.bf16.mxu0 0
    %206 = vmatpush1.bf16.xpose.msra.mxu0 0
    %207 = vmatprep.subr.bf16.mxu0 0
    %208 = vmatpush1.bf16.xpose.msra.mxu0 0
    %209 = vmatprep.subr.bf16.mxu0 0
    %210 = vmatpush1.bf16.xpose.msra.mxu0 0
    %211 = vmatprep.subr.bf16.mxu0 0
    %212 = vmatpush1.bf16.xpose.msra.mxu0 0
    %213 = vmatprep.subr.bf16.mxu0 0
    %214 = vmatpush1.bf16.xpose.msra.mxu0 0
    %215 = vmatprep.subr.bf16.mxu0 0
    %216 = vmatpush1.bf16.xpose.msra.mxu0 %v199
    %217 = vmatprep.subr.bf16.mxu0 0
    %218 = vmatpush2.bf16.xpose.msra.mxu0 0
    %219 = vmatprep.subr.bf16.mxu0 0
    %220 = vmatpush2.bf16.xpose.msra.mxu0 0
    %221 = vmatprep.subr.bf16.mxu0 0
    %222 = vmatpush2.bf16.xpose.msra.mxu0 0
    %223 = vmatprep.subr.bf16.mxu0 0
    %224 = vmatpush2.bf16.xpose.msra.mxu0 0
    %225 = vmatprep.subr.bf16.mxu0 0
    %226 = vmatpush2.bf16.xpose.msra.mxu0 0
    %227 = vmatprep.subr.bf16.mxu0 0
    %228 = vmatpush2.bf16.xpose.msra.mxu0 0
    %229 = vmatprep.subr.bf16.mxu0 0
    %230 = vmatpush2.bf16.xpose.msra.mxu0 0
    %231 = vmatprep.subr.bf16.mxu0 0
    %232 = vmatpush2.bf16.xpose.msra.mxu0 0
    %233 = vmatprep.mubr.bf16.mxu0 0
    %234 = vmatmul.mubr.bf16.gmra.mxu0 %v196
    %v235 = vpop.f32.mrf.mxu0
    %v236 = vadd.f32 0.0, %v235
    %v237 = vpop.f32.mrf.mxu0
    %v238 = vpop.f32.mrf.mxu0
    %v239 = vpop.f32.mrf.mxu0
    %240 = vdwg.mxu0
    %242 = vrot.lane.b32.xlu0 %v190, 96
    %v243 = vpop.permute.xlu0 %242
    %v245 = vsel %vm194, %v188, 0
    %v248 = vsel %vm194, %v243, 0
    %250 = vmatprep.subr.bf16.mxu0 0
    %251 = vmatpush1.bf16.xpose.msra.mxu0 0
    %252 = vmatprep.subr.bf16.mxu0 0
    %253 = vmatpush1.bf16.xpose.msra.mxu0 0
    %254 = vmatprep.subr.bf16.mxu0 0
    %255 = vmatpush1.bf16.xpose.msra.mxu0 0
    %256 = vmatprep.subr.bf16.mxu0 0
    %257 = vmatpush1.bf16.xpose.msra.mxu0 0
    %258 = vmatprep.subr.bf16.mxu0 0
    %259 = vmatpush1.bf16.xpose.msra.mxu0 0
    %260 = vmatprep.subr.bf16.mxu0 0
    %261 = vmatpush1.bf16.xpose.msra.mxu0 0
    %262 = vmatprep.subr.bf16.mxu0 0
    %263 = vmatpush1.bf16.xpose.msra.mxu0 0
    %264 = vmatprep.subr.bf16.mxu0 0
    %265 = vmatpush1.bf16.xpose.msra.mxu0 %v248
    %266 = vmatprep.subr.bf16.mxu0 0
    %267 = vmatpush2.bf16.xpose.msra.mxu0 0
    %268 = vmatprep.subr.bf16.mxu0 0
    %269 = vmatpush2.bf16.xpose.msra.mxu0 0
    %270 = vmatprep.subr.bf16.mxu0 0
    %271 = vmatpush2.bf16.xpose.msra.mxu0 0
    %272 = vmatprep.subr.bf16.mxu0 0
    %273 = vmatpush2.bf16.xpose.msra.mxu0 0
    %274 = vmatprep.subr.bf16.mxu0 0
    %275 = vmatpush2.bf16.xpose.msra.mxu0 0
    %276 = vmatprep.subr.bf16.mxu0 0
    %277 = vmatpush2.bf16.xpose.msra.mxu0 0
    %278 = vmatprep.subr.bf16.mxu0 0
    %279 = vmatpush2.bf16.xpose.msra.mxu0 0
    %280 = vmatprep.subr.bf16.mxu0 0
    %281 = vmatpush2.bf16.xpose.msra.mxu0 0
    %282 = vmatprep.mubr.bf16.mxu0 0
    %283 = vmatmul.mubr.bf16.gmra.mxu0 %v245
    %v284 = vpop.f32.mrf.mxu0
    %v285 = vadd.f32 0.0, %v284
    %v286 = vpop.f32.mrf.mxu0
    %v287 = vpop.f32.mrf.mxu0
    %v288 = vpop.f32.mrf.mxu0
    %289 = vdwg.mxu0
    %v290 = vsel %vm70, %v236, -1e+30
    %v291 = vsel %vm70, %v285, -1e+30
    %v292 = vsel %vm194, %v290, -inf
    %293 = vmax.xlane.f32.xlu0 %v292
    %v294 = vpop.xlane.xlu0 %293
    %v295 = vsel %vm194, %v291, -inf
    %296 = vmax.xlane.f32.xlu0 %v295
    %v297 = vpop.xlane.xlu0 %296
    %v298 = vsub.f32 %v290, %v294
    %v299 = vsub.f32 %v291, %v297
    %v300 = vmul.f32 %v298, 1.442695
    %v301 = vpow.pop %v300
    %v302 = vmul.f32 %v299, 1.442695
    %v303 = vpow.pop %v302
    %v304 = vsel %vm194, %v301, 0.0
    %305 = vadd.xlane.f32.xlu0 %v304
    %v306 = vpop.xlane.xlu0 %305
    %v307 = vsel %vm194, %v303, 0.0
    %308 = vadd.xlane.f32.xlu0 %v307
    %v309 = vpop.xlane.xlu0 %308
    %v310 = vrcp.pop %v306
    %v311 = vrcp.pop %v309
    %v312 = vmul.f32 %v301, %v310
    %v313 = vmul.f32 %v303, %v311
    %v314 = vpack.c.bf16 %v312, %v312
    %v315 = vpack.c.bf16 %v313, %v313
    %316 = vrot.lane.b32.xlu0 %v189, 64
    %v317 = vpop.permute.xlu0 %316
    %v319 = vsel %vm194, %v314, 0
    %vm321 = vcmask 1043456
    %v323 = vsel %vm321, %v317, 0
    %325 = vmatprep.subr.bf16.mxu0 0
    %326 = vmatpush1.bf16.msra.mxu0 0
    %327 = vmatprep.subr.bf16.mxu0 0
    %328 = vmatpush1.bf16.msra.mxu0 0
    %329 = vmatprep.subr.bf16.mxu0 0
    %330 = vmatpush1.bf16.msra.mxu0 0
    %331 = vmatprep.subr.bf16.mxu0 0
    %332 = vmatpush1.bf16.msra.mxu0 0
    %333 = vmatprep.subr.bf16.mxu0 0
    %334 = vmatpush1.bf16.msra.mxu0 0
    %335 = vmatprep.subr.bf16.mxu0 0
    %336 = vmatpush1.bf16.msra.mxu0 0
    %337 = vmatprep.subr.bf16.mxu0 0
    %338 = vmatpush1.bf16.msra.mxu0 0
    %339 = vmatprep.subr.bf16.mxu0 0
    %340 = vmatpush1.bf16.msra.mxu0 %v323
    %341 = vmatprep.subr.bf16.mxu0 0
    %342 = vmatpush2.bf16.msra.mxu0 0
    %343 = vmatprep.subr.bf16.mxu0 0
    %344 = vmatpush2.bf16.msra.mxu0 0
    %345 = vmatprep.subr.bf16.mxu0 0
    %346 = vmatpush2.bf16.msra.mxu0 0
    %347 = vmatprep.subr.bf16.mxu0 0
    %348 = vmatpush2.bf16.msra.mxu0 0
    %349 = vmatprep.subr.bf16.mxu0 0
    %350 = vmatpush2.bf16.msra.mxu0 0
    %351 = vmatprep.subr.bf16.mxu0 0
    %352 = vmatpush2.bf16.msra.mxu0 0
    %353 = vmatprep.subr.bf16.mxu0 0
    %354 = vmatpush2.bf16.msra.mxu0 0
    %355 = vmatprep.subr.bf16.mxu0 0
    %356 = vmatpush2.bf16.msra.mxu0 0
    %357 = vmatprep.mubr.bf16.mxu0 0
    %358 = vmatmul.mubr.bf16.gmra.mxu0 %v319
    %v359 = vpop.f32.mrf.mxu0
    %v360 = vadd.f32 0.0, %v359
    %v361 = vpop.f32.mrf.mxu0
    %v362 = vpop.f32.mrf.mxu0
    %v363 = vpop.f32.mrf.mxu0
    %364 = vdwg.mxu0
    %365 = vrot.lane.b32.xlu0 %v190, 64
    %v366 = vpop.permute.xlu0 %365
    %v368 = vsel %vm194, %v315, 0
    %v371 = vsel %vm321, %v366, 0
    %373 = vmatprep.subr.bf16.mxu0 0
    %374 = vmatpush1.bf16.msra.mxu0 0
    %375 = vmatprep.subr.bf16.mxu0 0
    %376 = vmatpush1.bf16.msra.mxu0 0
    %377 = vmatprep.subr.bf16.mxu0 0
    %378 = vmatpush1.bf16.msra.mxu0 0
    %379 = vmatprep.subr.bf16.mxu0 0
    %380 = vmatpush1.bf16.msra.mxu0 0
    %381 = vmatprep.subr.bf16.mxu0 0
    %382 = vmatpush1.bf16.msra.mxu0 0
    %383 = vmatprep.subr.bf16.mxu0 0
    %384 = vmatpush1.bf16.msra.mxu0 0
    %385 = vmatprep.subr.bf16.mxu0 0
    %386 = vmatpush1.bf16.msra.mxu0 0
    %387 = vmatprep.subr.bf16.mxu0 0
    %388 = vmatpush1.bf16.msra.mxu0 %v371
    %389 = vmatprep.subr.bf16.mxu0 0
    %390 = vmatpush2.bf16.msra.mxu0 0
    %391 = vmatprep.subr.bf16.mxu0 0
    %392 = vmatpush2.bf16.msra.mxu0 0
    %393 = vmatprep.subr.bf16.mxu0 0
    %394 = vmatpush2.bf16.msra.mxu0 0
    %395 = vmatprep.subr.bf16.mxu0 0
    %396 = vmatpush2.bf16.msra.mxu0 0
    %397 = vmatprep.subr.bf16.mxu0 0
    %398 = vmatpush2.bf16.msra.mxu0 0
    %399 = vmatprep.subr.bf16.mxu0 0
    %400 = vmatpush2.bf16.msra.mxu0 0
    %401 = vmatprep.subr.bf16.mxu0 0
    %402 = vmatpush2.bf16.msra.mxu0 0
    %403 = vmatprep.subr.bf16.mxu0 0
    %404 = vmatpush2.bf16.msra.mxu0 0
    %405 = vmatprep.mubr.bf16.mxu0 0
    %406 = vmatmul.mubr.bf16.gmra.mxu0 %v368
    %v407 = vpop.f32.mrf.mxu0
    %v408 = vadd.f32 0.0, %v407
    %v409 = vpop.f32.mrf.mxu0
    %v410 = vpop.f32.mrf.mxu0
    %v411 = vpop.f32.mrf.mxu0
    %412 = vdwg.mxu0
    %414 = vrot.lane.b32.xlu0 %v187, 120
    %v415 = vpop.permute.xlu0 %414
    %416 = vrot.lane.b32.xlu0 %v189, 88
    %v417 = vpop.permute.xlu0 %416
    %v419 = vsel %vm194, %v415, 0
    %v422 = vsel %vm194, %v417, 0
    %424 = vmatprep.subr.bf16.mxu0 0
    %425 = vmatpush1.bf16.xpose.msra.mxu0 0
    %426 = vmatprep.subr.bf16.mxu0 0
    %427 = vmatpush1.bf16.xpose.msra.mxu0 0
    %428 = vmatprep.subr.bf16.mxu0 0
    %429 = vmatpush1.bf16.xpose.msra.mxu0 0
    %430 = vmatprep.subr.bf16.mxu0 0
    %431 = vmatpush1.bf16.xpose.msra.mxu0 0
    %432 = vmatprep.subr.bf16.mxu0 0
    %433 = vmatpush1.bf16.xpose.msra.mxu0 0
    %434 = vmatprep.subr.bf16.mxu0 0
    %435 = vmatpush1.bf16.xpose.msra.mxu0 0
    %436 = vmatprep.subr.bf16.mxu0 0
    %437 = vmatpush1.bf16.xpose.msra.mxu0 0
    %438 = vmatprep.subr.bf16.mxu0 0
    %439 = vmatpush1.bf16.xpose.msra.mxu0 %v422
    %440 = vmatprep.subr.bf16.mxu0 0
    %441 = vmatpush2.bf16.xpose.msra.mxu0 0
    %442 = vmatprep.subr.bf16.mxu0 0
    %443 = vmatpush2.bf16.xpose.msra.mxu0 0
    %444 = vmatprep.subr.bf16.mxu0 0
    %445 = vmatpush2.bf16.xpose.msra.mxu0 0
    %446 = vmatprep.subr.bf16.mxu0 0
    %447 = vmatpush2.bf16.xpose.msra.mxu0 0
    %448 = vmatprep.subr.bf16.mxu0 0
    %449 = vmatpush2.bf16.xpose.msra.mxu0 0
    %450 = vmatprep.subr.bf16.mxu0 0
    %451 = vmatpush2.bf16.xpose.msra.mxu0 0
    %452 = vmatprep.subr.bf16.mxu0 0
    %453 = vmatpush2.bf16.xpose.msra.mxu0 0
    %454 = vmatprep.subr.bf16.mxu0 0
    %455 = vmatpush2.bf16.xpose.msra.mxu0 0
    %456 = vmatprep.mubr.bf16.mxu0 0
    %457 = vmatmul.mubr.bf16.gmra.mxu0 %v419
    %v458 = vpop.f32.mrf.mxu0
    %v459 = vadd.f32 0.0, %v458
    %v460 = vpop.f32.mrf.mxu0
    %v461 = vpop.f32.mrf.mxu0
    %v462 = vpop.f32.mrf.mxu0
    %463 = vdwg.mxu0
    %465 = vrot.lane.b32.xlu0 %v188, 120
    %v466 = vpop.permute.xlu0 %465
    %467 = vrot.lane.b32.xlu0 %v190, 88
    %v468 = vpop.permute.xlu0 %467
    %v470 = vsel %vm194, %v466, 0
    %v473 = vsel %vm194, %v468, 0
    %475 = vmatprep.subr.bf16.mxu0 0
    %476 = vmatpush1.bf16.xpose.msra.mxu0 0
    %477 = vmatprep.subr.bf16.mxu0 0
    %478 = vmatpush1.bf16.xpose.msra.mxu0 0
    %479 = vmatprep.subr.bf16.mxu0 0
    %480 = vmatpush1.bf16.xpose.msra.mxu0 0
    %481 = vmatprep.subr.bf16.mxu0 0
    %482 = vmatpush1.bf16.xpose.msra.mxu0 0
    %483 = vmatprep.subr.bf16.mxu0 0
    %484 = vmatpush1.bf16.xpose.msra.mxu0 0
    %485 = vmatprep.subr.bf16.mxu0 0
    %486 = vmatpush1.bf16.xpose.msra.mxu0 0
    %487 = vmatprep.subr.bf16.mxu0 0
    %488 = vmatpush1.bf16.xpose.msra.mxu0 0
    %489 = vmatprep.subr.bf16.mxu0 0
    %490 = vmatpush1.bf16.xpose.msra.mxu0 %v473
    %491 = vmatprep.subr.bf16.mxu0 0
    %492 = vmatpush2.bf16.xpose.msra.mxu0 0
    %493 = vmatprep.subr.bf16.mxu0 0
    %494 = vmatpush2.bf16.xpose.msra.mxu0 0
    %495 = vmatprep.subr.bf16.mxu0 0
    %496 = vmatpush2.bf16.xpose.msra.mxu0 0
    %497 = vmatprep.subr.bf16.mxu0 0
    %498 = vmatpush2.bf16.xpose.msra.mxu0 0
    %499 = vmatprep.subr.bf16.mxu0 0
    %500 = vmatpush2.bf16.xpose.msra.mxu0 0
    %501 = vmatprep.subr.bf16.mxu0 0
    %502 = vmatpush2.bf16.xpose.msra.mxu0 0
    %503 = vmatprep.subr.bf16.mxu0 0
    %504 = vmatpush2.bf16.xpose.msra.mxu0 0
    %505 = vmatprep.subr.bf16.mxu0 0
    %506 = vmatpush2.bf16.xpose.msra.mxu0 0
    %507 = vmatprep.mubr.bf16.mxu0 0
    %508 = vmatmul.mubr.bf16.gmra.mxu0 %v470
    %v509 = vpop.f32.mrf.mxu0
    %v510 = vadd.f32 0.0, %v509
    %v511 = vpop.f32.mrf.mxu0
    %v512 = vpop.f32.mrf.mxu0
    %v513 = vpop.f32.mrf.mxu0
    %514 = vdwg.mxu0
    %v515 = vsel %vm70, %v459, -1e+30
    %v516 = vsel %vm70, %v510, -1e+30
    %v517 = vsel %vm194, %v515, -inf
    %518 = vmax.xlane.f32.xlu0 %v517
    %v519 = vpop.xlane.xlu0 %518
    %v520 = vsel %vm194, %v516, -inf
    %521 = vmax.xlane.f32.xlu0 %v520
    %v522 = vpop.xlane.xlu0 %521
    %v523 = vsub.f32 %v515, %v519
    %v524 = vsub.f32 %v516, %v522
    %v525 = vmul.f32 %v523, 1.442695
    %v526 = vpow.pop %v525
    %v527 = vmul.f32 %v524, 1.442695
    %v528 = vpow.pop %v527
    %v529 = vsel %vm194, %v526, 0.0
    %530 = vadd.xlane.f32.xlu0 %v529
    %v531 = vpop.xlane.xlu0 %530
    %v532 = vsel %vm194, %v528, 0.0
    %533 = vadd.xlane.f32.xlu0 %v532
    %v534 = vpop.xlane.xlu0 %533
    %v535 = vrcp.pop %v531
    %v536 = vrcp.pop %v534
    %v537 = vmul.f32 %v526, %v535
    %v538 = vmul.f32 %v528, %v536
    %v539 = vpack.c.bf16 %v537, %v537
    %v540 = vpack.c.bf16 %v538, %v538
    %541 = vrot.lane.b32.xlu0 %v189, 56
    %v542 = vpop.permute.xlu0 %541
    %v544 = vsel %vm194, %v539, 0
    %v547 = vsel %vm321, %v542, 0
    %549 = vmatprep.subr.bf16.mxu0 0
    %550 = vmatpush1.bf16.msra.mxu0 0
    %551 = vmatprep.subr.bf16.mxu0 0
    %552 = vmatpush1.bf16.msra.mxu0 0
    %553 = vmatprep.subr.bf16.mxu0 0
    %554 = vmatpush1.bf16.msra.mxu0 0
    %555 = vmatprep.subr.bf16.mxu0 0
    %556 = vmatpush1.bf16.msra.mxu0 0
    %557 = vmatprep.subr.bf16.mxu0 0
    %558 = vmatpush1.bf16.msra.mxu0 0
    %559 = vmatprep.subr.bf16.mxu0 0
    %560 = vmatpush1.bf16.msra.mxu0 0
    %561 = vmatprep.subr.bf16.mxu0 0
    %562 = vmatpush1.bf16.msra.mxu0 0
    %563 = vmatprep.subr.bf16.mxu0 0
    %564 = vmatpush1.bf16.msra.mxu0 %v547
    %565 = vmatprep.subr.bf16.mxu0 0
    %566 = vmatpush2.bf16.msra.mxu0 0
    %567 = vmatprep.subr.bf16.mxu0 0
    %568 = vmatpush2.bf16.msra.mxu0 0
    %569 = vmatprep.subr.bf16.mxu0 0
    %570 = vmatpush2.bf16.msra.mxu0 0
    %571 = vmatprep.subr.bf16.mxu0 0
    %572 = vmatpush2.bf16.msra.mxu0 0
    %573 = vmatprep.subr.bf16.mxu0 0
    %574 = vmatpush2.bf16.msra.mxu0 0
    %575 = vmatprep.subr.bf16.mxu0 0
    %576 = vmatpush2.bf16.msra.mxu0 0
    %577 = vmatprep.subr.bf16.mxu0 0
    %578 = vmatpush2.bf16.msra.mxu0 0
    %579 = vmatprep.subr.bf16.mxu0 0
    %580 = vmatpush2.bf16.msra.mxu0 0
    %581 = vmatprep.mubr.bf16.mxu0 0
    %582 = vmatmul.mubr.bf16.gmra.mxu0 %v544
    %v583 = vpop.f32.mrf.mxu0
    %v584 = vadd.f32 0.0, %v583
    %v585 = vpop.f32.mrf.mxu0
    %v586 = vpop.f32.mrf.mxu0
    %v587 = vpop.f32.mrf.mxu0
    %588 = vdwg.mxu0
    %589 = vrot.lane.b32.xlu0 %v190, 56
    %v590 = vpop.permute.xlu0 %589
    %v592 = vsel %vm194, %v540, 0
    %v595 = vsel %vm321, %v590, 0
    %597 = vmatprep.subr.bf16.mxu0 0
    %598 = vmatpush1.bf16.msra.mxu0 0
    %599 = vmatprep.subr.bf16.mxu0 0
    %600 = vmatpush1.bf16.msra.mxu0 0
    %601 = vmatprep.subr.bf16.mxu0 0
    %602 = vmatpush1.bf16.msra.mxu0 0
    %603 = vmatprep.subr.bf16.mxu0 0
    %604 = vmatpush1.bf16.msra.mxu0 0
    %605 = vmatprep.subr.bf16.mxu0 0
    %606 = vmatpush1.bf16.msra.mxu0 0
    %607 = vmatprep.subr.bf16.mxu0 0
    %608 = vmatpush1.bf16.msra.mxu0 0
    %609 = vmatprep.subr.bf16.mxu0 0
    %610 = vmatpush1.bf16.msra.mxu0 0
    %611 = vmatprep.subr.bf16.mxu0 0
    %612 = vmatpush1.bf16.msra.mxu0 %v595
    %613 = vmatprep.subr.bf16.mxu0 0
    %614 = vmatpush2.bf16.msra.mxu0 0
    %615 = vmatprep.subr.bf16.mxu0 0
    %616 = vmatpush2.bf16.msra.mxu0 0
    %617 = vmatprep.subr.bf16.mxu0 0
    %618 = vmatpush2.bf16.msra.mxu0 0
    %619 = vmatprep.subr.bf16.mxu0 0
    %620 = vmatpush2.bf16.msra.mxu0 0
    %621 = vmatprep.subr.bf16.mxu0 0
    %622 = vmatpush2.bf16.msra.mxu0 0
    %623 = vmatprep.subr.bf16.mxu0 0
    %624 = vmatpush2.bf16.msra.mxu0 0
    %625 = vmatprep.subr.bf16.mxu0 0
    %626 = vmatpush2.bf16.msra.mxu0 0
    %627 = vmatprep.subr.bf16.mxu0 0
    %628 = vmatpush2.bf16.msra.mxu0 0
    %629 = vmatprep.mubr.bf16.mxu0 0
    %630 = vmatmul.mubr.bf16.gmra.mxu0 %v592
    %v631 = vpop.f32.mrf.mxu0
    %v632 = vadd.f32 0.0, %v631
    %v633 = vpop.f32.mrf.mxu0
    %v634 = vpop.f32.mrf.mxu0
    %v635 = vpop.f32.mrf.mxu0
    %636 = vdwg.mxu0
    %637 = vrot.lane.b32.xlu0 %v187, 112
    %v638 = vpop.permute.xlu0 %637
    %639 = vrot.lane.b32.xlu0 %v189, 80
    %v640 = vpop.permute.xlu0 %639
    %v642 = vsel %vm194, %v638, 0
    %v645 = vsel %vm194, %v640, 0
    %647 = vmatprep.subr.bf16.mxu0 0
    %648 = vmatpush1.bf16.xpose.msra.mxu0 0
    %649 = vmatprep.subr.bf16.mxu0 0
    %650 = vmatpush1.bf16.xpose.msra.mxu0 0
    %651 = vmatprep.subr.bf16.mxu0 0
    %652 = vmatpush1.bf16.xpose.msra.mxu0 0
    %653 = vmatprep.subr.bf16.mxu0 0
    %654 = vmatpush1.bf16.xpose.msra.mxu0 0
    %655 = vmatprep.subr.bf16.mxu0 0
    %656 = vmatpush1.bf16.xpose.msra.mxu0 0
    %657 = vmatprep.subr.bf16.mxu0 0
    %658 = vmatpush1.bf16.xpose.msra.mxu0 0
    %659 = vmatprep.subr.bf16.mxu0 0
    %660 = vmatpush1.bf16.xpose.msra.mxu0 0
    %661 = vmatprep.subr.bf16.mxu0 0
    %662 = vmatpush1.bf16.xpose.msra.mxu0 %v645
    %663 = vmatprep.subr.bf16.mxu0 0
    %664 = vmatpush2.bf16.xpose.msra.mxu0 0
    %665 = vmatprep.subr.bf16.mxu0 0
    %666 = vmatpush2.bf16.xpose.msra.mxu0 0
    %667 = vmatprep.subr.bf16.mxu0 0
    %668 = vmatpush2.bf16.xpose.msra.mxu0 0
    %669 = vmatprep.subr.bf16.mxu0 0
    %670 = vmatpush2.bf16.xpose.msra.mxu0 0
    %671 = vmatprep.subr.bf16.mxu0 0
    %672 = vmatpush2.bf16.xpose.msra.mxu0 0
    %673 = vmatprep.subr.bf16.mxu0 0
    %674 = vmatpush2.bf16.xpose.msra.mxu0 0
    %675 = vmatprep.subr.bf16.mxu0 0
    %676 = vmatpush2.bf16.xpose.msra.mxu0 0
    %677 = vmatprep.subr.bf16.mxu0 0
    %678 = vmatpush2.bf16.xpose.msra.mxu0 0
    %679 = vmatprep.mubr.bf16.mxu0 0
    %680 = vmatmul.mubr.bf16.gmra.mxu0 %v642
    %v681 = vpop.f32.mrf.mxu0
    %v682 = vadd.f32 0.0, %v681
    %v683 = vpop.f32.mrf.mxu0
    %v684 = vpop.f32.mrf.mxu0
    %v685 = vpop.f32.mrf.mxu0
    %686 = vdwg.mxu0
    %687 = vrot.lane.b32.xlu0 %v188, 112
    %v688 = vpop.permute.xlu0 %687
    %689 = vrot.lane.b32.xlu0 %v190, 80
    %v690 = vpop.permute.xlu0 %689
    %v692 = vsel %vm194, %v688, 0
    %v695 = vsel %vm194, %v690, 0
    %697 = vmatprep.subr.bf16.mxu0 0
    %698 = vmatpush1.bf16.xpose.msra.mxu0 0
    %699 = vmatprep.subr.bf16.mxu0 0
    %700 = vmatpush1.bf16.xpose.msra.mxu0 0
    %701 = vmatprep.subr.bf16.mxu0 0
    %702 = vmatpush1.bf16.xpose.msra.mxu0 0
    %703 = vmatprep.subr.bf16.mxu0 0
    %704 = vmatpush1.bf16.xpose.msra.mxu0 0
    %705 = vmatprep.subr.bf16.mxu0 0
    %706 = vmatpush1.bf16.xpose.msra.mxu0 0
    %707 = vmatprep.subr.bf16.mxu0 0
    %708 = vmatpush1.bf16.xpose.msra.mxu0 0
    %709 = vmatprep.subr.bf16.mxu0 0
    %710 = vmatpush1.bf16.xpose.msra.mxu0 0
    %711 = vmatprep.subr.bf16.mxu0 0
    %712 = vmatpush1.bf16.xpose.msra.mxu0 %v695
    %713 = vmatprep.subr.bf16.mxu0 0
    %714 = vmatpush2.bf16.xpose.msra.mxu0 0
    %715 = vmatprep.subr.bf16.mxu0 0
    %716 = vmatpush2.bf16.xpose.msra.mxu0 0
    %717 = vmatprep.subr.bf16.mxu0 0
    %718 = vmatpush2.bf16.xpose.msra.mxu0 0
    %719 = vmatprep.subr.bf16.mxu0 0
    %720 = vmatpush2.bf16.xpose.msra.mxu0 0
    %721 = vmatprep.subr.bf16.mxu0 0
    %722 = vmatpush2.bf16.xpose.msra.mxu0 0
    %723 = vmatprep.subr.bf16.mxu0 0
    %724 = vmatpush2.bf16.xpose.msra.mxu0 0
    %725 = vmatprep.subr.bf16.mxu0 0
    %726 = vmatpush2.bf16.xpose.msra.mxu0 0
    %727 = vmatprep.subr.bf16.mxu0 0
    %728 = vmatpush2.bf16.xpose.msra.mxu0 0
    %729 = vmatprep.mubr.bf16.mxu0 0
    %730 = vmatmul.mubr.bf16.gmra.mxu0 %v692
    %v731 = vpop.f32.mrf.mxu0
    %v732 = vadd.f32 0.0, %v731
    %v733 = vpop.f32.mrf.mxu0
    %v734 = vpop.f32.mrf.mxu0
    %v735 = vpop.f32.mrf.mxu0
    %736 = vdwg.mxu0
    %v737 = vsel %vm70, %v682, -1e+30
    %v738 = vsel %vm70, %v732, -1e+30
    %v739 = vsel %vm194, %v737, -inf
    %740 = vmax.xlane.f32.xlu0 %v739
    %v741 = vpop.xlane.xlu0 %740
    %v742 = vsel %vm194, %v738, -inf
    %743 = vmax.xlane.f32.xlu0 %v742
    %v744 = vpop.xlane.xlu0 %743
    %v745 = vsub.f32 %v737, %v741
    %v746 = vsub.f32 %v738, %v744
    %v747 = vmul.f32 %v745, 1.442695
    %v748 = vpow.pop %v747
    %v749 = vmul.f32 %v746, 1.442695
    %v750 = vpow.pop %v749
    %v751 = vsel %vm194, %v748, 0.0
    %752 = vadd.xlane.f32.xlu0 %v751
    %v753 = vpop.xlane.xlu0 %752
    %v754 = vsel %vm194, %v750, 0.0
    %755 = vadd.xlane.f32.xlu0 %v754
    %v756 = vpop.xlane.xlu0 %755
    %v757 = vrcp.pop %v753
    %v758 = vrcp.pop %v756
    %v759 = vmul.f32 %v748, %v757
    %v760 = vmul.f32 %v750, %v758
    %v761 = vpack.c.bf16 %v759, %v759
    %v762 = vpack.c.bf16 %v760, %v760
    %763 = vrot.lane.b32.xlu0 %v189, 48
    %v764 = vpop.permute.xlu0 %763
    %v766 = vsel %vm194, %v761, 0
    %v769 = vsel %vm321, %v764, 0
    %771 = vmatprep.subr.bf16.mxu0 0
    %772 = vmatpush1.bf16.msra.mxu0 0
    %773 = vmatprep.subr.bf16.mxu0 0
    %774 = vmatpush1.bf16.msra.mxu0 0
    %775 = vmatprep.subr.bf16.mxu0 0
    %776 = vmatpush1.bf16.msra.mxu0 0
    %777 = vmatprep.subr.bf16.mxu0 0
    %778 = vmatpush1.bf16.msra.mxu0 0
    %779 = vmatprep.subr.bf16.mxu0 0
    %780 = vmatpush1.bf16.msra.mxu0 0
    %781 = vmatprep.subr.bf16.mxu0 0
    %782 = vmatpush1.bf16.msra.mxu0 0
    %783 = vmatprep.subr.bf16.mxu0 0
    %784 = vmatpush1.bf16.msra.mxu0 0
    %785 = vmatprep.subr.bf16.mxu0 0
    %786 = vmatpush1.bf16.msra.mxu0 %v769
    %787 = vmatprep.subr.bf16.mxu0 0
    %788 = vmatpush2.bf16.msra.mxu0 0
    %789 = vmatprep.subr.bf16.mxu0 0
    %790 = vmatpush2.bf16.msra.mxu0 0
    %791 = vmatprep.subr.bf16.mxu0 0
    %792 = vmatpush2.bf16.msra.mxu0 0
    %793 = vmatprep.subr.bf16.mxu0 0
    %794 = vmatpush2.bf16.msra.mxu0 0
    %795 = vmatprep.subr.bf16.mxu0 0
    %796 = vmatpush2.bf16.msra.mxu0 0
    %797 = vmatprep.subr.bf16.mxu0 0
    %798 = vmatpush2.bf16.msra.mxu0 0
    %799 = vmatprep.subr.bf16.mxu0 0
    %800 = vmatpush2.bf16.msra.mxu0 0
    %801 = vmatprep.subr.bf16.mxu0 0
    %802 = vmatpush2.bf16.msra.mxu0 0
    %803 = vmatprep.mubr.bf16.mxu0 0
    %804 = vmatmul.mubr.bf16.gmra.mxu0 %v766
    %v805 = vpop.f32.mrf.mxu0
    %v806 = vadd.f32 0.0, %v805
    %v807 = vpop.f32.mrf.mxu0
    %v808 = vpop.f32.mrf.mxu0
    %v809 = vpop.f32.mrf.mxu0
    %810 = vdwg.mxu0
    %811 = vrot.lane.b32.xlu0 %v190, 48
    %v812 = vpop.permute.xlu0 %811
    %v814 = vsel %vm194, %v762, 0
    %v817 = vsel %vm321, %v812, 0
    %819 = vmatprep.subr.bf16.mxu0 0
    %820 = vmatpush1.bf16.msra.mxu0 0
    %821 = vmatprep.subr.bf16.mxu0 0
    %822 = vmatpush1.bf16.msra.mxu0 0
    %823 = vmatprep.subr.bf16.mxu0 0
    %824 = vmatpush1.bf16.msra.mxu0 0
    %825 = vmatprep.subr.bf16.mxu0 0
    %826 = vmatpush1.bf16.msra.mxu0 0
    %827 = vmatprep.subr.bf16.mxu0 0
    %828 = vmatpush1.bf16.msra.mxu0 0
    %829 = vmatprep.subr.bf16.mxu0 0
    %830 = vmatpush1.bf16.msra.mxu0 0
    %831 = vmatprep.subr.bf16.mxu0 0
    %832 = vmatpush1.bf16.msra.mxu0 0
    %833 = vmatprep.subr.bf16.mxu0 0
    %834 = vmatpush1.bf16.msra.mxu0 %v817
    %835 = vmatprep.subr.bf16.mxu0 0
    %836 = vmatpush2.bf16.msra.mxu0 0
    %837 = vmatprep.subr.bf16.mxu0 0
    %838 = vmatpush2.bf16.msra.mxu0 0
    %839 = vmatprep.subr.bf16.mxu0 0
    %840 = vmatpush2.bf16.msra.mxu0 0
    %841 = vmatprep.subr.bf16.mxu0 0
    %842 = vmatpush2.bf16.msra.mxu0 0
    %843 = vmatprep.subr.bf16.mxu0 0
    %844 = vmatpush2.bf16.msra.mxu0 0
    %845 = vmatprep.subr.bf16.mxu0 0
    %846 = vmatpush2.bf16.msra.mxu0 0
    %847 = vmatprep.subr.bf16.mxu0 0
    %848 = vmatpush2.bf16.msra.mxu0 0
    %849 = vmatprep.subr.bf16.mxu0 0
    %850 = vmatpush2.bf16.msra.mxu0 0
    %851 = vmatprep.mubr.bf16.mxu0 0
    %852 = vmatmul.mubr.bf16.gmra.mxu0 %v814
    %v853 = vpop.f32.mrf.mxu0
    %v854 = vadd.f32 0.0, %v853
    %v855 = vpop.f32.mrf.mxu0
    %v856 = vpop.f32.mrf.mxu0
    %v857 = vpop.f32.mrf.mxu0
    %858 = vdwg.mxu0
    %859 = vrot.lane.b32.xlu0 %v187, 104
    %v860 = vpop.permute.xlu0 %859
    %861 = vrot.lane.b32.xlu0 %v189, 72
    %v862 = vpop.permute.xlu0 %861
    %v864 = vsel %vm194, %v860, 0
    %v867 = vsel %vm194, %v862, 0
    %869 = vmatprep.subr.bf16.mxu0 0
    %870 = vmatpush1.bf16.xpose.msra.mxu0 0
    %871 = vmatprep.subr.bf16.mxu0 0
    %872 = vmatpush1.bf16.xpose.msra.mxu0 0
    %873 = vmatprep.subr.bf16.mxu0 0
    %874 = vmatpush1.bf16.xpose.msra.mxu0 0
    %875 = vmatprep.subr.bf16.mxu0 0
    %876 = vmatpush1.bf16.xpose.msra.mxu0 0
    %877 = vmatprep.subr.bf16.mxu0 0
    %878 = vmatpush1.bf16.xpose.msra.mxu0 0
    %879 = vmatprep.subr.bf16.mxu0 0
    %880 = vmatpush1.bf16.xpose.msra.mxu0 0
    %881 = vmatprep.subr.bf16.mxu0 0
    %882 = vmatpush1.bf16.xpose.msra.mxu0 0
    %883 = vmatprep.subr.bf16.mxu0 0
    %884 = vmatpush1.bf16.xpose.msra.mxu0 %v867
    %885 = vmatprep.subr.bf16.mxu0 0
    %886 = vmatpush2.bf16.xpose.msra.mxu0 0
    %887 = vmatprep.subr.bf16.mxu0 0
    %888 = vmatpush2.bf16.xpose.msra.mxu0 0
    %889 = vmatprep.subr.bf16.mxu0 0
    %890 = vmatpush2.bf16.xpose.msra.mxu0 0
    %891 = vmatprep.subr.bf16.mxu0 0
    %892 = vmatpush2.bf16.xpose.msra.mxu0 0
    %893 = vmatprep.subr.bf16.mxu0 0
    %894 = vmatpush2.bf16.xpose.msra.mxu0 0
    %895 = vmatprep.subr.bf16.mxu0 0
    %896 = vmatpush2.bf16.xpose.msra.mxu0 0
    %897 = vmatprep.subr.bf16.mxu0 0
    %898 = vmatpush2.bf16.xpose.msra.mxu0 0
    %899 = vmatprep.subr.bf16.mxu0 0
    %900 = vmatpush2.bf16.xpose.msra.mxu0 0
    %901 = vmatprep.mubr.bf16.mxu0 0
    %902 = vmatmul.mubr.bf16.gmra.mxu0 %v864
    %v903 = vpop.f32.mrf.mxu0
    %v904 = vadd.f32 0.0, %v903
    %v905 = vpop.f32.mrf.mxu0
    %v906 = vpop.f32.mrf.mxu0
    %v907 = vpop.f32.mrf.mxu0
    %908 = vdwg.mxu0
    %909 = vrot.lane.b32.xlu0 %v188, 104
    %v910 = vpop.permute.xlu0 %909
    %911 = vrot.lane.b32.xlu0 %v190, 72
    %v912 = vpop.permute.xlu0 %911
    %v914 = vsel %vm194, %v910, 0
    %v917 = vsel %vm194, %v912, 0
    %919 = vmatprep.subr.bf16.mxu0 0
    %920 = vmatpush1.bf16.xpose.msra.mxu0 0
    %921 = vmatprep.subr.bf16.mxu0 0
    %922 = vmatpush1.bf16.xpose.msra.mxu0 0
    %923 = vmatprep.subr.bf16.mxu0 0
    %924 = vmatpush1.bf16.xpose.msra.mxu0 0
    %925 = vmatprep.subr.bf16.mxu0 0
    %926 = vmatpush1.bf16.xpose.msra.mxu0 0
    %927 = vmatprep.subr.bf16.mxu0 0
    %928 = vmatpush1.bf16.xpose.msra.mxu0 0
    %929 = vmatprep.subr.bf16.mxu0 0
    %930 = vmatpush1.bf16.xpose.msra.mxu0 0
    %931 = vmatprep.subr.bf16.mxu0 0
    %932 = vmatpush1.bf16.xpose.msra.mxu0 0
    %933 = vmatprep.subr.bf16.mxu0 0
    %934 = vmatpush1.bf16.xpose.msra.mxu0 %v917
    %935 = vmatprep.subr.bf16.mxu0 0
    %936 = vmatpush2.bf16.xpose.msra.mxu0 0
    %937 = vmatprep.subr.bf16.mxu0 0
    %938 = vmatpush2.bf16.xpose.msra.mxu0 0
    %939 = vmatprep.subr.bf16.mxu0 0
    %940 = vmatpush2.bf16.xpose.msra.mxu0 0
    %941 = vmatprep.subr.bf16.mxu0 0
    %942 = vmatpush2.bf16.xpose.msra.mxu0 0
    %943 = vmatprep.subr.bf16.mxu0 0
    %944 = vmatpush2.bf16.xpose.msra.mxu0 0
    %945 = vmatprep.subr.bf16.mxu0 0
    %946 = vmatpush2.bf16.xpose.msra.mxu0 0
    %947 = vmatprep.subr.bf16.mxu0 0
    %948 = vmatpush2.bf16.xpose.msra.mxu0 0
    %949 = vmatprep.subr.bf16.mxu0 0
    %950 = vmatpush2.bf16.xpose.msra.mxu0 0
    %951 = vmatprep.mubr.bf16.mxu0 0
    %952 = vmatmul.mubr.bf16.gmra.mxu0 %v914
    %v953 = vpop.f32.mrf.mxu0
    %v954 = vadd.f32 0.0, %v953
    %v955 = vpop.f32.mrf.mxu0
    %v956 = vpop.f32.mrf.mxu0
    %v957 = vpop.f32.mrf.mxu0
    %958 = vdwg.mxu0
    %v959 = vsel %vm70, %v904, -1e+30
    %v960 = vsel %vm70, %v954, -1e+30
    %v961 = vsel %vm194, %v959, -inf
    %962 = vmax.xlane.f32.xlu0 %v961
    %v963 = vpop.xlane.xlu0 %962
    %v964 = vsel %vm194, %v960, -inf
    %965 = vmax.xlane.f32.xlu0 %v964
    %v966 = vpop.xlane.xlu0 %965
    %v967 = vsub.f32 %v959, %v963
    %v968 = vsub.f32 %v960, %v966
    %v969 = vmul.f32 %v967, 1.442695
    %v970 = vpow.pop %v969
    %v971 = vmul.f32 %v968, 1.442695
    %v972 = vpow.pop %v971
    %v973 = vsel %vm194, %v970, 0.0
    %974 = vadd.xlane.f32.xlu0 %v973
    %v975 = vpop.xlane.xlu0 %974
    %v976 = vsel %vm194, %v972, 0.0
    %977 = vadd.xlane.f32.xlu0 %v976
    %v978 = vpop.xlane.xlu0 %977
    %v979 = vrcp.pop %v975
    %v980 = vrcp.pop %v978
    %v981 = vmul.f32 %v970, %v979
    %v982 = vmul.f32 %v972, %v980
    %v983 = vpack.c.bf16 %v981, %v981
    %v984 = vpack.c.bf16 %v982, %v982
    %985 = vrot.lane.b32.xlu0 %v189, 40
    %v986 = vpop.permute.xlu0 %985
    %v988 = vsel %vm194, %v983, 0
    %v991 = vsel %vm321, %v986, 0
    %993 = vmatprep.subr.bf16.mxu0 0
    %994 = vmatpush1.bf16.msra.mxu0 0
    %995 = vmatprep.subr.bf16.mxu0 0
    %996 = vmatpush1.bf16.msra.mxu0 0
    %997 = vmatprep.subr.bf16.mxu0 0
    %998 = vmatpush1.bf16.msra.mxu0 0
    %999 = vmatprep.subr.bf16.mxu0 0
    %1000 = vmatpush1.bf16.msra.mxu0 0
    %1001 = vmatprep.subr.bf16.mxu0 0
    %1002 = vmatpush1.bf16.msra.mxu0 0
    %1003 = vmatprep.subr.bf16.mxu0 0
    %1004 = vmatpush1.bf16.msra.mxu0 0
    %1005 = vmatprep.subr.bf16.mxu0 0
    %1006 = vmatpush1.bf16.msra.mxu0 0
    %1007 = vmatprep.subr.bf16.mxu0 0
    %1008 = vmatpush1.bf16.msra.mxu0 %v991
    %1009 = vmatprep.subr.bf16.mxu0 0
    %1010 = vmatpush2.bf16.msra.mxu0 0
    %1011 = vmatprep.subr.bf16.mxu0 0
    %1012 = vmatpush2.bf16.msra.mxu0 0
    %1013 = vmatprep.subr.bf16.mxu0 0
    %1014 = vmatpush2.bf16.msra.mxu0 0
    %1015 = vmatprep.subr.bf16.mxu0 0
    %1016 = vmatpush2.bf16.msra.mxu0 0
    %1017 = vmatprep.subr.bf16.mxu0 0
    %1018 = vmatpush2.bf16.msra.mxu0 0
    %1019 = vmatprep.subr.bf16.mxu0 0
    %1020 = vmatpush2.bf16.msra.mxu0 0
    %1021 = vmatprep.subr.bf16.mxu0 0
    %1022 = vmatpush2.bf16.msra.mxu0 0
    %1023 = vmatprep.subr.bf16.mxu0 0
    %1024 = vmatpush2.bf16.msra.mxu0 0
    %1025 = vmatprep.mubr.bf16.mxu0 0
    %1026 = vmatmul.mubr.bf16.gmra.mxu0 %v988
    %v1027 = vpop.f32.mrf.mxu0
    %v1028 = vadd.f32 0.0, %v1027
    %v1029 = vpop.f32.mrf.mxu0
    %v1030 = vpop.f32.mrf.mxu0
    %v1031 = vpop.f32.mrf.mxu0
    %1032 = vdwg.mxu0
    %1033 = vrot.lane.b32.xlu0 %v190, 40
    %v1034 = vpop.permute.xlu0 %1033
    %v1036 = vsel %vm194, %v984, 0
    %v1039 = vsel %vm321, %v1034, 0
    %1041 = vmatprep.subr.bf16.mxu0 0
    %1042 = vmatpush1.bf16.msra.mxu0 0
    %1043 = vmatprep.subr.bf16.mxu0 0
    %1044 = vmatpush1.bf16.msra.mxu0 0
    %1045 = vmatprep.subr.bf16.mxu0 0
    %1046 = vmatpush1.bf16.msra.mxu0 0
    %1047 = vmatprep.subr.bf16.mxu0 0
    %1048 = vmatpush1.bf16.msra.mxu0 0
    %1049 = vmatprep.subr.bf16.mxu0 0
    %1050 = vmatpush1.bf16.msra.mxu0 0
    %1051 = vmatprep.subr.bf16.mxu0 0
    %1052 = vmatpush1.bf16.msra.mxu0 0
    %1053 = vmatprep.subr.bf16.mxu0 0
    %1054 = vmatpush1.bf16.msra.mxu0 0
    %1055 = vmatprep.subr.bf16.mxu0 0
    %1056 = vmatpush1.bf16.msra.mxu0 %v1039
    %1057 = vmatprep.subr.bf16.mxu0 0
    %1058 = vmatpush2.bf16.msra.mxu0 0
    %1059 = vmatprep.subr.bf16.mxu0 0
    %1060 = vmatpush2.bf16.msra.mxu0 0
    %1061 = vmatprep.subr.bf16.mxu0 0
    %1062 = vmatpush2.bf16.msra.mxu0 0
    %1063 = vmatprep.subr.bf16.mxu0 0
    %1064 = vmatpush2.bf16.msra.mxu0 0
    %1065 = vmatprep.subr.bf16.mxu0 0
    %1066 = vmatpush2.bf16.msra.mxu0 0
    %1067 = vmatprep.subr.bf16.mxu0 0
    %1068 = vmatpush2.bf16.msra.mxu0 0
    %1069 = vmatprep.subr.bf16.mxu0 0
    %1070 = vmatpush2.bf16.msra.mxu0 0
    %1071 = vmatprep.subr.bf16.mxu0 0
    %1072 = vmatpush2.bf16.msra.mxu0 0
    %1073 = vmatprep.mubr.bf16.mxu0 0
    %1074 = vmatmul.mubr.bf16.gmra.mxu0 %v1036
    %v1075 = vpop.f32.mrf.mxu0
    %v1076 = vadd.f32 0.0, %v1075
    %v1077 = vpop.f32.mrf.mxu0
    %v1078 = vpop.f32.mrf.mxu0
    %v1079 = vpop.f32.mrf.mxu0
    %1080 = vdwg.mxu0
    %1083 = vrot.lane.b32.xlu0 %v584, 8
    %v1084 = vpop.permute.xlu0 %1083
    %1085 = vrot.lane.b32.xlu0 %v632, 8
    %v1086 = vpop.permute.xlu0 %1085
    %1091 = vrot.lane.b32.xlu0 %v806, 16
    %v1092 = vpop.permute.xlu0 %1091
    %1093 = vrot.lane.b32.xlu0 %v854, 16
    %v1094 = vpop.permute.xlu0 %1093
    %1099 = vrot.lane.b32.xlu0 %v1028, 24
    %v1100 = vpop.permute.xlu0 %1099
    %1101 = vrot.lane.b32.xlu0 %v1076, 24
    %v1102 = vpop.permute.xlu0 %1101
    %v1105 = vsel %vm194, %v360, %v1084
    %v1106 = vsel %vm194, %v408, %v1086
    %vm1107 = vcmask 130048
    %v1108 = vsel %vm1107, %v1105, %v1092
    %v1109 = vsel %vm1107, %v1106, %v1094
    %vm1110 = vcmask 195584
    %v1111 = vsel %vm1110, %v1108, %v1100
    %v1112 = vsel %vm1110, %v1109, %v1102
    %v1113 = vpack.c.bf16 %v1112, %v1111
    %v1114 = vld [vmem:[%s7] sm:$0xf]
    %v1115 = vld [vmem:[%s7 + $0x4] sm:$0xf]
    %v1116 = vld [vmem:[%s7 + $0x8] sm:$0xf]
    %v1117 = vld [vmem:[%s7 + $0xc] sm:$0xf]
    %v1122 = vunpack.c.l.b16 %v1114
    %v1123 = vunpack.c.l.b16 %v1115
    %v1124 = vunpack.c.l.b16 %v1116
    %v1125 = vunpack.c.l.b16 %v1117
    %v1126 = vpack.c.b16 %v1123, %v1122
    %v1127 = vpack.c.b16 %v1125, %v1124
    %v1131 = vsel %vm73, %v1113, 0
    %1133 = vmatprep.subr.bf16.mxu0 0
    %1134 = vmatpush1.bf16.msra.mxu0 0
    %1135 = vmatprep.subr.bf16.mxu0 0
    %1136 = vmatpush1.bf16.msra.mxu0 0
    %1137 = vmatprep.subr.bf16.mxu0 0
    %1138 = vmatpush1.bf16.msra.mxu0 0
    %1139 = vmatprep.subr.bf16.mxu0 0
    %1140 = vmatpush1.bf16.msra.mxu0 0
    %1141 = vmatprep.subr.bf16.mxu0 0
    %1142 = vmatpush1.bf16.msra.mxu0 0
    %1143 = vmatprep.subr.bf16.mxu0 0
    %1144 = vmatpush1.bf16.msra.mxu0 0
    %1145 = vmatprep.subr.bf16.mxu0 0
    %1146 = vmatpush1.bf16.msra.mxu0 %v1127
    %1147 = vmatprep.subr.bf16.mxu0 0
    %1148 = vmatpush1.bf16.msra.mxu0 %v1126
    %1149 = vmatprep.subr.bf16.mxu0 0
    %1150 = vmatpush2.bf16.msra.mxu0 0
    %1151 = vmatprep.subr.bf16.mxu0 0
    %1152 = vmatpush2.bf16.msra.mxu0 0
    %1153 = vmatprep.subr.bf16.mxu0 0
    %1154 = vmatpush2.bf16.msra.mxu0 0
    %1155 = vmatprep.subr.bf16.mxu0 0
    %1156 = vmatpush2.bf16.msra.mxu0 0
    %1157 = vmatprep.subr.bf16.mxu0 0
    %1158 = vmatpush2.bf16.msra.mxu0 0
    %1159 = vmatprep.subr.bf16.mxu0 0
    %1160 = vmatpush2.bf16.msra.mxu0 0
    %1161 = vmatprep.subr.bf16.mxu0 0
    %1162 = vmatpush2.bf16.msra.mxu0 0
    %1163 = vmatprep.subr.bf16.mxu0 0
    %1164 = vmatpush2.bf16.msra.mxu0 0
    %1165 = vmatprep.mubr.bf16.mxu0 0
    %1166 = vmatmul.mubr.bf16.gmra.mxu0 %v1131
    %v1167 = vpop.f32.mrf.mxu0
    %v1168 = vadd.f32 0.0, %v1167
    %v1169 = vpop.f32.mrf.mxu0
    %v1170 = vpop.f32.mrf.mxu0
    %v1171 = vadd.f32 0.0, %v1170
    %v1172 = vpop.f32.mrf.mxu0
    %1173 = vdwg.mxu0
    %v1174 = vadd.f32 %v64, %v1168
    %v1175 = vadd.f32 %v65, %v1171
    %v1176 = vld [vmem:[%s8] sm:$0x1]
    %v1178 = vlaneseq
    %v1179 = vshrl.u32 %v1178, 7
    %v1180 = vsub.s32 0, %v1179
    %v1181 = vrot.slane %v1176, %v1180
    %v1183 = vadd.f32 %v1174, %v1181
    %v1184 = vadd.f32 %v1175, %v1181
    %v1185 = vld [vmem:[%s9] sm:$0x1]
    %v1186 = vld [vmem:[%s10] sm:$0x1]
    %v1187 = vsel %vm73, %v1183, 0.0
    %1188 = vadd.xlane.f32.xlu0 %v1187
    %v1189 = vpop.xlane.xlu0 %1188
    %v1190 = vsel %vm73, %v1184, 0.0
    %1191 = vadd.xlane.f32.xlu0 %v1190
    %v1192 = vpop.xlane.xlu0 %1191
    %v1193 = vmul.f32 %v1189, %v80
    %v1194 = vmul.f32 %v1192, %v80
    %v1195 = vsub.f32 %v1183, %v1193
    %v1196 = vsub.f32 %v1184, %v1194
    %v1197 = vmul.f32 %v1195, %v1195
    %v1198 = vmul.f32 %v1196, %v1196
    %v1199 = vsel %vm73, %v1197, 0.0
    %1200 = vadd.xlane.f32.xlu0 %v1199
    %v1201 = vpop.xlane.xlu0 %1200
    %v1202 = vsel %vm73, %v1198, 0.0
    %1203 = vadd.xlane.f32.xlu0 %v1202
    %v1204 = vpop.xlane.xlu0 %1203
    %v1205 = vmul.f32 %v1201, %v80
    %v1206 = vmul.f32 %v1204, %v80
    %v1207 = vadd.f32 %v1205, 1e-05
    %v1208 = vadd.f32 %v1206, 1e-05
    %v1209 = vrsqrt.pop %v1207
    %v1210 = vrsqrt.pop %v1208
    %v1211 = vmul.f32 %v1195, %v1209
    %v1212 = vmul.f32 %v1196, %v1210
    %v1214 = vlaneseq
    %v1215 = vshrl.u32 %v1214, 7
    %v1216 = vsub.s32 0, %v1215
    %v1217 = vrot.slane %v1185, %v1216
    %v1219 = vmul.f32 %v1211, %v1217
    %v1220 = vmul.f32 %v1212, %v1217
    %v1222 = vlaneseq
    %v1223 = vshrl.u32 %v1222, 7
    %v1224 = vsub.s32 0, %v1223
    %v1225 = vrot.slane %v1186, %v1224
    %v1227 = vadd.f32 %v1219, %v1225
    %v1228 = vadd.f32 %v1220, %v1225
    %v1229 = vpack.c.bf16 %v1228, %v1227
    %v1230 = vld [vmem:[%s11] sm:$0xf]
    %v1231 = vld [vmem:[%s11 + $0x4] sm:$0xf]
    %v1232 = vld [vmem:[%s11 + $0x8] sm:$0xf]
    %v1233 = vld [vmem:[%s11 + $0xc] sm:$0xf]
    %v1234 = vld [vmem:[%s12] sm:$0x1]
    %v1236 = vlaneseq
    %v1237 = vshrl.u32 %v1236, 7
    %v1238 = vsub.s32 0, %v1237
    %v1239 = vrot.slane %v1234, %v1238
    %v1245 = vunpack.c.l.b16 %v1230
    %v1246 = vunpack.c.l.b16 %v1231
    %v1247 = vunpack.c.l.b16 %v1232
    %v1248 = vunpack.c.l.b16 %v1233
    %v1249 = vpack.c.b16 %v1246, %v1245
    %v1250 = vpack.c.b16 %v1248, %v1247
    %v1254 = vsel %vm73, %v1229, 0
    %1256 = vmatprep.subr.bf16.mxu0 0
    %1257 = vmatpush1.bf16.msra.mxu0 0
    %1258 = vmatprep.subr.bf16.mxu0 0
    %1259 = vmatpush1.bf16.msra.mxu0 0
    %1260 = vmatprep.subr.bf16.mxu0 0
    %1261 = vmatpush1.bf16.msra.mxu0 0
    %1262 = vmatprep.subr.bf16.mxu0 0
    %1263 = vmatpush1.bf16.msra.mxu0 0
    %1264 = vmatprep.subr.bf16.mxu0 0
    %1265 = vmatpush1.bf16.msra.mxu0 0
    %1266 = vmatprep.subr.bf16.mxu0 0
    %1267 = vmatpush1.bf16.msra.mxu0 0
    %1268 = vmatprep.subr.bf16.mxu0 0
    %1269 = vmatpush1.bf16.msra.mxu0 %v1250
    %1270 = vmatprep.subr.bf16.mxu0 0
    %1271 = vmatpush1.bf16.msra.mxu0 %v1249
    %1272 = vmatprep.subr.bf16.mxu0 0
    %1273 = vmatpush2.bf16.msra.mxu0 0
    %1274 = vmatprep.subr.bf16.mxu0 0
    %1275 = vmatpush2.bf16.msra.mxu0 0
    %1276 = vmatprep.subr.bf16.mxu0 0
    %1277 = vmatpush2.bf16.msra.mxu0 0
    %1278 = vmatprep.subr.bf16.mxu0 0
    %1279 = vmatpush2.bf16.msra.mxu0 0
    %1280 = vmatprep.subr.bf16.mxu0 0
    %1281 = vmatpush2.bf16.msra.mxu0 0
    %1282 = vmatprep.subr.bf16.mxu0 0
    %1283 = vmatpush2.bf16.msra.mxu0 0
    %1284 = vmatprep.subr.bf16.mxu0 0
    %1285 = vmatpush2.bf16.msra.mxu0 0
    %1286 = vmatprep.subr.bf16.mxu0 0
    %1287 = vmatpush2.bf16.msra.mxu0 0
    %1288 = vmatprep.mubr.bf16.mxu0 0
    %1289 = vmatmul.mubr.bf16.gmra.mxu0 %v1254
    %v1290 = vpop.f32.mrf.mxu0
    %v1291 = vadd.f32 %v1239, %v1290
    %v1292 = vpop.f32.mrf.mxu0
    %v1293 = vpop.f32.mrf.mxu0
    %v1294 = vadd.f32 %v1239, %v1293
    %v1295 = vpop.f32.mrf.mxu0
    %1296 = vdwg.mxu0
    %v1297 = vmul.f32 %v1291, 1.702
    %v1298 = vmul.f32 %v1294, 1.702
    %v1299 = vxor.u32 %v1297, 2147483648
    %v1300 = vxor.u32 %v1298, 2147483648
    %v1301 = vmul.f32 %v1299, 1.442695
    %v1302 = vpow.pop %v1301
    %v1303 = vmul.f32 %v1300, 1.442695
    %v1304 = vpow.pop %v1303
    %v1305 = vadd.f32 %v1302, 1.0
    %v1306 = vadd.f32 %v1304, 1.0
    %v1307 = vrcp.pop %v1305
    %v1308 = vmul.f32 1.0, %v1307
    %v1309 = vrcp.pop %v1306
    %v1310 = vmul.f32 1.0, %v1309
    %v1311 = vmul.f32 %v1291, %v1308
    %v1312 = vmul.f32 %v1294, %v1310
    %v1313 = vpack.c.bf16 %v1312, %v1311
    %v1314 = vld [vmem:[%s13] sm:$0xf]
    %v1315 = vld [vmem:[%s13 + $0x4] sm:$0xf]
    %v1316 = vld [vmem:[%s13 + $0x8] sm:$0xf]
    %v1317 = vld [vmem:[%s13 + $0xc] sm:$0xf]
    %v1318 = vld [vmem:[%s13 + $0x10] sm:$0xf]
    %v1319 = vld [vmem:[%s13 + $0x14] sm:$0xf]
    %v1320 = vld [vmem:[%s13 + $0x18] sm:$0xf]
    %v1321 = vld [vmem:[%s13 + $0x1c] sm:$0xf]
    %v1322 = vld [vmem:[%s13 + $0x20] sm:$0xf]
    %v1323 = vld [vmem:[%s13 + $0x24] sm:$0xf]
    %v1324 = vld [vmem:[%s13 + $0x28] sm:$0xf]
    %v1325 = vld [vmem:[%s13 + $0x2c] sm:$0xf]
    %v1326 = vld [vmem:[%s13 + $0x30] sm:$0xf]
    %v1327 = vld [vmem:[%s13 + $0x34] sm:$0xf]
    %v1328 = vld [vmem:[%s13 + $0x38] sm:$0xf]
    %v1329 = vld [vmem:[%s13 + $0x3c] sm:$0xf]
    %v1346 = vunpack.c.l.b16 %v1314
    %v1347 = vunpack.c.l.b16 %v1315
    %v1348 = vunpack.c.l.b16 %v1316
    %v1349 = vunpack.c.l.b16 %v1317
    %v1350 = vunpack.c.l.b16 %v1318
    %v1351 = vunpack.c.l.b16 %v1319
    %v1352 = vunpack.c.l.b16 %v1320
    %v1353 = vunpack.c.l.b16 %v1321
    %v1354 = vunpack.c.l.b16 %v1322
    %v1355 = vunpack.c.l.b16 %v1323
    %v1356 = vunpack.c.l.b16 %v1324
    %v1357 = vunpack.c.l.b16 %v1325
    %v1358 = vunpack.c.l.b16 %v1326
    %v1359 = vunpack.c.l.b16 %v1327
    %v1360 = vunpack.c.l.b16 %v1328
    %v1361 = vunpack.c.l.b16 %v1329
    %v1362 = vpack.c.b16 %v1347, %v1346
    %v1363 = vpack.c.b16 %v1349, %v1348
    %v1364 = vpack.c.b16 %v1351, %v1350
    %v1365 = vpack.c.b16 %v1353, %v1352
    %v1366 = vpack.c.b16 %v1355, %v1354
    %v1367 = vpack.c.b16 %v1357, %v1356
    %v1368 = vpack.c.b16 %v1359, %v1358
    %v1369 = vpack.c.b16 %v1361, %v1360
    %1378 = vmatprep.subr.bf16.mxu0 0
    %1379 = vmatpush1.bf16.msra.mxu0 %v1369
    %1380 = vmatprep.subr.bf16.mxu0 0
    %1381 = vmatpush1.bf16.msra.mxu0 %v1368
    %1382 = vmatprep.subr.bf16.mxu0 0
    %1383 = vmatpush1.bf16.msra.mxu0 %v1367
    %1384 = vmatprep.subr.bf16.mxu0 0
    %1385 = vmatpush1.bf16.msra.mxu0 %v1366
    %1386 = vmatprep.subr.bf16.mxu0 0
    %1387 = vmatpush1.bf16.msra.mxu0 %v1365
    %1388 = vmatprep.subr.bf16.mxu0 0
    %1389 = vmatpush1.bf16.msra.mxu0 %v1364
    %1390 = vmatprep.subr.bf16.mxu0 0
    %1391 = vmatpush1.bf16.msra.mxu0 %v1363
    %1392 = vmatprep.subr.bf16.mxu0 0
    %1393 = vmatpush1.bf16.msra.mxu0 %v1362
    %1394 = vmatprep.subr.bf16.mxu0 0
    %1395 = vmatpush2.bf16.msra.mxu0 0
    %1396 = vmatprep.subr.bf16.mxu0 0
    %1397 = vmatpush2.bf16.msra.mxu0 0
    %1398 = vmatprep.subr.bf16.mxu0 0
    %1399 = vmatpush2.bf16.msra.mxu0 0
    %1400 = vmatprep.subr.bf16.mxu0 0
    %1401 = vmatpush2.bf16.msra.mxu0 0
    %1402 = vmatprep.subr.bf16.mxu0 0
    %1403 = vmatpush2.bf16.msra.mxu0 0
    %1404 = vmatprep.subr.bf16.mxu0 0
    %1405 = vmatpush2.bf16.msra.mxu0 0
    %1406 = vmatprep.subr.bf16.mxu0 0
    %1407 = vmatpush2.bf16.msra.mxu0 0
    %1408 = vmatprep.subr.bf16.mxu0 0
    %1409 = vmatpush2.bf16.msra.mxu0 0
    %1410 = vmatprep.mubr.bf16.mxu0 0
    %1411 = vmatmul.mubr.bf16.gmra.mxu0 %v1313
    %v1412 = vpop.f32.mrf.mxu0
    %v1413 = vadd.f32 0.0, %v1412
    %v1414 = vpop.f32.mrf.mxu0
    %v1415 = vpop.f32.mrf.mxu0
    %v1416 = vadd.f32 0.0, %v1415
    %v1417 = vpop.f32.mrf.mxu0
    %1418 = vdwg.mxu0
    %v1419 = vadd.f32 %v1183, %v1413
    %v1420 = vadd.f32 %v1184, %v1416
    %v1421 = vld [vmem:[%s14] sm:$0x1]
    %v1423 = vlaneseq
    %v1424 = vshrl.u32 %v1423, 7
    %v1425 = vsub.s32 0, %v1424
    %v1426 = vrot.slane %v1421, %v1425
    %v1428 = vadd.f32 %v1419, %v1426
    %v1429 = vadd.f32 %v1420, %v1426
    %s1430 = scalar_lea.vmem %s3, 1
    %v1431 = vld [vmem:[%s1430] sm:$0x1]
    %s1432 = scalar_lea.vmem %s4, 1
    %v1433 = vld [vmem:[%s1432] sm:$0x1]
    %v1434 = vsel %vm73, %v1428, 0.0
    %1435 = vadd.xlane.f32.xlu0 %v1434
    %v1436 = vpop.xlane.xlu0 %1435
    %v1437 = vsel %vm73, %v1429, 0.0
    %1438 = vadd.xlane.f32.xlu0 %v1437
    %v1439 = vpop.xlane.xlu0 %1438
    %v1440 = vmul.f32 %v1436, %v80
    %v1441 = vmul.f32 %v1439, %v80
    %v1442 = vsub.f32 %v1428, %v1440
    %v1443 = vsub.f32 %v1429, %v1441
    %v1444 = vmul.f32 %v1442, %v1442
    %v1445 = vmul.f32 %v1443, %v1443
    %v1446 = vsel %vm73, %v1444, 0.0
    %1447 = vadd.xlane.f32.xlu0 %v1446
    %v1448 = vpop.xlane.xlu0 %1447
    %v1449 = vsel %vm73, %v1445, 0.0
    %1450 = vadd.xlane.f32.xlu0 %v1449
    %v1451 = vpop.xlane.xlu0 %1450
    %v1452 = vmul.f32 %v1448, %v80
    %v1453 = vmul.f32 %v1451, %v80
    %v1454 = vadd.f32 %v1452, 1e-05
    %v1455 = vadd.f32 %v1453, 1e-05
    %v1456 = vrsqrt.pop %v1454
    %v1457 = vrsqrt.pop %v1455
    %v1458 = vmul.f32 %v1442, %v1456
    %v1459 = vmul.f32 %v1443, %v1457
    %v1461 = vlaneseq
    %v1462 = vshrl.u32 %v1461, 7
    %v1463 = vsub.s32 0, %v1462
    %v1464 = vrot.slane %v1431, %v1463
    %v1466 = vmul.f32 %v1458, %v1464
    %v1467 = vmul.f32 %v1459, %v1464
    %v1469 = vlaneseq
    %v1470 = vshrl.u32 %v1469, 7
    %v1471 = vsub.s32 0, %v1470
    %v1472 = vrot.slane %v1433, %v1471
    %v1474 = vadd.f32 %v1466, %v1472
    %v1475 = vadd.f32 %v1467, %v1472
    %v1476 = vpack.c.bf16 %v1475, %v1474
    %s1477 = scalar_lea.vmem %s5, 16
    %v1478 = vld [vmem:[%s1477] sm:$0xf]
    %v1479 = vld [vmem:[%s1477 + $0x4] sm:$0xf]
    %v1480 = vld [vmem:[%s1477 + $0x8] sm:$0xf]
    %v1481 = vld [vmem:[%s1477 + $0xc] sm:$0xf]
    %s1482 = scalar_lea.vmem %s6, 1
    %v1483 = vld [vmem:[%s1482] sm:$0x1]
    %v1485 = vlaneseq
    %v1486 = vshrl.u32 %v1485, 7
    %v1487 = vsub.s32 0, %v1486
    %v1488 = vrot.slane %v1483, %v1487
    %v1494 = vunpack.c.l.b16 %v1478
    %v1495 = vunpack.c.l.b16 %v1479
    %v1496 = vunpack.c.l.b16 %v1480
    %v1497 = vunpack.c.l.b16 %v1481
    %v1498 = vpack.c.b16 %v1495, %v1494
    %v1499 = vpack.c.b16 %v1497, %v1496
    %v1503 = vsel %vm73, %v1476, 0
    %1505 = vmatprep.subr.bf16.mxu0 0
    %1506 = vmatpush1.bf16.msra.mxu0 0
    %1507 = vmatprep.subr.bf16.mxu0 0
    %1508 = vmatpush1.bf16.msra.mxu0 0
    %1509 = vmatprep.subr.bf16.mxu0 0
    %1510 = vmatpush1.bf16.msra.mxu0 0
    %1511 = vmatprep.subr.bf16.mxu0 0
    %1512 = vmatpush1.bf16.msra.mxu0 0
    %1513 = vmatprep.subr.bf16.mxu0 0
    %1514 = vmatpush1.bf16.msra.mxu0 0
    %1515 = vmatprep.subr.bf16.mxu0 0
    %1516 = vmatpush1.bf16.msra.mxu0 0
    %1517 = vmatprep.subr.bf16.mxu0 0
    %1518 = vmatpush1.bf16.msra.mxu0 %v1499
    %1519 = vmatprep.subr.bf16.mxu0 0
    %1520 = vmatpush1.bf16.msra.mxu0 %v1498
    %1521 = vmatprep.subr.bf16.mxu0 0
    %1522 = vmatpush2.bf16.msra.mxu0 0
    %1523 = vmatprep.subr.bf16.mxu0 0
    %1524 = vmatpush2.bf16.msra.mxu0 0
    %1525 = vmatprep.subr.bf16.mxu0 0
    %1526 = vmatpush2.bf16.msra.mxu0 0
    %1527 = vmatprep.subr.bf16.mxu0 0
    %1528 = vmatpush2.bf16.msra.mxu0 0
    %1529 = vmatprep.subr.bf16.mxu0 0
    %1530 = vmatpush2.bf16.msra.mxu0 0
    %1531 = vmatprep.subr.bf16.mxu0 0
    %1532 = vmatpush2.bf16.msra.mxu0 0
    %1533 = vmatprep.subr.bf16.mxu0 0
    %1534 = vmatpush2.bf16.msra.mxu0 0
    %1535 = vmatprep.subr.bf16.mxu0 0
    %1536 = vmatpush2.bf16.msra.mxu0 0
    %1537 = vmatprep.mubr.bf16.mxu0 0
    %1538 = vmatmul.mubr.bf16.gmra.mxu0 %v1503
    %v1539 = vpop.f32.mrf.mxu0
    %v1540 = vadd.f32 %v1488, %v1539
    %v1541 = vpop.f32.mrf.mxu0
    %v1542 = vpop.f32.mrf.mxu0
    %v1543 = vadd.f32 %v1488, %v1542
    %v1544 = vpop.f32.mrf.mxu0
    %1545 = vdwg.mxu0
    %v1546 = vmul.f32 %v1540, 0.35355338
    %v1547 = vmul.f32 %v1543, 0.35355338
    %v1548 = vpack.c.bf16 %v1546, %v1546
    %v1549 = vpack.c.bf16 %v1547, %v1547
    %v1550 = vpack.c.bf16 %v1540, %v1540
    %v1551 = vpack.c.bf16 %v1543, %v1543
    %1553 = vrot.lane.b32.xlu0 %v1550, 96
    %v1554 = vpop.permute.xlu0 %1553
    %v1556 = vsel %vm194, %v1548, 0
    %v1559 = vsel %vm194, %v1554, 0
    %1561 = vmatprep.subr.bf16.mxu0 0
    %1562 = vmatpush1.bf16.xpose.msra.mxu0 0
    %1563 = vmatprep.subr.bf16.mxu0 0
    %1564 = vmatpush1.bf16.xpose.msra.mxu0 0
    %1565 = vmatprep.subr.bf16.mxu0 0
    %1566 = vmatpush1.bf16.xpose.msra.mxu0 0
    %1567 = vmatprep.subr.bf16.mxu0 0
    %1568 = vmatpush1.bf16.xpose.msra.mxu0 0
    %1569 = vmatprep.subr.bf16.mxu0 0
    %1570 = vmatpush1.bf16.xpose.msra.mxu0 0
    %1571 = vmatprep.subr.bf16.mxu0 0
    %1572 = vmatpush1.bf16.xpose.msra.mxu0 0
    %1573 = vmatprep.subr.bf16.mxu0 0
    %1574 = vmatpush1.bf16.xpose.msra.mxu0 0
    %1575 = vmatprep.subr.bf16.mxu0 0
    %1576 = vmatpush1.bf16.xpose.msra.mxu0 %v1559
    %1577 = vmatprep.subr.bf16.mxu0 0
    %1578 = vmatpush2.bf16.xpose.msra.mxu0 0
    %1579 = vmatprep.subr.bf16.mxu0 0
    %1580 = vmatpush2.bf16.xpose.msra.mxu0 0
    %1581 = vmatprep.subr.bf16.mxu0 0
    %1582 = vmatpush2.bf16.xpose.msra.mxu0 0
    %1583 = vmatprep.subr.bf16.mxu0 0
    %1584 = vmatpush2.bf16.xpose.msra.mxu0 0
    %1585 = vmatprep.subr.bf16.mxu0 0
    %1586 = vmatpush2.bf16.xpose.msra.mxu0 0
    %1587 = vmatprep.subr.bf16.mxu0 0
    %1588 = vmatpush2.bf16.xpose.msra.mxu0 0
    %1589 = vmatprep.subr.bf16.mxu0 0
    %1590 = vmatpush2.bf16.xpose.msra.mxu0 0
    %1591 = vmatprep.subr.bf16.mxu0 0
    %1592 = vmatpush2.bf16.xpose.msra.mxu0 0
    %1593 = vmatprep.mubr.bf16.mxu0 0
    %1594 = vmatmul.mubr.bf16.gmra.mxu0 %v1556
    %v1595 = vpop.f32.mrf.mxu0
    %v1596 = vadd.f32 0.0, %v1595
    %v1597 = vpop.f32.mrf.mxu0
    %v1598 = vpop.f32.mrf.mxu0
    %v1599 = vpop.f32.mrf.mxu0
    %1600 = vdwg.mxu0
    %1602 = vrot.lane.b32.xlu0 %v1551, 96
    %v1603 = vpop.permute.xlu0 %1602
    %v1605 = vsel %vm194, %v1549, 0
    %v1608 = vsel %vm194, %v1603, 0
    %1610 = vmatprep.subr.bf16.mxu0 0
    %1611 = vmatpush1.bf16.xpose.msra.mxu0 0
    %1612 = vmatprep.subr.bf16.mxu0 0
    %1613 = vmatpush1.bf16.xpose.msra.mxu0 0
    %1614 = vmatprep.subr.bf16.mxu0 0
    %1615 = vmatpush1.bf16.xpose.msra.mxu0 0
    %1616 = vmatprep.subr.bf16.mxu0 0
    %1617 = vmatpush1.bf16.xpose.msra.mxu0 0
    %1618 = vmatprep.subr.bf16.mxu0 0
    %1619 = vmatpush1.bf16.xpose.msra.mxu0 0
    %1620 = vmatprep.subr.bf16.mxu0 0
    %1621 = vmatpush1.bf16.xpose.msra.mxu0 0
    %1622 = vmatprep.subr.bf16.mxu0 0
    %1623 = vmatpush1.bf16.xpose.msra.mxu0 0
    %1624 = vmatprep.subr.bf16.mxu0 0
    %1625 = vmatpush1.bf16.xpose.msra.mxu0 %v1608
    %1626 = vmatprep.subr.bf16.mxu0 0
    %1627 = vmatpush2.bf16.xpose.msra.mxu0 0
    %1628 = vmatprep.subr.bf16.mxu0 0
    %1629 = vmatpush2.bf16.xpose.msra.mxu0 0
    %1630 = vmatprep.subr.bf16.mxu0 0
    %1631 = vmatpush2.bf16.xpose.msra.mxu0 0
    %1632 = vmatprep.subr.bf16.mxu0 0
    %1633 = vmatpush2.bf16.xpose.msra.mxu0 0
    %1634 = vmatprep.subr.bf16.mxu0 0
    %1635 = vmatpush2.bf16.xpose.msra.mxu0 0
    %1636 = vmatprep.subr.bf16.mxu0 0
    %1637 = vmatpush2.bf16.xpose.msra.mxu0 0
    %1638 = vmatprep.subr.bf16.mxu0 0
    %1639 = vmatpush2.bf16.xpose.msra.mxu0 0
    %1640 = vmatprep.subr.bf16.mxu0 0
    %1641 = vmatpush2.bf16.xpose.msra.mxu0 0
    %1642 = vmatprep.mubr.bf16.mxu0 0
    %1643 = vmatmul.mubr.bf16.gmra.mxu0 %v1605
    %v1644 = vpop.f32.mrf.mxu0
    %v1645 = vadd.f32 0.0, %v1644
    %v1646 = vpop.f32.mrf.mxu0
    %v1647 = vpop.f32.mrf.mxu0
    %v1648 = vpop.f32.mrf.mxu0
    %1649 = vdwg.mxu0
    %v1650 = vsel %vm70, %v1596, -1e+30
    %v1651 = vsel %vm70, %v1645, -1e+30
    %v1652 = vsel %vm194, %v1650, -inf
    %1653 = vmax.xlane.f32.xlu0 %v1652
    %v1654 = vpop.xlane.xlu0 %1653
    %v1655 = vsel %vm194, %v1651, -inf
    %1656 = vmax.xlane.f32.xlu0 %v1655
    %v1657 = vpop.xlane.xlu0 %1656
    %v1658 = vsub.f32 %v1650, %v1654
    %v1659 = vsub.f32 %v1651, %v1657
    %v1660 = vmul.f32 %v1658, 1.442695
    %v1661 = vpow.pop %v1660
    %v1662 = vmul.f32 %v1659, 1.442695
    %v1663 = vpow.pop %v1662
    %v1664 = vsel %vm194, %v1661, 0.0
    %1665 = vadd.xlane.f32.xlu0 %v1664
    %v1666 = vpop.xlane.xlu0 %1665
    %v1667 = vsel %vm194, %v1663, 0.0
    %1668 = vadd.xlane.f32.xlu0 %v1667
    %v1669 = vpop.xlane.xlu0 %1668
    %v1670 = vrcp.pop %v1666
    %v1671 = vrcp.pop %v1669
    %v1672 = vmul.f32 %v1661, %v1670
    %v1673 = vmul.f32 %v1663, %v1671
    %v1674 = vpack.c.bf16 %v1672, %v1672
    %v1675 = vpack.c.bf16 %v1673, %v1673
    %1676 = vrot.lane.b32.xlu0 %v1550, 64
    %v1677 = vpop.permute.xlu0 %1676
    %v1679 = vsel %vm194, %v1674, 0
    %v1682 = vsel %vm321, %v1677, 0
    %1684 = vmatprep.subr.bf16.mxu0 0
    %1685 = vmatpush1.bf16.msra.mxu0 0
    %1686 = vmatprep.subr.bf16.mxu0 0
    %1687 = vmatpush1.bf16.msra.mxu0 0
    %1688 = vmatprep.subr.bf16.mxu0 0
    %1689 = vmatpush1.bf16.msra.mxu0 0
    %1690 = vmatprep.subr.bf16.mxu0 0
    %1691 = vmatpush1.bf16.msra.mxu0 0
    %1692 = vmatprep.subr.bf16.mxu0 0
    %1693 = vmatpush1.bf16.msra.mxu0 0
    %1694 = vmatprep.subr.bf16.mxu0 0
    %1695 = vmatpush1.bf16.msra.mxu0 0
    %1696 = vmatprep.subr.bf16.mxu0 0
    %1697 = vmatpush1.bf16.msra.mxu0 0
    %1698 = vmatprep.subr.bf16.mxu0 0
    %1699 = vmatpush1.bf16.msra.mxu0 %v1682
    %1700 = vmatprep.subr.bf16.mxu0 0
    %1701 = vmatpush2.bf16.msra.mxu0 0
    %1702 = vmatprep.subr.bf16.mxu0 0
    %1703 = vmatpush2.bf16.msra.mxu0 0
    %1704 = vmatprep.subr.bf16.mxu0 0
    %1705 = vmatpush2.bf16.msra.mxu0 0
    %1706 = vmatprep.subr.bf16.mxu0 0
    %1707 = vmatpush2.bf16.msra.mxu0 0
    %1708 = vmatprep.subr.bf16.mxu0 0
    %1709 = vmatpush2.bf16.msra.mxu0 0
    %1710 = vmatprep.subr.bf16.mxu0 0
    %1711 = vmatpush2.bf16.msra.mxu0 0
    %1712 = vmatprep.subr.bf16.mxu0 0
    %1713 = vmatpush2.bf16.msra.mxu0 0
    %1714 = vmatprep.subr.bf16.mxu0 0
    %1715 = vmatpush2.bf16.msra.mxu0 0
    %1716 = vmatprep.mubr.bf16.mxu0 0
    %1717 = vmatmul.mubr.bf16.gmra.mxu0 %v1679
    %v1718 = vpop.f32.mrf.mxu0
    %v1719 = vadd.f32 0.0, %v1718
    %v1720 = vpop.f32.mrf.mxu0
    %v1721 = vpop.f32.mrf.mxu0
    %v1722 = vpop.f32.mrf.mxu0
    %1723 = vdwg.mxu0
    %1724 = vrot.lane.b32.xlu0 %v1551, 64
    %v1725 = vpop.permute.xlu0 %1724
    %v1727 = vsel %vm194, %v1675, 0
    %v1730 = vsel %vm321, %v1725, 0
    %1732 = vmatprep.subr.bf16.mxu0 0
    %1733 = vmatpush1.bf16.msra.mxu0 0
    %1734 = vmatprep.subr.bf16.mxu0 0
    %1735 = vmatpush1.bf16.msra.mxu0 0
    %1736 = vmatprep.subr.bf16.mxu0 0
    %1737 = vmatpush1.bf16.msra.mxu0 0
    %1738 = vmatprep.subr.bf16.mxu0 0
    %1739 = vmatpush1.bf16.msra.mxu0 0
    %1740 = vmatprep.subr.bf16.mxu0 0
    %1741 = vmatpush1.bf16.msra.mxu0 0
    %1742 = vmatprep.subr.bf16.mxu0 0
    %1743 = vmatpush1.bf16.msra.mxu0 0
    %1744 = vmatprep.subr.bf16.mxu0 0
    %1745 = vmatpush1.bf16.msra.mxu0 0
    %1746 = vmatprep.subr.bf16.mxu0 0
    %1747 = vmatpush1.bf16.msra.mxu0 %v1730
    %1748 = vmatprep.subr.bf16.mxu0 0
    %1749 = vmatpush2.bf16.msra.mxu0 0
    %1750 = vmatprep.subr.bf16.mxu0 0
    %1751 = vmatpush2.bf16.msra.mxu0 0
    %1752 = vmatprep.subr.bf16.mxu0 0
    %1753 = vmatpush2.bf16.msra.mxu0 0
    %1754 = vmatprep.subr.bf16.mxu0 0
    %1755 = vmatpush2.bf16.msra.mxu0 0
    %1756 = vmatprep.subr.bf16.mxu0 0
    %1757 = vmatpush2.bf16.msra.mxu0 0
    %1758 = vmatprep.subr.bf16.mxu0 0
    %1759 = vmatpush2.bf16.msra.mxu0 0
    %1760 = vmatprep.subr.bf16.mxu0 0
    %1761 = vmatpush2.bf16.msra.mxu0 0
    %1762 = vmatprep.subr.bf16.mxu0 0
    %1763 = vmatpush2.bf16.msra.mxu0 0
    %1764 = vmatprep.mubr.bf16.mxu0 0
    %1765 = vmatmul.mubr.bf16.gmra.mxu0 %v1727
    %v1766 = vpop.f32.mrf.mxu0
    %v1767 = vadd.f32 0.0, %v1766
    %v1768 = vpop.f32.mrf.mxu0
    %v1769 = vpop.f32.mrf.mxu0
    %v1770 = vpop.f32.mrf.mxu0
    %1771 = vdwg.mxu0
    %1773 = vrot.lane.b32.xlu0 %v1548, 120
    %v1774 = vpop.permute.xlu0 %1773
    %1775 = vrot.lane.b32.xlu0 %v1550, 88
    %v1776 = vpop.permute.xlu0 %1775
    %v1778 = vsel %vm194, %v1774, 0
    %v1781 = vsel %vm194, %v1776, 0
    %1783 = vmatprep.subr.bf16.mxu0 0
    %1784 = vmatpush1.bf16.xpose.msra.mxu0 0
    %1785 = vmatprep.subr.bf16.mxu0 0
    %1786 = vmatpush1.bf16.xpose.msra.mxu0 0
    %1787 = vmatprep.subr.bf16.mxu0 0
    %1788 = vmatpush1.bf16.xpose.msra.mxu0 0
    %1789 = vmatprep.subr.bf16.mxu0 0
    %1790 = vmatpush1.bf16.xpose.msra.mxu0 0
    %1791 = vmatprep.subr.bf16.mxu0 0
    %1792 = vmatpush1.bf16.xpose.msra.mxu0 0
    %1793 = vmatprep.subr.bf16.mxu0 0
    %1794 = vmatpush1.bf16.xpose.msra.mxu0 0
    %1795 = vmatprep.subr.bf16.mxu0 0
    %1796 = vmatpush1.bf16.xpose.msra.mxu0 0
    %1797 = vmatprep.subr.bf16.mxu0 0
    %1798 = vmatpush1.bf16.xpose.msra.mxu0 %v1781
    %1799 = vmatprep.subr.bf16.mxu0 0
    %1800 = vmatpush2.bf16.xpose.msra.mxu0 0
    %1801 = vmatprep.subr.bf16.mxu0 0
    %1802 = vmatpush2.bf16.xpose.msra.mxu0 0
    %1803 = vmatprep.subr.bf16.mxu0 0
    %1804 = vmatpush2.bf16.xpose.msra.mxu0 0
    %1805 = vmatprep.subr.bf16.mxu0 0
    %1806 = vmatpush2.bf16.xpose.msra.mxu0 0
    %1807 = vmatprep.subr.bf16.mxu0 0
    %1808 = vmatpush2.bf16.xpose.msra.mxu0 0
    %1809 = vmatprep.subr.bf16.mxu0 0
    %1810 = vmatpush2.bf16.xpose.msra.mxu0 0
    %1811 = vmatprep.subr.bf16.mxu0 0
    %1812 = vmatpush2.bf16.xpose.msra.mxu0 0
    %1813 = vmatprep.subr.bf16.mxu0 0
    %1814 = vmatpush2.bf16.xpose.msra.mxu0 0
    %1815 = vmatprep.mubr.bf16.mxu0 0
    %1816 = vmatmul.mubr.bf16.gmra.mxu0 %v1778
    %v1817 = vpop.f32.mrf.mxu0
    %v1818 = vadd.f32 0.0, %v1817
    %v1819 = vpop.f32.mrf.mxu0
    %v1820 = vpop.f32.mrf.mxu0
    %v1821 = vpop.f32.mrf.mxu0
    %1822 = vdwg.mxu0
    %1824 = vrot.lane.b32.xlu0 %v1549, 120
    %v1825 = vpop.permute.xlu0 %1824
    %1826 = vrot.lane.b32.xlu0 %v1551, 88
    %v1827 = vpop.permute.xlu0 %1826
    %v1829 = vsel %vm194, %v1825, 0
    %v1832 = vsel %vm194, %v1827, 0
    %1834 = vmatprep.subr.bf16.mxu0 0
    %1835 = vmatpush1.bf16.xpose.msra.mxu0 0
    %1836 = vmatprep.subr.bf16.mxu0 0
    %1837 = vmatpush1.bf16.xpose.msra.mxu0 0
    %1838 = vmatprep.subr.bf16.mxu0 0
    %1839 = vmatpush1.bf16.xpose.msra.mxu0 0
    %1840 = vmatprep.subr.bf16.mxu0 0
    %1841 = vmatpush1.bf16.xpose.msra.mxu0 0
    %1842 = vmatprep.subr.bf16.mxu0 0
    %1843 = vmatpush1.bf16.xpose.msra.mxu0 0
    %1844 = vmatprep.subr.bf16.mxu0 0
    %1845 = vmatpush1.bf16.xpose.msra.mxu0 0
    %1846 = vmatprep.subr.bf16.mxu0 0
    %1847 = vmatpush1.bf16.xpose.msra.mxu0 0
    %1848 = vmatprep.subr.bf16.mxu0 0
    %1849 = vmatpush1.bf16.xpose.msra.mxu0 %v1832
    %1850 = vmatprep.subr.bf16.mxu0 0
    %1851 = vmatpush2.bf16.xpose.msra.mxu0 0
    %1852 = vmatprep.subr.bf16.mxu0 0
    %1853 = vmatpush2.bf16.xpose.msra.mxu0 0
    %1854 = vmatprep.subr.bf16.mxu0 0
    %1855 = vmatpush2.bf16.xpose.msra.mxu0 0
    %1856 = vmatprep.subr.bf16.mxu0 0
    %1857 = vmatpush2.bf16.xpose.msra.mxu0 0
    %1858 = vmatprep.subr.bf16.mxu0 0
    %1859 = vmatpush2.bf16.xpose.msra.mxu0 0
    %1860 = vmatprep.subr.bf16.mxu0 0
    %1861 = vmatpush2.bf16.xpose.msra.mxu0 0
    %1862 = vmatprep.subr.bf16.mxu0 0
    %1863 = vmatpush2.bf16.xpose.msra.mxu0 0
    %1864 = vmatprep.subr.bf16.mxu0 0
    %1865 = vmatpush2.bf16.xpose.msra.mxu0 0
    %1866 = vmatprep.mubr.bf16.mxu0 0
    %1867 = vmatmul.mubr.bf16.gmra.mxu0 %v1829
    %v1868 = vpop.f32.mrf.mxu0
    %v1869 = vadd.f32 0.0, %v1868
    %v1870 = vpop.f32.mrf.mxu0
    %v1871 = vpop.f32.mrf.mxu0
    %v1872 = vpop.f32.mrf.mxu0
    %1873 = vdwg.mxu0
    %v1874 = vsel %vm70, %v1818, -1e+30
    %v1875 = vsel %vm70, %v1869, -1e+30
    %v1876 = vsel %vm194, %v1874, -inf
    %1877 = vmax.xlane.f32.xlu0 %v1876
    %v1878 = vpop.xlane.xlu0 %1877
    %v1879 = vsel %vm194, %v1875, -inf
    %1880 = vmax.xlane.f32.xlu0 %v1879
    %v1881 = vpop.xlane.xlu0 %1880
    %v1882 = vsub.f32 %v1874, %v1878
    %v1883 = vsub.f32 %v1875, %v1881
    %v1884 = vmul.f32 %v1882, 1.442695
    %v1885 = vpow.pop %v1884
    %v1886 = vmul.f32 %v1883, 1.442695
    %v1887 = vpow.pop %v1886
    %v1888 = vsel %vm194, %v1885, 0.0
    %1889 = vadd.xlane.f32.xlu0 %v1888
    %v1890 = vpop.xlane.xlu0 %1889
    %v1891 = vsel %vm194, %v1887, 0.0
    %1892 = vadd.xlane.f32.xlu0 %v1891
    %v1893 = vpop.xlane.xlu0 %1892
    %v1894 = vrcp.pop %v1890
    %v1895 = vrcp.pop %v1893
    %v1896 = vmul.f32 %v1885, %v1894
    %v1897 = vmul.f32 %v1887, %v1895
    %v1898 = vpack.c.bf16 %v1896, %v1896
    %v1899 = vpack.c.bf16 %v1897, %v1897
    %1900 = vrot.lane.b32.xlu0 %v1550, 56
    %v1901 = vpop.permute.xlu0 %1900
    %v1903 = vsel %vm194, %v1898, 0
    %v1906 = vsel %vm321, %v1901, 0
    %1908 = vmatprep.subr.bf16.mxu0 0
    %1909 = vmatpush1.bf16.msra.mxu0 0
    %1910 = vmatprep.subr.bf16.mxu0 0
    %1911 = vmatpush1.bf16.msra.mxu0 0
    %1912 = vmatprep.subr.bf16.mxu0 0
    %1913 = vmatpush1.bf16.msra.mxu0 0
    %1914 = vmatprep.subr.bf16.mxu0 0
    %1915 = vmatpush1.bf16.msra.mxu0 0
    %1916 = vmatprep.subr.bf16.mxu0 0
    %1917 = vmatpush1.bf16.msra.mxu0 0
    %1918 = vmatprep.subr.bf16.mxu0 0
    %1919 = vmatpush1.bf16.msra.mxu0 0
    %1920 = vmatprep.subr.bf16.mxu0 0
    %1921 = vmatpush1.bf16.msra.mxu0 0
    %1922 = vmatprep.subr.bf16.mxu0 0
    %1923 = vmatpush1.bf16.msra.mxu0 %v1906
    %1924 = vmatprep.subr.bf16.mxu0 0
    %1925 = vmatpush2.bf16.msra.mxu0 0
    %1926 = vmatprep.subr.bf16.mxu0 0
    %1927 = vmatpush2.bf16.msra.mxu0 0
    %1928 = vmatprep.subr.bf16.mxu0 0
    %1929 = vmatpush2.bf16.msra.mxu0 0
    %1930 = vmatprep.subr.bf16.mxu0 0
    %1931 = vmatpush2.bf16.msra.mxu0 0
    %1932 = vmatprep.subr.bf16.mxu0 0
    %1933 = vmatpush2.bf16.msra.mxu0 0
    %1934 = vmatprep.subr.bf16.mxu0 0
    %1935 = vmatpush2.bf16.msra.mxu0 0
    %1936 = vmatprep.subr.bf16.mxu0 0
    %1937 = vmatpush2.bf16.msra.mxu0 0
    %1938 = vmatprep.subr.bf16.mxu0 0
    %1939 = vmatpush2.bf16.msra.mxu0 0
    %1940 = vmatprep.mubr.bf16.mxu0 0
    %1941 = vmatmul.mubr.bf16.gmra.mxu0 %v1903
    %v1942 = vpop.f32.mrf.mxu0
    %v1943 = vadd.f32 0.0, %v1942
    %v1944 = vpop.f32.mrf.mxu0
    %v1945 = vpop.f32.mrf.mxu0
    %v1946 = vpop.f32.mrf.mxu0
    %1947 = vdwg.mxu0
    %1948 = vrot.lane.b32.xlu0 %v1551, 56
    %v1949 = vpop.permute.xlu0 %1948
    %v1951 = vsel %vm194, %v1899, 0
    %v1954 = vsel %vm321, %v1949, 0
    %1956 = vmatprep.subr.bf16.mxu0 0
    %1957 = vmatpush1.bf16.msra.mxu0 0
    %1958 = vmatprep.subr.bf16.mxu0 0
    %1959 = vmatpush1.bf16.msra.mxu0 0
    %1960 = vmatprep.subr.bf16.mxu0 0
    %1961 = vmatpush1.bf16.msra.mxu0 0
    %1962 = vmatprep.subr.bf16.mxu0 0
    %1963 = vmatpush1.bf16.msra.mxu0 0
    %1964 = vmatprep.subr.bf16.mxu0 0
    %1965 = vmatpush1.bf16.msra.mxu0 0
    %1966 = vmatprep.subr.bf16.mxu0 0
    %1967 = vmatpush1.bf16.msra.mxu0 0
    %1968 = vmatprep.subr.bf16.mxu0 0
    %1969 = vmatpush1.bf16.msra.mxu0 0
    %1970 = vmatprep.subr.bf16.mxu0 0
    %1971 = vmatpush1.bf16.msra.mxu0 %v1954
    %1972 = vmatprep.subr.bf16.mxu0 0
    %1973 = vmatpush2.bf16.msra.mxu0 0
    %1974 = vmatprep.subr.bf16.mxu0 0
    %1975 = vmatpush2.bf16.msra.mxu0 0
    %1976 = vmatprep.subr.bf16.mxu0 0
    %1977 = vmatpush2.bf16.msra.mxu0 0
    %1978 = vmatprep.subr.bf16.mxu0 0
    %1979 = vmatpush2.bf16.msra.mxu0 0
    %1980 = vmatprep.subr.bf16.mxu0 0
    %1981 = vmatpush2.bf16.msra.mxu0 0
    %1982 = vmatprep.subr.bf16.mxu0 0
    %1983 = vmatpush2.bf16.msra.mxu0 0
    %1984 = vmatprep.subr.bf16.mxu0 0
    %1985 = vmatpush2.bf16.msra.mxu0 0
    %1986 = vmatprep.subr.bf16.mxu0 0
    %1987 = vmatpush2.bf16.msra.mxu0 0
    %1988 = vmatprep.mubr.bf16.mxu0 0
    %1989 = vmatmul.mubr.bf16.gmra.mxu0 %v1951
    %v1990 = vpop.f32.mrf.mxu0
    %v1991 = vadd.f32 0.0, %v1990
    %v1992 = vpop.f32.mrf.mxu0
    %v1993 = vpop.f32.mrf.mxu0
    %v1994 = vpop.f32.mrf.mxu0
    %1995 = vdwg.mxu0
    %1996 = vrot.lane.b32.xlu0 %v1548, 112
    %v1997 = vpop.permute.xlu0 %1996
    %1998 = vrot.lane.b32.xlu0 %v1550, 80
    %v1999 = vpop.permute.xlu0 %1998
    %v2001 = vsel %vm194, %v1997, 0
    %v2004 = vsel %vm194, %v1999, 0
    %2006 = vmatprep.subr.bf16.mxu0 0
    %2007 = vmatpush1.bf16.xpose.msra.mxu0 0
    %2008 = vmatprep.subr.bf16.mxu0 0
    %2009 = vmatpush1.bf16.xpose.msra.mxu0 0
    %2010 = vmatprep.subr.bf16.mxu0 0
    %2011 = vmatpush1.bf16.xpose.msra.mxu0 0
    %2012 = vmatprep.subr.bf16.mxu0 0
    %2013 = vmatpush1.bf16.xpose.msra.mxu0 0
    %2014 = vmatprep.subr.bf16.mxu0 0
    %2015 = vmatpush1.bf16.xpose.msra.mxu0 0
    %2016 = vmatprep.subr.bf16.mxu0 0
    %2017 = vmatpush1.bf16.xpose.msra.mxu0 0
    %2018 = vmatprep.subr.bf16.mxu0 0
    %2019 = vmatpush1.bf16.xpose.msra.mxu0 0
    %2020 = vmatprep.subr.bf16.mxu0 0
    %2021 = vmatpush1.bf16.xpose.msra.mxu0 %v2004
    %2022 = vmatprep.subr.bf16.mxu0 0
    %2023 = vmatpush2.bf16.xpose.msra.mxu0 0
    %2024 = vmatprep.subr.bf16.mxu0 0
    %2025 = vmatpush2.bf16.xpose.msra.mxu0 0
    %2026 = vmatprep.subr.bf16.mxu0 0
    %2027 = vmatpush2.bf16.xpose.msra.mxu0 0
    %2028 = vmatprep.subr.bf16.mxu0 0
    %2029 = vmatpush2.bf16.xpose.msra.mxu0 0
    %2030 = vmatprep.subr.bf16.mxu0 0
    %2031 = vmatpush2.bf16.xpose.msra.mxu0 0
    %2032 = vmatprep.subr.bf16.mxu0 0
    %2033 = vmatpush2.bf16.xpose.msra.mxu0 0
    %2034 = vmatprep.subr.bf16.mxu0 0
    %2035 = vmatpush2.bf16.xpose.msra.mxu0 0
    %2036 = vmatprep.subr.bf16.mxu0 0
    %2037 = vmatpush2.bf16.xpose.msra.mxu0 0
    %2038 = vmatprep.mubr.bf16.mxu0 0
    %2039 = vmatmul.mubr.bf16.gmra.mxu0 %v2001
    %v2040 = vpop.f32.mrf.mxu0
    %v2041 = vadd.f32 0.0, %v2040
    %v2042 = vpop.f32.mrf.mxu0
    %v2043 = vpop.f32.mrf.mxu0
    %v2044 = vpop.f32.mrf.mxu0
    %2045 = vdwg.mxu0
    %2046 = vrot.lane.b32.xlu0 %v1549, 112
    %v2047 = vpop.permute.xlu0 %2046
    %2048 = vrot.lane.b32.xlu0 %v1551, 80
    %v2049 = vpop.permute.xlu0 %2048
    %v2051 = vsel %vm194, %v2047, 0
    %v2054 = vsel %vm194, %v2049, 0
    %2056 = vmatprep.subr.bf16.mxu0 0
    %2057 = vmatpush1.bf16.xpose.msra.mxu0 0
    %2058 = vmatprep.subr.bf16.mxu0 0
    %2059 = vmatpush1.bf16.xpose.msra.mxu0 0
    %2060 = vmatprep.subr.bf16.mxu0 0
    %2061 = vmatpush1.bf16.xpose.msra.mxu0 0
    %2062 = vmatprep.subr.bf16.mxu0 0
    %2063 = vmatpush1.bf16.xpose.msra.mxu0 0
    %2064 = vmatprep.subr.bf16.mxu0 0
    %2065 = vmatpush1.bf16.xpose.msra.mxu0 0
    %2066 = vmatprep.subr.bf16.mxu0 0
    %2067 = vmatpush1.bf16.xpose.msra.mxu0 0
    %2068 = vmatprep.subr.bf16.mxu0 0
    %2069 = vmatpush1.bf16.xpose.msra.mxu0 0
    %2070 = vmatprep.subr.bf16.mxu0 0
    %2071 = vmatpush1.bf16.xpose.msra.mxu0 %v2054
    %2072 = vmatprep.subr.bf16.mxu0 0
    %2073 = vmatpush2.bf16.xpose.msra.mxu0 0
    %2074 = vmatprep.subr.bf16.mxu0 0
    %2075 = vmatpush2.bf16.xpose.msra.mxu0 0
    %2076 = vmatprep.subr.bf16.mxu0 0
    %2077 = vmatpush2.bf16.xpose.msra.mxu0 0
    %2078 = vmatprep.subr.bf16.mxu0 0
    %2079 = vmatpush2.bf16.xpose.msra.mxu0 0
    %2080 = vmatprep.subr.bf16.mxu0 0
    %2081 = vmatpush2.bf16.xpose.msra.mxu0 0
    %2082 = vmatprep.subr.bf16.mxu0 0
    %2083 = vmatpush2.bf16.xpose.msra.mxu0 0
    %2084 = vmatprep.subr.bf16.mxu0 0
    %2085 = vmatpush2.bf16.xpose.msra.mxu0 0
    %2086 = vmatprep.subr.bf16.mxu0 0
    %2087 = vmatpush2.bf16.xpose.msra.mxu0 0
    %2088 = vmatprep.mubr.bf16.mxu0 0
    %2089 = vmatmul.mubr.bf16.gmra.mxu0 %v2051
    %v2090 = vpop.f32.mrf.mxu0
    %v2091 = vadd.f32 0.0, %v2090
    %v2092 = vpop.f32.mrf.mxu0
    %v2093 = vpop.f32.mrf.mxu0
    %v2094 = vpop.f32.mrf.mxu0
    %2095 = vdwg.mxu0
    %v2096 = vsel %vm70, %v2041, -1e+30
    %v2097 = vsel %vm70, %v2091, -1e+30
    %v2098 = vsel %vm194, %v2096, -inf
    %2099 = vmax.xlane.f32.xlu0 %v2098
    %v2100 = vpop.xlane.xlu0 %2099
    %v2101 = vsel %vm194, %v2097, -inf
    %2102 = vmax.xlane.f32.xlu0 %v2101
    %v2103 = vpop.xlane.xlu0 %2102
    %v2104 = vsub.f32 %v2096, %v2100
    %v2105 = vsub.f32 %v2097, %v2103
    %v2106 = vmul.f32 %v2104, 1.442695
    %v2107 = vpow.pop %v2106
    %v2108 = vmul.f32 %v2105, 1.442695
    %v2109 = vpow.pop %v2108
    %v2110 = vsel %vm194, %v2107, 0.0
    %2111 = vadd.xlane.f32.xlu0 %v2110
    %v2112 = vpop.xlane.xlu0 %2111
    %v2113 = vsel %vm194, %v2109, 0.0
    %2114 = vadd.xlane.f32.xlu0 %v2113
    %v2115 = vpop.xlane.xlu0 %2114
    %v2116 = vrcp.pop %v2112
    %v2117 = vrcp.pop %v2115
    %v2118 = vmul.f32 %v2107, %v2116
    %v2119 = vmul.f32 %v2109, %v2117
    %v2120 = vpack.c.bf16 %v2118, %v2118
    %v2121 = vpack.c.bf16 %v2119, %v2119
    %2122 = vrot.lane.b32.xlu0 %v1550, 48
    %v2123 = vpop.permute.xlu0 %2122
    %v2125 = vsel %vm194, %v2120, 0
    %v2128 = vsel %vm321, %v2123, 0
    %2130 = vmatprep.subr.bf16.mxu0 0
    %2131 = vmatpush1.bf16.msra.mxu0 0
    %2132 = vmatprep.subr.bf16.mxu0 0
    %2133 = vmatpush1.bf16.msra.mxu0 0
    %2134 = vmatprep.subr.bf16.mxu0 0
    %2135 = vmatpush1.bf16.msra.mxu0 0
    %2136 = vmatprep.subr.bf16.mxu0 0
    %2137 = vmatpush1.bf16.msra.mxu0 0
    %2138 = vmatprep.subr.bf16.mxu0 0
    %2139 = vmatpush1.bf16.msra.mxu0 0
    %2140 = vmatprep.subr.bf16.mxu0 0
    %2141 = vmatpush1.bf16.msra.mxu0 0
    %2142 = vmatprep.subr.bf16.mxu0 0
    %2143 = vmatpush1.bf16.msra.mxu0 0
    %2144 = vmatprep.subr.bf16.mxu0 0
    %2145 = vmatpush1.bf16.msra.mxu0 %v2128
    %2146 = vmatprep.subr.bf16.mxu0 0
    %2147 = vmatpush2.bf16.msra.mxu0 0
    %2148 = vmatprep.subr.bf16.mxu0 0
    %2149 = vmatpush2.bf16.msra.mxu0 0
    %2150 = vmatprep.subr.bf16.mxu0 0
    %2151 = vmatpush2.bf16.msra.mxu0 0
    %2152 = vmatprep.subr.bf16.mxu0 0
    %2153 = vmatpush2.bf16.msra.mxu0 0
    %2154 = vmatprep.subr.bf16.mxu0 0
    %2155 = vmatpush2.bf16.msra.mxu0 0
    %2156 = vmatprep.subr.bf16.mxu0 0
    %2157 = vmatpush2.bf16.msra.mxu0 0
    %2158 = vmatprep.subr.bf16.mxu0 0
    %2159 = vmatpush2.bf16.msra.mxu0 0
    %2160 = vmatprep.subr.bf16.mxu0 0
    %2161 = vmatpush2.bf16.msra.mxu0 0
    %2162 = vmatprep.mubr.bf16.mxu0 0
    %2163 = vmatmul.mubr.bf16.gmra.mxu0 %v2125
    %v2164 = vpop.f32.mrf.mxu0
    %v2165 = vadd.f32 0.0, %v2164
    %v2166 = vpop.f32.mrf.mxu0
    %v2167 = vpop.f32.mrf.mxu0
    %v2168 = vpop.f32.mrf.mxu0
    %2169 = vdwg.mxu0
    %2170 = vrot.lane.b32.xlu0 %v1551, 48
    %v2171 = vpop.permute.xlu0 %2170
    %v2173 = vsel %vm194, %v2121, 0
    %v2176 = vsel %vm321, %v2171, 0
    %2178 = vmatprep.subr.bf16.mxu0 0
    %2179 = vmatpush1.bf16.msra.mxu0 0
    %2180 = vmatprep.subr.bf16.mxu0 0
    %2181 = vmatpush1.bf16.msra.mxu0 0
    %2182 = vmatprep.subr.bf16.mxu0 0
    %2183 = vmatpush1.bf16.msra.mxu0 0
    %2184 = vmatprep.subr.bf16.mxu0 0
    %2185 = vmatpush1.bf16.msra.mxu0 0
    %2186 = vmatprep.subr.bf16.mxu0 0
    %2187 = vmatpush1.bf16.msra.mxu0 0
    %2188 = vmatprep.subr.bf16.mxu0 0
    %2189 = vmatpush1.bf16.msra.mxu0 0
    %2190 = vmatprep.subr.bf16.mxu0 0
    %2191 = vmatpush1.bf16.msra.mxu0 0
    %2192 = vmatprep.subr.bf16.mxu0 0
    %2193 = vmatpush1.bf16.msra.mxu0 %v2176
    %2194 = vmatprep.subr.bf16.mxu0 0
    %2195 = vmatpush2.bf16.msra.mxu0 0
    %2196 = vmatprep.subr.bf16.mxu0 0
    %2197 = vmatpush2.bf16.msra.mxu0 0
    %2198 = vmatprep.subr.bf16.mxu0 0
    %2199 = vmatpush2.bf16.msra.mxu0 0
    %2200 = vmatprep.subr.bf16.mxu0 0
    %2201 = vmatpush2.bf16.msra.mxu0 0
    %2202 = vmatprep.subr.bf16.mxu0 0
    %2203 = vmatpush2.bf16.msra.mxu0 0
    %2204 = vmatprep.subr.bf16.mxu0 0
    %2205 = vmatpush2.bf16.msra.mxu0 0
    %2206 = vmatprep.subr.bf16.mxu0 0
    %2207 = vmatpush2.bf16.msra.mxu0 0
    %2208 = vmatprep.subr.bf16.mxu0 0
    %2209 = vmatpush2.bf16.msra.mxu0 0
    %2210 = vmatprep.mubr.bf16.mxu0 0
    %2211 = vmatmul.mubr.bf16.gmra.mxu0 %v2173
    %v2212 = vpop.f32.mrf.mxu0
    %v2213 = vadd.f32 0.0, %v2212
    %v2214 = vpop.f32.mrf.mxu0
    %v2215 = vpop.f32.mrf.mxu0
    %v2216 = vpop.f32.mrf.mxu0
    %2217 = vdwg.mxu0
    %2218 = vrot.lane.b32.xlu0 %v1548, 104
    %v2219 = vpop.permute.xlu0 %2218
    %2220 = vrot.lane.b32.xlu0 %v1550, 72
    %v2221 = vpop.permute.xlu0 %2220
    %v2223 = vsel %vm194, %v2219, 0
    %v2226 = vsel %vm194, %v2221, 0
    %2228 = vmatprep.subr.bf16.mxu0 0
    %2229 = vmatpush1.bf16.xpose.msra.mxu0 0
    %2230 = vmatprep.subr.bf16.mxu0 0
    %2231 = vmatpush1.bf16.xpose.msra.mxu0 0
    %2232 = vmatprep.subr.bf16.mxu0 0
    %2233 = vmatpush1.bf16.xpose.msra.mxu0 0
    %2234 = vmatprep.subr.bf16.mxu0 0
    %2235 = vmatpush1.bf16.xpose.msra.mxu0 0
    %2236 = vmatprep.subr.bf16.mxu0 0
    %2237 = vmatpush1.bf16.xpose.msra.mxu0 0
    %2238 = vmatprep.subr.bf16.mxu0 0
    %2239 = vmatpush1.bf16.xpose.msra.mxu0 0
    %2240 = vmatprep.subr.bf16.mxu0 0
    %2241 = vmatpush1.bf16.xpose.msra.mxu0 0
    %2242 = vmatprep.subr.bf16.mxu0 0
    %2243 = vmatpush1.bf16.xpose.msra.mxu0 %v2226
    %2244 = vmatprep.subr.bf16.mxu0 0
    %2245 = vmatpush2.bf16.xpose.msra.mxu0 0
    %2246 = vmatprep.subr.bf16.mxu0 0
    %2247 = vmatpush2.bf16.xpose.msra.mxu0 0
    %2248 = vmatprep.subr.bf16.mxu0 0
    %2249 = vmatpush2.bf16.xpose.msra.mxu0 0
    %2250 = vmatprep.subr.bf16.mxu0 0
    %2251 = vmatpush2.bf16.xpose.msra.mxu0 0
    %2252 = vmatprep.subr.bf16.mxu0 0
    %2253 = vmatpush2.bf16.xpose.msra.mxu0 0
    %2254 = vmatprep.subr.bf16.mxu0 0
    %2255 = vmatpush2.bf16.xpose.msra.mxu0 0
    %2256 = vmatprep.subr.bf16.mxu0 0
    %2257 = vmatpush2.bf16.xpose.msra.mxu0 0
    %2258 = vmatprep.subr.bf16.mxu0 0
    %2259 = vmatpush2.bf16.xpose.msra.mxu0 0
    %2260 = vmatprep.mubr.bf16.mxu0 0
    %2261 = vmatmul.mubr.bf16.gmra.mxu0 %v2223
    %v2262 = vpop.f32.mrf.mxu0
    %v2263 = vadd.f32 0.0, %v2262
    %v2264 = vpop.f32.mrf.mxu0
    %v2265 = vpop.f32.mrf.mxu0
    %v2266 = vpop.f32.mrf.mxu0
    %2267 = vdwg.mxu0
    %2268 = vrot.lane.b32.xlu0 %v1549, 104
    %v2269 = vpop.permute.xlu0 %2268
    %2270 = vrot.lane.b32.xlu0 %v1551, 72
    %v2271 = vpop.permute.xlu0 %2270
    %v2273 = vsel %vm194, %v2269, 0
    %v2276 = vsel %vm194, %v2271, 0
    %2278 = vmatprep.subr.bf16.mxu0 0
    %2279 = vmatpush1.bf16.xpose.msra.mxu0 0
    %2280 = vmatprep.subr.bf16.mxu0 0
    %2281 = vmatpush1.bf16.xpose.msra.mxu0 0
    %2282 = vmatprep.subr.bf16.mxu0 0
    %2283 = vmatpush1.bf16.xpose.msra.mxu0 0
    %2284 = vmatprep.subr.bf16.mxu0 0
    %2285 = vmatpush1.bf16.xpose.msra.mxu0 0
    %2286 = vmatprep.subr.bf16.mxu0 0
    %2287 = vmatpush1.bf16.xpose.msra.mxu0 0
    %2288 = vmatprep.subr.bf16.mxu0 0
    %2289 = vmatpush1.bf16.xpose.msra.mxu0 0
    %2290 = vmatprep.subr.bf16.mxu0 0
    %2291 = vmatpush1.bf16.xpose.msra.mxu0 0
    %2292 = vmatprep.subr.bf16.mxu0 0
    %2293 = vmatpush1.bf16.xpose.msra.mxu0 %v2276
    %2294 = vmatprep.subr.bf16.mxu0 0
    %2295 = vmatpush2.bf16.xpose.msra.mxu0 0
    %2296 = vmatprep.subr.bf16.mxu0 0
    %2297 = vmatpush2.bf16.xpose.msra.mxu0 0
    %2298 = vmatprep.subr.bf16.mxu0 0
    %2299 = vmatpush2.bf16.xpose.msra.mxu0 0
    %2300 = vmatprep.subr.bf16.mxu0 0
    %2301 = vmatpush2.bf16.xpose.msra.mxu0 0
    %2302 = vmatprep.subr.bf16.mxu0 0
    %2303 = vmatpush2.bf16.xpose.msra.mxu0 0
    %2304 = vmatprep.subr.bf16.mxu0 0
    %2305 = vmatpush2.bf16.xpose.msra.mxu0 0
    %2306 = vmatprep.subr.bf16.mxu0 0
    %2307 = vmatpush2.bf16.xpose.msra.mxu0 0
    %2308 = vmatprep.subr.bf16.mxu0 0
    %2309 = vmatpush2.bf16.xpose.msra.mxu0 0
    %2310 = vmatprep.mubr.bf16.mxu0 0
    %2311 = vmatmul.mubr.bf16.gmra.mxu0 %v2273
    %v2312 = vpop.f32.mrf.mxu0
    %v2313 = vadd.f32 0.0, %v2312
    %v2314 = vpop.f32.mrf.mxu0
    %v2315 = vpop.f32.mrf.mxu0
    %v2316 = vpop.f32.mrf.mxu0
    %2317 = vdwg.mxu0
    %v2318 = vsel %vm70, %v2263, -1e+30
    %v2319 = vsel %vm70, %v2313, -1e+30
    %v2320 = vsel %vm194, %v2318, -inf
    %2321 = vmax.xlane.f32.xlu0 %v2320
    %v2322 = vpop.xlane.xlu0 %2321
    %v2323 = vsel %vm194, %v2319, -inf
    %2324 = vmax.xlane.f32.xlu0 %v2323
    %v2325 = vpop.xlane.xlu0 %2324
    %v2326 = vsub.f32 %v2318, %v2322
    %v2327 = vsub.f32 %v2319, %v2325
    %v2328 = vmul.f32 %v2326, 1.442695
    %v2329 = vpow.pop %v2328
    %v2330 = vmul.f32 %v2327, 1.442695
    %v2331 = vpow.pop %v2330
    %v2332 = vsel %vm194, %v2329, 0.0
    %2333 = vadd.xlane.f32.xlu0 %v2332
    %v2334 = vpop.xlane.xlu0 %2333
    %v2335 = vsel %vm194, %v2331, 0.0
    %2336 = vadd.xlane.f32.xlu0 %v2335
    %v2337 = vpop.xlane.xlu0 %2336
    %v2338 = vrcp.pop %v2334
    %v2339 = vrcp.pop %v2337
    %v2340 = vmul.f32 %v2329, %v2338
    %v2341 = vmul.f32 %v2331, %v2339
    %v2342 = vpack.c.bf16 %v2340, %v2340
    %v2343 = vpack.c.bf16 %v2341, %v2341
    %2344 = vrot.lane.b32.xlu0 %v1550, 40
    %v2345 = vpop.permute.xlu0 %2344
    %v2347 = vsel %vm194, %v2342, 0
    %v2350 = vsel %vm321, %v2345, 0
    %2352 = vmatprep.subr.bf16.mxu0 0
    %2353 = vmatpush1.bf16.msra.mxu0 0
    %2354 = vmatprep.subr.bf16.mxu0 0
    %2355 = vmatpush1.bf16.msra.mxu0 0
    %2356 = vmatprep.subr.bf16.mxu0 0
    %2357 = vmatpush1.bf16.msra.mxu0 0
    %2358 = vmatprep.subr.bf16.mxu0 0
    %2359 = vmatpush1.bf16.msra.mxu0 0
    %2360 = vmatprep.subr.bf16.mxu0 0
    %2361 = vmatpush1.bf16.msra.mxu0 0
    %2362 = vmatprep.subr.bf16.mxu0 0
    %2363 = vmatpush1.bf16.msra.mxu0 0
    %2364 = vmatprep.subr.bf16.mxu0 0
    %2365 = vmatpush1.bf16.msra.mxu0 0
    %2366 = vmatprep.subr.bf16.mxu0 0
    %2367 = vmatpush1.bf16.msra.mxu0 %v2350
    %2368 = vmatprep.subr.bf16.mxu0 0
    %2369 = vmatpush2.bf16.msra.mxu0 0
    %2370 = vmatprep.subr.bf16.mxu0 0
    %2371 = vmatpush2.bf16.msra.mxu0 0
    %2372 = vmatprep.subr.bf16.mxu0 0
    %2373 = vmatpush2.bf16.msra.mxu0 0
    %2374 = vmatprep.subr.bf16.mxu0 0
    %2375 = vmatpush2.bf16.msra.mxu0 0
    %2376 = vmatprep.subr.bf16.mxu0 0
    %2377 = vmatpush2.bf16.msra.mxu0 0
    %2378 = vmatprep.subr.bf16.mxu0 0
    %2379 = vmatpush2.bf16.msra.mxu0 0
    %2380 = vmatprep.subr.bf16.mxu0 0
    %2381 = vmatpush2.bf16.msra.mxu0 0
    %2382 = vmatprep.subr.bf16.mxu0 0
    %2383 = vmatpush2.bf16.msra.mxu0 0
    %2384 = vmatprep.mubr.bf16.mxu0 0
    %2385 = vmatmul.mubr.bf16.gmra.mxu0 %v2347
    %v2386 = vpop.f32.mrf.mxu0
    %v2387 = vadd.f32 0.0, %v2386
    %v2388 = vpop.f32.mrf.mxu0
    %v2389 = vpop.f32.mrf.mxu0
    %v2390 = vpop.f32.mrf.mxu0
    %2391 = vdwg.mxu0
    %2392 = vrot.lane.b32.xlu0 %v1551, 40
    %v2393 = vpop.permute.xlu0 %2392
    %v2395 = vsel %vm194, %v2343, 0
    %v2398 = vsel %vm321, %v2393, 0
    %2400 = vmatprep.subr.bf16.mxu0 0
    %2401 = vmatpush1.bf16.msra.mxu0 0
    %2402 = vmatprep.subr.bf16.mxu0 0
    %2403 = vmatpush1.bf16.msra.mxu0 0
    %2404 = vmatprep.subr.bf16.mxu0 0
    %2405 = vmatpush1.bf16.msra.mxu0 0
    %2406 = vmatprep.subr.bf16.mxu0 0
    %2407 = vmatpush1.bf16.msra.mxu0 0
    %2408 = vmatprep.subr.bf16.mxu0 0
    %2409 = vmatpush1.bf16.msra.mxu0 0
    %2410 = vmatprep.subr.bf16.mxu0 0
    %2411 = vmatpush1.bf16.msra.mxu0 0
    %2412 = vmatprep.subr.bf16.mxu0 0
    %2413 = vmatpush1.bf16.msra.mxu0 0
    %2414 = vmatprep.subr.bf16.mxu0 0
    %2415 = vmatpush1.bf16.msra.mxu0 %v2398
    %2416 = vmatprep.subr.bf16.mxu0 0
    %2417 = vmatpush2.bf16.msra.mxu0 0
    %2418 = vmatprep.subr.bf16.mxu0 0
    %2419 = vmatpush2.bf16.msra.mxu0 0
    %2420 = vmatprep.subr.bf16.mxu0 0
    %2421 = vmatpush2.bf16.msra.mxu0 0
    %2422 = vmatprep.subr.bf16.mxu0 0
    %2423 = vmatpush2.bf16.msra.mxu0 0
    %2424 = vmatprep.subr.bf16.mxu0 0
    %2425 = vmatpush2.bf16.msra.mxu0 0
    %2426 = vmatprep.subr.bf16.mxu0 0
    %2427 = vmatpush2.bf16.msra.mxu0 0
    %2428 = vmatprep.subr.bf16.mxu0 0
    %2429 = vmatpush2.bf16.msra.mxu0 0
    %2430 = vmatprep.subr.bf16.mxu0 0
    %2431 = vmatpush2.bf16.msra.mxu0 0
    %2432 = vmatprep.mubr.bf16.mxu0 0
    %2433 = vmatmul.mubr.bf16.gmra.mxu0 %v2395
    %v2434 = vpop.f32.mrf.mxu0
    %v2435 = vadd.f32 0.0, %v2434
    %v2436 = vpop.f32.mrf.mxu0
    %v2437 = vpop.f32.mrf.mxu0
    %v2438 = vpop.f32.mrf.mxu0
    %2439 = vdwg.mxu0
    %2442 = vrot.lane.b32.xlu0 %v1943, 8
    %v2443 = vpop.permute.xlu0 %2442
    %2444 = vrot.lane.b32.xlu0 %v1991, 8
    %v2445 = vpop.permute.xlu0 %2444
    %2450 = vrot.lane.b32.xlu0 %v2165, 16
    %v2451 = vpop.permute.xlu0 %2450
    %2452 = vrot.lane.b32.xlu0 %v2213, 16
    %v2453 = vpop.permute.xlu0 %2452
    %2458 = vrot.lane.b32.xlu0 %v2387, 24
    %v2459 = vpop.permute.xlu0 %2458
    %2460 = vrot.lane.b32.xlu0 %v2435, 24
    %v2461 = vpop.permute.xlu0 %2460
    %v2464 = vsel %vm194, %v1719, %v2443
    %v2465 = vsel %vm194, %v1767, %v2445
    %v2466 = vsel %vm1107, %v2464, %v2451
    %v2467 = vsel %vm1107, %v2465, %v2453
    %v2468 = vsel %vm1110, %v2466, %v2459
    %v2469 = vsel %vm1110, %v2467, %v2461
    %v2470 = vpack.c.bf16 %v2469, %v2468
    %s2471 = scalar_lea.vmem %s7, 16
    %v2472 = vld [vmem:[%s2471] sm:$0xf]
    %v2473 = vld [vmem:[%s2471 + $0x4] sm:$0xf]
    %v2474 = vld [vmem:[%s2471 + $0x8] sm:$0xf]
    %v2475 = vld [vmem:[%s2471 + $0xc] sm:$0xf]
    %v2480 = vunpack.c.l.b16 %v2472
    %v2481 = vunpack.c.l.b16 %v2473
    %v2482 = vunpack.c.l.b16 %v2474
    %v2483 = vunpack.c.l.b16 %v2475
    %v2484 = vpack.c.b16 %v2481, %v2480
    %v2485 = vpack.c.b16 %v2483, %v2482
    %v2489 = vsel %vm73, %v2470, 0
    %2491 = vmatprep.subr.bf16.mxu0 0
    %2492 = vmatpush1.bf16.msra.mxu0 0
    %2493 = vmatprep.subr.bf16.mxu0 0
    %2494 = vmatpush1.bf16.msra.mxu0 0
    %2495 = vmatprep.subr.bf16.mxu0 0
    %2496 = vmatpush1.bf16.msra.mxu0 0
    %2497 = vmatprep.subr.bf16.mxu0 0
    %2498 = vmatpush1.bf16.msra.mxu0 0
    %2499 = vmatprep.subr.bf16.mxu0 0
    %2500 = vmatpush1.bf16.msra.mxu0 0
    %2501 = vmatprep.subr.bf16.mxu0 0
    %2502 = vmatpush1.bf16.msra.mxu0 0
    %2503 = vmatprep.subr.bf16.mxu0 0
    %2504 = vmatpush1.bf16.msra.mxu0 %v2485
    %2505 = vmatprep.subr.bf16.mxu0 0
    %2506 = vmatpush1.bf16.msra.mxu0 %v2484
    %2507 = vmatprep.subr.bf16.mxu0 0
    %2508 = vmatpush2.bf16.msra.mxu0 0
    %2509 = vmatprep.subr.bf16.mxu0 0
    %2510 = vmatpush2.bf16.msra.mxu0 0
    %2511 = vmatprep.subr.bf16.mxu0 0
    %2512 = vmatpush2.bf16.msra.mxu0 0
    %2513 = vmatprep.subr.bf16.mxu0 0
    %2514 = vmatpush2.bf16.msra.mxu0 0
    %2515 = vmatprep.subr.bf16.mxu0 0
    %2516 = vmatpush2.bf16.msra.mxu0 0
    %2517 = vmatprep.subr.bf16.mxu0 0
    %2518 = vmatpush2.bf16.msra.mxu0 0
    %2519 = vmatprep.subr.bf16.mxu0 0
    %2520 = vmatpush2.bf16.msra.mxu0 0
    %2521 = vmatprep.subr.bf16.mxu0 0
    %2522 = vmatpush2.bf16.msra.mxu0 0
    %2523 = vmatprep.mubr.bf16.mxu0 0
    %2524 = vmatmul.mubr.bf16.gmra.mxu0 %v2489
    %v2525 = vpop.f32.mrf.mxu0
    %v2526 = vadd.f32 0.0, %v2525
    %v2527 = vpop.f32.mrf.mxu0
    %v2528 = vpop.f32.mrf.mxu0
    %v2529 = vadd.f32 0.0, %v2528
    %v2530 = vpop.f32.mrf.mxu0
    %2531 = vdwg.mxu0
    %v2532 = vadd.f32 %v1428, %v2526
    %v2533 = vadd.f32 %v1429, %v2529
    %s2534 = scalar_lea.vmem %s8, 1
    %v2535 = vld [vmem:[%s2534] sm:$0x1]
    %v2537 = vlaneseq
    %v2538 = vshrl.u32 %v2537, 7
    %v2539 = vsub.s32 0, %v2538
    %v2540 = vrot.slane %v2535, %v2539
    %v2542 = vadd.f32 %v2532, %v2540
    %v2543 = vadd.f32 %v2533, %v2540
    %s2544 = scalar_lea.vmem %s9, 1
    %v2545 = vld [vmem:[%s2544] sm:$0x1]
    %s2546 = scalar_lea.vmem %s10, 1
    %v2547 = vld [vmem:[%s2546] sm:$0x1]
    %v2548 = vsel %vm73, %v2542, 0.0
    %2549 = vadd.xlane.f32.xlu0 %v2548
    %v2550 = vpop.xlane.xlu0 %2549
    %v2551 = vsel %vm73, %v2543, 0.0
    %2552 = vadd.xlane.f32.xlu0 %v2551
    %v2553 = vpop.xlane.xlu0 %2552
    %v2554 = vmul.f32 %v2550, %v80
    %v2555 = vmul.f32 %v2553, %v80
    %v2556 = vsub.f32 %v2542, %v2554
    %v2557 = vsub.f32 %v2543, %v2555
    %v2558 = vmul.f32 %v2556, %v2556
    %v2559 = vmul.f32 %v2557, %v2557
    %v2560 = vsel %vm73, %v2558, 0.0
    %2561 = vadd.xlane.f32.xlu0 %v2560
    %v2562 = vpop.xlane.xlu0 %2561
    %v2563 = vsel %vm73, %v2559, 0.0
    %2564 = vadd.xlane.f32.xlu0 %v2563
    %v2565 = vpop.xlane.xlu0 %2564
    %v2566 = vmul.f32 %v2562, %v80
    %v2567 = vmul.f32 %v2565, %v80
    %v2568 = vadd.f32 %v2566, 1e-05
    %v2569 = vadd.f32 %v2567, 1e-05
    %v2570 = vrsqrt.pop %v2568
    %v2571 = vrsqrt.pop %v2569
    %v2572 = vmul.f32 %v2556, %v2570
    %v2573 = vmul.f32 %v2557, %v2571
    %v2575 = vlaneseq
    %v2576 = vshrl.u32 %v2575, 7
    %v2577 = vsub.s32 0, %v2576
    %v2578 = vrot.slane %v2545, %v2577
    %v2580 = vmul.f32 %v2572, %v2578
    %v2581 = vmul.f32 %v2573, %v2578
    %v2583 = vlaneseq
    %v2584 = vshrl.u32 %v2583, 7
    %v2585 = vsub.s32 0, %v2584
    %v2586 = vrot.slane %v2547, %v2585
    %v2588 = vadd.f32 %v2580, %v2586
    %v2589 = vadd.f32 %v2581, %v2586
    %v2590 = vpack.c.bf16 %v2589, %v2588
    %s2591 = scalar_lea.vmem %s11, 16
    %v2592 = vld [vmem:[%s2591] sm:$0xf]
    %v2593 = vld [vmem:[%s2591 + $0x4] sm:$0xf]
    %v2594 = vld [vmem:[%s2591 + $0x8] sm:$0xf]
    %v2595 = vld [vmem:[%s2591 + $0xc] sm:$0xf]
    %s2596 = scalar_lea.vmem %s12, 1
    %v2597 = vld [vmem:[%s2596] sm:$0x1]
    %v2599 = vlaneseq
    %v2600 = vshrl.u32 %v2599, 7
    %v2601 = vsub.s32 0, %v2600
    %v2602 = vrot.slane %v2597, %v2601
    %v2608 = vunpack.c.l.b16 %v2592
    %v2609 = vunpack.c.l.b16 %v2593
    %v2610 = vunpack.c.l.b16 %v2594
    %v2611 = vunpack.c.l.b16 %v2595
    %v2612 = vpack.c.b16 %v2609, %v2608
    %v2613 = vpack.c.b16 %v2611, %v2610
    %v2617 = vsel %vm73, %v2590, 0
    %2619 = vmatprep.subr.bf16.mxu0 0
    %2620 = vmatpush1.bf16.msra.mxu0 0
    %2621 = vmatprep.subr.bf16.mxu0 0
    %2622 = vmatpush1.bf16.msra.mxu0 0
    %2623 = vmatprep.subr.bf16.mxu0 0
    %2624 = vmatpush1.bf16.msra.mxu0 0
    %2625 = vmatprep.subr.bf16.mxu0 0
    %2626 = vmatpush1.bf16.msra.mxu0 0
    %2627 = vmatprep.subr.bf16.mxu0 0
    %2628 = vmatpush1.bf16.msra.mxu0 0
    %2629 = vmatprep.subr.bf16.mxu0 0
    %2630 = vmatpush1.bf16.msra.mxu0 0
    %2631 = vmatprep.subr.bf16.mxu0 0
    %2632 = vmatpush1.bf16.msra.mxu0 %v2613
    %2633 = vmatprep.subr.bf16.mxu0 0
    %2634 = vmatpush1.bf16.msra.mxu0 %v2612
    %2635 = vmatprep.subr.bf16.mxu0 0
    %2636 = vmatpush2.bf16.msra.mxu0 0
    %2637 = vmatprep.subr.bf16.mxu0 0
    %2638 = vmatpush2.bf16.msra.mxu0 0
    %2639 = vmatprep.subr.bf16.mxu0 0
    %2640 = vmatpush2.bf16.msra.mxu0 0
    %2641 = vmatprep.subr.bf16.mxu0 0
    %2642 = vmatpush2.bf16.msra.mxu0 0
    %2643 = vmatprep.subr.bf16.mxu0 0
    %2644 = vmatpush2.bf16.msra.mxu0 0
    %2645 = vmatprep.subr.bf16.mxu0 0
    %2646 = vmatpush2.bf16.msra.mxu0 0
    %2647 = vmatprep.subr.bf16.mxu0 0
    %2648 = vmatpush2.bf16.msra.mxu0 0
    %2649 = vmatprep.subr.bf16.mxu0 0
    %2650 = vmatpush2.bf16.msra.mxu0 0
    %2651 = vmatprep.mubr.bf16.mxu0 0
    %2652 = vmatmul.mubr.bf16.gmra.mxu0 %v2617
    %v2653 = vpop.f32.mrf.mxu0
    %v2654 = vadd.f32 %v2602, %v2653
    %v2655 = vpop.f32.mrf.mxu0
    %v2656 = vpop.f32.mrf.mxu0
    %v2657 = vadd.f32 %v2602, %v2656
    %v2658 = vpop.f32.mrf.mxu0
    %2659 = vdwg.mxu0
    %v2660 = vmul.f32 %v2654, 1.702
    %v2661 = vmul.f32 %v2657, 1.702
    %v2662 = vxor.u32 %v2660, 2147483648
    %v2663 = vxor.u32 %v2661, 2147483648
    %v2664 = vmul.f32 %v2662, 1.442695
    %v2665 = vpow.pop %v2664
    %v2666 = vmul.f32 %v2663, 1.442695
    %v2667 = vpow.pop %v2666
    %v2668 = vadd.f32 %v2665, 1.0
    %v2669 = vadd.f32 %v2667, 1.0
    %v2670 = vrcp.pop %v2668
    %v2671 = vmul.f32 1.0, %v2670
    %v2672 = vrcp.pop %v2669
    %v2673 = vmul.f32 1.0, %v2672
    %v2674 = vmul.f32 %v2654, %v2671
    %v2675 = vmul.f32 %v2657, %v2673
    %v2676 = vpack.c.bf16 %v2675, %v2674
    %s2677 = scalar_lea.vmem %s13, 64
    %v2678 = vld [vmem:[%s2677] sm:$0xf]
    %v2679 = vld [vmem:[%s2677 + $0x4] sm:$0xf]
    %v2680 = vld [vmem:[%s2677 + $0x8] sm:$0xf]
    %v2681 = vld [vmem:[%s2677 + $0xc] sm:$0xf]
    %v2682 = vld [vmem:[%s2677 + $0x10] sm:$0xf]
    %v2683 = vld [vmem:[%s2677 + $0x14] sm:$0xf]
    %v2684 = vld [vmem:[%s2677 + $0x18] sm:$0xf]
    %v2685 = vld [vmem:[%s2677 + $0x1c] sm:$0xf]
    %v2686 = vld [vmem:[%s2677 + $0x20] sm:$0xf]
    %v2687 = vld [vmem:[%s2677 + $0x24] sm:$0xf]
    %v2688 = vld [vmem:[%s2677 + $0x28] sm:$0xf]
    %v2689 = vld [vmem:[%s2677 + $0x2c] sm:$0xf]
    %v2690 = vld [vmem:[%s2677 + $0x30] sm:$0xf]
    %v2691 = vld [vmem:[%s2677 + $0x34] sm:$0xf]
    %v2692 = vld [vmem:[%s2677 + $0x38] sm:$0xf]
    %v2693 = vld [vmem:[%s2677 + $0x3c] sm:$0xf]
    %v2710 = vunpack.c.l.b16 %v2678
    %v2711 = vunpack.c.l.b16 %v2679
    %v2712 = vunpack.c.l.b16 %v2680
    %v2713 = vunpack.c.l.b16 %v2681
    %v2714 = vunpack.c.l.b16 %v2682
    %v2715 = vunpack.c.l.b16 %v2683
    %v2716 = vunpack.c.l.b16 %v2684
    %v2717 = vunpack.c.l.b16 %v2685
    %v2718 = vunpack.c.l.b16 %v2686
    %v2719 = vunpack.c.l.b16 %v2687
    %v2720 = vunpack.c.l.b16 %v2688
    %v2721 = vunpack.c.l.b16 %v2689
    %v2722 = vunpack.c.l.b16 %v2690
    %v2723 = vunpack.c.l.b16 %v2691
    %v2724 = vunpack.c.l.b16 %v2692
    %v2725 = vunpack.c.l.b16 %v2693
    %v2726 = vpack.c.b16 %v2711, %v2710
    %v2727 = vpack.c.b16 %v2713, %v2712
    %v2728 = vpack.c.b16 %v2715, %v2714
    %v2729 = vpack.c.b16 %v2717, %v2716
    %v2730 = vpack.c.b16 %v2719, %v2718
    %v2731 = vpack.c.b16 %v2721, %v2720
    %v2732 = vpack.c.b16 %v2723, %v2722
    %v2733 = vpack.c.b16 %v2725, %v2724
    %2742 = vmatprep.subr.bf16.mxu0 0
    %2743 = vmatpush1.bf16.msra.mxu0 %v2733
    %2744 = vmatprep.subr.bf16.mxu0 0
    %2745 = vmatpush1.bf16.msra.mxu0 %v2732
    %2746 = vmatprep.subr.bf16.mxu0 0
    %2747 = vmatpush1.bf16.msra.mxu0 %v2731
    %2748 = vmatprep.subr.bf16.mxu0 0
    %2749 = vmatpush1.bf16.msra.mxu0 %v2730
    %2750 = vmatprep.subr.bf16.mxu0 0
    %2751 = vmatpush1.bf16.msra.mxu0 %v2729
    %2752 = vmatprep.subr.bf16.mxu0 0
    %2753 = vmatpush1.bf16.msra.mxu0 %v2728
    %2754 = vmatprep.subr.bf16.mxu0 0
    %2755 = vmatpush1.bf16.msra.mxu0 %v2727
    %2756 = vmatprep.subr.bf16.mxu0 0
    %2757 = vmatpush1.bf16.msra.mxu0 %v2726
    %2758 = vmatprep.subr.bf16.mxu0 0
    %2759 = vmatpush2.bf16.msra.mxu0 0
    %2760 = vmatprep.subr.bf16.mxu0 0
    %2761 = vmatpush2.bf16.msra.mxu0 0
    %2762 = vmatprep.subr.bf16.mxu0 0
    %2763 = vmatpush2.bf16.msra.mxu0 0
    %2764 = vmatprep.subr.bf16.mxu0 0
    %2765 = vmatpush2.bf16.msra.mxu0 0
    %2766 = vmatprep.subr.bf16.mxu0 0
    %2767 = vmatpush2.bf16.msra.mxu0 0
    %2768 = vmatprep.subr.bf16.mxu0 0
    %2769 = vmatpush2.bf16.msra.mxu0 0
    %2770 = vmatprep.subr.bf16.mxu0 0
    %2771 = vmatpush2.bf16.msra.mxu0 0
    %2772 = vmatprep.subr.bf16.mxu0 0
    %2773 = vmatpush2.bf16.msra.mxu0 0
    %2774 = vmatprep.mubr.bf16.mxu0 0
    %2775 = vmatmul.mubr.bf16.gmra.mxu0 %v2676
    %v2776 = vpop.f32.mrf.mxu0
    %v2777 = vadd.f32 0.0, %v2776
    %v2778 = vpop.f32.mrf.mxu0
    %v2779 = vpop.f32.mrf.mxu0
    %v2780 = vadd.f32 0.0, %v2779
    %v2781 = vpop.f32.mrf.mxu0
    %2782 = vdwg.mxu0
    %v2783 = vadd.f32 %v2542, %v2777
    %v2784 = vadd.f32 %v2543, %v2780
    %s2785 = scalar_lea.vmem %s14, 1
    %v2786 = vld [vmem:[%s2785] sm:$0x1]
    %v2788 = vlaneseq
    %v2789 = vshrl.u32 %v2788, 7
    %v2790 = vsub.s32 0, %v2789
    %v2791 = vrot.slane %v2786, %v2790
    %v2793 = vadd.f32 %v2783, %v2791
    %v2794 = vadd.f32 %v2784, %v2791
    %v2795 = vld [vmem:[%s2] sm:$0x3]
    %v2796 = vmul.u32 %v67, 8
    %2797 = vset.pattern.permute.xlu0 0
    %2798 = vperm.xlu0 %2797, %v2795
    %v2799 = vpop.permute.xlu0 %2798
    %v2800 = vadd.s32 %v2796, %v2799
    %vm2801 = vcmp.eq.s32.totalorder %v69, %v2800
    %v2802 = vsel %vm2801, 1, 0
    %v2803 = vcvt.s32.f32 %v2802
    %v2805 = vsel %vm1107, %v2803, 0
    %2807 = vmatprep.subr.mxu0 0.0
    %2808 = vmatpush1.msra.mxu0 0.0
    %2809 = vmatprep.subr.mxu0 0.0
    %2810 = vmatpush1.msra.mxu0 0.0
    %2811 = vmatprep.subr.mxu0 0.0
    %2812 = vmatpush1.msra.mxu0 0.0
    %2813 = vmatprep.subr.mxu0 0.0
    %2814 = vmatpush1.msra.mxu0 0.0
    %2815 = vmatprep.subr.mxu0 0.0
    %2816 = vmatpush1.msra.mxu0 0.0
    %2817 = vmatprep.subr.mxu0 0.0
    %2818 = vmatpush1.msra.mxu0 0.0
    %2819 = vmatprep.subr.mxu0 0.0
    %2820 = vmatpush1.msra.mxu0 0.0
    %2821 = vmatprep.subr.mxu0 0.0
    %2822 = vmatpush1.msra.mxu0 0.0
    %2823 = vmatprep.subr.mxu0 0.0
    %2824 = vmatpush1.msra.mxu0 0.0
    %2825 = vmatprep.subr.mxu0 0.0
    %2826 = vmatpush1.msra.mxu0 0.0
    %2827 = vmatprep.subr.mxu0 0.0
    %2828 = vmatpush1.msra.mxu0 0.0
    %2829 = vmatprep.subr.mxu0 0.0
    %2830 = vmatpush1.msra.mxu0 0.0
    %2831 = vmatprep.subr.mxu0 0.0
    %2832 = vmatpush1.msra.mxu0 0.0
    %2833 = vmatprep.subr.mxu0 0.0
    %2834 = vmatpush1.msra.mxu0 0.0
    %2835 = vmatprep.subr.mxu0 0.0
    %2836 = vmatpush1.msra.mxu0 %v2794
    %2837 = vmatprep.subr.mxu0 0.0
    %2838 = vmatpush1.msra.mxu0 %v2793
    %2839 = vmatprep.subr.mxu0 0.0
    %2840 = vmatpush2.msra.mxu0 0.0
    %2841 = vmatprep.subr.mxu0 0.0
    %2842 = vmatpush2.msra.mxu0 0.0
    %2843 = vmatprep.subr.mxu0 0.0
    %2844 = vmatpush2.msra.mxu0 0.0
    %2845 = vmatprep.subr.mxu0 0.0
    %2846 = vmatpush2.msra.mxu0 0.0
    %2847 = vmatprep.subr.mxu0 0.0
    %2848 = vmatpush2.msra.mxu0 0.0
    %2849 = vmatprep.subr.mxu0 0.0
    %2850 = vmatpush2.msra.mxu0 0.0
    %2851 = vmatprep.subr.mxu0 0.0
    %2852 = vmatpush2.msra.mxu0 0.0
    %2853 = vmatprep.subr.mxu0 0.0
    %2854 = vmatpush2.msra.mxu0 0.0
    %2855 = vmatprep.subr.mxu0 0.0
    %2856 = vmatpush2.msra.mxu0 0.0
    %2857 = vmatprep.subr.mxu0 0.0
    %2858 = vmatpush2.msra.mxu0 0.0
    %2859 = vmatprep.subr.mxu0 0.0
    %2860 = vmatpush2.msra.mxu0 0.0
    %2861 = vmatprep.subr.mxu0 0.0
    %2862 = vmatpush2.msra.mxu0 0.0
    %2863 = vmatprep.subr.mxu0 0.0
    %2864 = vmatpush2.msra.mxu0 0.0
    %2865 = vmatprep.subr.mxu0 0.0
    %2866 = vmatpush2.msra.mxu0 0.0
    %2867 = vmatprep.subr.mxu0 0.0
    %2868 = vmatpush2.msra.mxu0 0.0
    %2869 = vmatprep.subr.mxu0 0.0
    %2870 = vmatpush2.msra.mxu0 0.0
    %2871 = vmatprep.mubr.f32.mxu0 0.0
    %2872 = vmatmul.mubr.f32.gmra.mxu0 %v2805
    %v2873 = vpop.f32.mrf.mxu0
    %v2874 = vadd.f32 0.0, %v2873
    %v2875 = vpop.f32.mrf.mxu0
    %2876 = vdwg.mxu0
    %v2877 = vld [vmem:[%s15] sm:$0x1]
    %v2878 = vld [vmem:[%s16] sm:$0x1]
    %vm2879 = vcmask 254976
    %v2880 = vsel %vm2879, %v2874, 0.0
    %2881 = vadd.xlane.f32.xlu0 %v2880
    %v2882 = vpop.xlane.xlu0 %2881
    %v2883 = vmul.f32 %v2882, %v80
    %v2884 = vsub.f32 %v2874, %v2883
    %v2885 = vmul.f32 %v2884, %v2884
    %v2886 = vsel %vm2879, %v2885, 0.0
    %2887 = vadd.xlane.f32.xlu0 %v2886
    %v2888 = vpop.xlane.xlu0 %2887
    %v2889 = vmul.f32 %v2888, %v80
    %v2890 = vadd.f32 %v2889, 1e-05
    %v2891 = vrsqrt.pop %v2890
    %v2892 = vmul.f32 %v2884, %v2891
    %v2894 = vlaneseq
    %v2895 = vshrl.u32 %v2894, 7
    %v2896 = vsub.s32 0, %v2895
    %v2897 = vrot.slane %v2877, %v2896
    %v2899 = vmul.f32 %v2892, %v2897
    %v2901 = vlaneseq
    %v2902 = vshrl.u32 %v2901, 7
    %v2903 = vsub.s32 0, %v2902
    %v2904 = vrot.slane %v2878, %v2903
    %v2906 = vadd.f32 %v2899, %v2904
    %v2907 = vpack.c.bf16 %v2906, %v2906
    %v2908 = vld [vmem:[%s17] sm:$0xf]
    %v2909 = vld [vmem:[%s17 + $0x4] sm:$0xf]
    %v2910 = vld [vmem:[%s17 + $0x8] sm:$0xf]
    %v2911 = vld [vmem:[%s17 + $0xc] sm:$0xf]
    %v2916 = vunpack.c.l.b16 %v2908
    %v2917 = vunpack.c.l.b16 %v2909
    %v2918 = vunpack.c.l.b16 %v2910
    %v2919 = vunpack.c.l.b16 %v2911
    %v2920 = vpack.c.b16 %v2917, %v2916
    %v2921 = vpack.c.b16 %v2919, %v2918
    %v2925 = vsel %vm73, %v2907, 0
    %2927 = vmatprep.subr.bf16.mxu0 0
    %2928 = vmatpush1.bf16.msra.mxu0 0
    %2929 = vmatprep.subr.bf16.mxu0 0
    %2930 = vmatpush1.bf16.msra.mxu0 0
    %2931 = vmatprep.subr.bf16.mxu0 0
    %2932 = vmatpush1.bf16.msra.mxu0 0
    %2933 = vmatprep.subr.bf16.mxu0 0
    %2934 = vmatpush1.bf16.msra.mxu0 0
    %2935 = vmatprep.subr.bf16.mxu0 0
    %2936 = vmatpush1.bf16.msra.mxu0 0
    %2937 = vmatprep.subr.bf16.mxu0 0
    %2938 = vmatpush1.bf16.msra.mxu0 0
    %2939 = vmatprep.subr.bf16.mxu0 0
    %2940 = vmatpush1.bf16.msra.mxu0 %v2921
    %2941 = vmatprep.subr.bf16.mxu0 0
    %2942 = vmatpush1.bf16.msra.mxu0 %v2920
    %2943 = vmatprep.subr.bf16.mxu0 0
    %2944 = vmatpush2.bf16.msra.mxu0 0
    %2945 = vmatprep.subr.bf16.mxu0 0
    %2946 = vmatpush2.bf16.msra.mxu0 0
    %2947 = vmatprep.subr.bf16.mxu0 0
    %2948 = vmatpush2.bf16.msra.mxu0 0
    %2949 = vmatprep.subr.bf16.mxu0 0
    %2950 = vmatpush2.bf16.msra.mxu0 0
    %2951 = vmatprep.subr.bf16.mxu0 0
    %2952 = vmatpush2.bf16.msra.mxu0 0
    %2953 = vmatprep.subr.bf16.mxu0 0
    %2954 = vmatpush2.bf16.msra.mxu0 0
    %2955 = vmatprep.subr.bf16.mxu0 0
    %2956 = vmatpush2.bf16.msra.mxu0 0
    %2957 = vmatprep.subr.bf16.mxu0 0
    %2958 = vmatpush2.bf16.msra.mxu0 0
    %2959 = vmatprep.mubr.bf16.mxu0 0
    %2960 = vmatmul.mubr.bf16.gmra.mxu0 %v2925
    %v2961 = vpop.f32.mrf.mxu0
    %v2962 = vadd.f32 0.0, %v2961
    %v2963 = vpop.f32.mrf.mxu0
    %v2964 = vpop.f32.mrf.mxu0
    %v2965 = vpop.f32.mrf.mxu0
    %2966 = vdwg.mxu0
    %2967 = vst.msk [vmem:[#allocation2] sm:$0x3] %vm2879, %v2962
    // Predicated region
    $region74: #{text_encoder.1} parent=1 // pred_check
      _
    $region75: #{text_encoder.1} parent=1 // pred_check_branch
      %2969 = sbr.rel (0) target = $region77
    $region76: #{text_encoder.1} parent=1 // pred_region
      %s2971 = ssub.s32 32, 32
      %2972 = vsyncadd [#allocation3], %s2971
      %s2974 = sshll.u32 [#allocation2], 4
      %s2975 = int_to_ptr.vmem [resolvable:$true] %s2974
      %2977 = dma.vmem_to_hbm [thread:$0]  %s2975, 32, %s18, [#allocation3]
    $region77: #{text_encoder.1} parent=1 // pred_fallthru
      _
    // Predicated region
    $region78: #{text_encoder.1} parent=1 // pred_check
      _
    $region79: #{text_encoder.1} parent=1 // pred_check_branch
      %2979 = sbr.rel (0) target = $region81
    $region80: #{text_encoder.1} parent=1 // pred_region
      %2980 = dma.done [#allocation3], 32
    $region81: #{text_encoder.1} parent=1 // pred_fallthru
      _
    %2981 = vsyncpa [#allocation3], 1

</llo_original>
